<compile_context>
chip_gen: v7x
topology: tpu7x:2x2x1
jax: 0.10.0
libtpu: 0.0.40
codegen_flags: <defaults>
</compile_context>

<pallas_src>
import functools

import jax
import jax.numpy as jnp
from jax.experimental import pallas as pl
from jax.experimental.pallas import tpu as pltpu


def _init_pos(scale, groups):
    """DySample._init_pos() flattened to (2*groups*scale^2,) in the torch
    channel order c = d*g*s^2 + rep*s^2 + i*s + j  (d=0 -> x, d=1 -> y)."""
    s = scale
    hv = (jnp.arange(s, dtype=jnp.float32) - (s - 1) / 2.0) / s
    px = jnp.tile(hv.reshape(1, s), (s, 1)).reshape(s * s)   # hv[j] at t = i*s + j
    py = jnp.tile(hv.reshape(s, 1), (1, s)).reshape(s * s)   # hv[i]
    return jnp.concatenate([jnp.tile(px, groups), jnp.tile(py, groups)])


# ------------------------------ fused kernel ------------------------------

def _dysample_kernel(base_ref, src_ref, xf_ref, xg_ref, w_ref, b_ref, ip_ref,
                     ew_ref, eb_ref, out_ref, acc_ref, *, H, W, s):
    s2 = s * s
    r = pl.program_id(2)                     # group (reduction) axis, innermost
    tM = acc_ref.shape[-1]                   # output-pixel tile width (lanes)

    @pl.when(r == 0)
    def _init():
        acc_ref[...] = jnp.zeros_like(acc_ref)

    xf = xf_ref[0]                           # (C, tM)   all channels, this pixel tile
    xg = xg_ref[0]                           # (Cg, M)   this group's channels, all pixels
    w = w_ref[0]                             # (4*s2, C) rows: [offx | offy | scopex | scopey]
    ew = ew_ref[0]                           # (out_ch, Cg) end-conv columns of this group

    # fused offset + scope 1x1 convs for this group, lane-dense: (4*s2, tM)
    lin = jnp.dot(w, xf, preferred_element_type=jnp.float32)
    off = (lin[:2 * s2] + b_ref[0]) * jax.nn.sigmoid(lin[2 * s2:]) * 0.5 + ip_ref[0]

    # reassociated end_conv: pre-contract this group's channels once -> (out_ch, M)
    y = jnp.dot(ew, xg, preferred_element_type=jnp.float32).astype(jnp.bfloat16)

    wb = base_ref[0:1, :]                    # (1, tM) output-pixel column (w)
    hb = base_ref[1:2, :]                    # (1, tM) output-pixel row    (h)
    src_col = src_ref[:, 0:1]                # (M, 1)  source-pixel column
    src_row = src_ref[:, 1:2]                # (M, 1)  source-pixel row

    # Build all s^2 sampling matrices and batch them into one wide bf16 MXU matmul.
    mats = []
    for k in range(s2):                      # static unroll; s2 is small (4 for scale=2)
        # grid_sample(align_corners=False, padding_mode='border') collapses to a
        # sample at (w + offx, h + offy) with coordinates clamped to the image.
        ix = jnp.clip(wb + off[k:k + 1, :], 0.0, float(W - 1))
        iy = jnp.clip(hb + off[s2 + k:s2 + k + 1, :], 0.0, float(H - 1))
        x0 = jnp.floor(ix)
        y0 = jnp.floor(iy)
        fx = ix - x0
        fy = iy - y0
        x0i = x0.astype(jnp.int32)
        y0i = y0.astype(jnp.int32)
        # Separable row/col one-hot selects: corners past the border (x0+1 == W,
        # y0+1 == H) simply never match any source index -> weight 0 (and fx/fy are
        # exactly 0 there), so there is no wrap/aliasing at all.
        wy = jnp.where(src_row == y0i, 1.0 - fy,
                       jnp.where(src_row == y0i + 1, fy, 0.0))          # (M, tM)
        wx = jnp.where(src_col == x0i, 1.0 - fx,
                       jnp.where(src_col == x0i + 1, fx, 0.0))          # (M, tM)
        mats.append((wy * wx).astype(jnp.bfloat16))
    smat = jnp.concatenate(mats, axis=1)                                # (M, s2*tM)

    res = jnp.dot(y, smat, preferred_element_type=jnp.float32)          # (out_ch, s2*tM)
    for k in range(s2):
        acc_ref[k] = acc_ref[k] + res[:, k * tM:(k + 1) * tM]

    @pl.when(r == pl.num_programs(2) - 1)
    def _finalize():
        out_ref[0] = acc_ref[...] + eb_ref[...]


# ------------------------------ wrapper ------------------------------

def dysample_forward(params, x_nchw, *, scale, groups, tile_m=None):
    s, g = scale, groups
    s2 = s * s
    B, C, H, W = x_nchw.shape
    assert C % g == 0 and C > g, "in_channels must be > groups and divisible"
    Cg = C // g
    M = H * W
    out_ch = params["end_b"].shape[0]

    # x stays in its natural NCHW layout, just flattened: (B, C, M), M on lanes.
    x = x_nchw.reshape(B, C, M).astype(jnp.float32)

    # Output-pixel tile on the lane dim (multiple of 128 or full M).
    if tile_m is None:
        if M % 128 == 0:
            tile_m = 128
            for cand in (512, 256):
                # rough bound on the ~5 live f32 (M, tile) temps + bf16 smat (fits
                # v7x's 64 MiB VMEM with headroom).
                if M % cand == 0 and M * cand * (5 * 4 + 2 * s2) <= (40 << 20):
                    tile_m = cand
                    break
        else:
            tile_m = M   # TODO(synk): pad M to a lane multiple for odd spatial sizes
    assert M % tile_m == 0
    Mt = M // tile_m

    # tiny coordinate tables (replace in-kernel O(M^2) iota + integer division)
    hh = jnp.arange(H, dtype=jnp.float32)
    ww = jnp.arange(W, dtype=jnp.float32)
    hgrid, wgrid = jnp.meshgrid(hh, ww, indexing="ij")                   # (H, W)
    base = jnp.stack([wgrid.reshape(M), hgrid.reshape(M)], axis=0)       # (2, M) f32
    m_idx = jnp.arange(M, dtype=jnp.int32)
    src_rc = jnp.stack([m_idx % W, m_idx // W], axis=1)                  # (M, 2) i32

    # Repack 1x1-conv weights group-major; per group the ROWS are
    # [offset_x | offset_y | scope_x | scope_y] (s^2 rows each), columns = C.
    w_off = params["offset_w"][:, :, 0, 0]      # (K, C) torch OIHW 1x1
    w_scope = params["scope_w"][:, :, 0, 0]     # (K, C)
    b_off = params["offset_b"]                  # (K,)
    ip = _init_pos(s, g)                        # (K,)

    def rows(arr_kc, d, r):
        lo = d * g * s2 + r * s2
        return arr_kc[lo:lo + s2]                                        # (s2, C)

    def vec(v, r):
        return jnp.concatenate([v[r * s2: r * s2 + s2],
                                v[g * s2 + r * s2: g * s2 + r * s2 + s2]])

    w_all = jnp.stack([
        jnp.concatenate([rows(w_off, 0, r), rows(w_off, 1, r),
                         rows(w_scope, 0, r), rows(w_scope, 1, r)], axis=0)
        for r in range(g)], axis=0)                                      # (g, 4*s2, C)
    b_grp = jnp.stack([vec(b_off, r) for r in range(g)]).reshape(g, 2 * s2, 1)
    ip_grp = jnp.stack([vec(ip, r) for r in range(g)]).reshape(g, 2 * s2, 1)

    end_w = params["end_w"][:, :, 0, 0]                                  # (out_ch, C)
    ew_grp = jnp.stack([end_w[:, r * Cg:(r + 1) * Cg] for r in range(g)])  # (g,out_ch,Cg)
    eb = params["end_b"].reshape(out_ch, 1)

    # Group channels: alias the SAME x buffer with a (1, Cg, M) BlockSpec when the
    # group width is sublane-aligned; otherwise fall back to a pre-split copy.
    if Cg % 8 == 0:
        xg_arr = x
        xg_spec = pl.BlockSpec((1, Cg, M), lambda b, t, r: (b, r, 0))
    else:
        xg_arr = x.reshape(B, g, Cg, M).reshape(B * g, Cg, M)
        xg_spec = pl.BlockSpec((1, Cg, M), lambda b, t, r, G=g: (b * G + r, 0, 0))

    kern = functools.partial(_dysample_kernel, H=H, W=W, s=s)
    out = pl.pallas_call(
        kern,
        out_shape=jax.ShapeDtypeStruct((B, s2, out_ch, M), jnp.float32),
        grid=(B, Mt, g),
        in_specs=[
            pl.BlockSpec((2, tile_m), lambda b, t, r: (0, t)),           # base (w,h)
            pl.BlockSpec((M, 2), lambda b, t, r: (0, 0)),                # src (col,row)
            pl.BlockSpec((1, C, tile_m), lambda b, t, r: (b, 0, t)),     # x, all channels
            xg_spec,                                                     # x, group channels
            pl.BlockSpec((1, 4 * s2, C), lambda b, t, r: (r, 0, 0)),     # offset+scope w
            pl.BlockSpec((1, 2 * s2, 1), lambda b, t, r: (r, 0, 0)),     # offset bias
            pl.BlockSpec((1, 2 * s2, 1), lambda b, t, r: (r, 0, 0)),     # init_pos
            pl.BlockSpec((1, out_ch, Cg), lambda b, t, r: (r, 0, 0)),    # end_conv w cols
            pl.BlockSpec((out_ch, 1), lambda b, t, r: (0, 0)),           # end_conv bias
        ],
        out_specs=pl.BlockSpec((1, s2, out_ch, tile_m),
                               lambda b, t, r: (b, 0, 0, t)),
        scratch_shapes=[pltpu.VMEM((s2, out_ch, tile_m), jnp.float32)],
        compiler_params=pltpu.CompilerParams(
            dimension_semantics=("parallel", "parallel", "arbitrary"),
            vmem_limit_bytes=48 * 1024 * 1024),
    )(base, src_rc, x, xg_arr, w_all, b_grp, ip_grp, ew_grp, eb)

    # (B, k=i*s+j, out_ch, m=h*W+w) -> NCHW (B, out_ch, s*H, s*W)
    o = out.reshape(B, s, s, out_ch, H, W)
    o = jnp.transpose(o, (0, 3, 4, 1, 5, 2))                             # (B,o,h,i,w,j)
    return o.reshape(B, out_ch, s * H, s * W)


# ------------------------- pure-JAX reference -------------------------

def dysample_reference(x_nchw, params, scale, groups):
    """Direct (XLA) transcription of DySample.forward for validation."""
    s, g = scale, groups
    s2 = s * s
    B, C, H, W = x_nchw.shape
    Cg = C // g
    K = 2 * g * s2

    w_off = params["offset_w"][:, :, 0, 0]
    w_scope = params["scope_w"][:, :, 0, 0]
    off = (jnp.einsum("kc,bchw->bkhw", w_off, x_nchw)
           + params["offset_b"].reshape(1, K, 1, 1))
    scope = jnp.einsum("kc,bchw->bkhw", w_scope, x_nchw)
    off = off * jax.nn.sigmoid(scope) * 0.5 + _init_pos(s, g).reshape(1, K, 1, 1)
    off = off.reshape(B, 2, g, s, s, H, W)

    wgrid = jnp.arange(W, dtype=jnp.float32).reshape(1, 1, 1, 1, 1, W)
    hgrid = jnp.arange(H, dtype=jnp.float32).reshape(1, 1, 1, 1, H, 1)
    ix = jnp.clip(wgrid + off[:, 0], 0.0, W - 1.0)                       # (B,g,s,s,H,W)
    iy = jnp.clip(hgrid + off[:, 1], 0.0, H - 1.0)
    x0 = jnp.floor(ix)
    y0 = jnp.floor(iy)
    fx = ix - x0
    fy = iy - y0
    x0 = x0.astype(jnp.int32)
    y0 = y0.astype(jnp.int32)
    x1 = jnp.minimum(x0 + 1, W - 1)
    y1 = jnp.minimum(y0 + 1, H - 1)

    xg = jnp.transpose(x_nchw.reshape(B, g, Cg, H, W), (0, 1, 3, 4, 2))  # (B,g,H,W,Cg)
    bidx = jnp.arange(B).reshape(B, 1, 1, 1, 1, 1)
    gidx = jnp.arange(g).reshape(1, g, 1, 1, 1, 1)

    def gat(yy, xx):
        return xg[bidx, gidx, yy, xx]                                    # (B,g,s,s,H,W,Cg)

    v = (gat(y0, x0) * ((1 - fy) * (1 - fx))[..., None]
         + gat(y0, x1) * ((1 - fy) * fx)[..., None]
         + gat(y1, x0) * (fy * (1 - fx))[..., None]
         + gat(y1, x1) * (fy * fx)[..., None])                           # (B,g,s,s,H,W,Cg)
    up = jnp.transpose(v, (0, 1, 6, 4, 2, 5, 3)).reshape(B, g * Cg, s * H, s * W)

    ew = params["end_w"][:, :, 0, 0]                                     # (out_ch, C)
    return (jnp.einsum("oc,bchw->bohw", ew, up)
            + params["end_b"].reshape(1, -1, 1, 1))


# ------------------------------ main ------------------------------

if __name__ == "__main__":
    B, C, H, W = 2, 32, 16, 16
    groups, scale, out_ch = 4, 2, 3

    key = jax.random.PRNGKey(0)
    k1, k2, k3, k4, k5, kx = jax.random.split(key, 6)
    K = 2 * groups * scale * scale
    params = {
        "offset_w": 0.1 * jax.random.normal(k1, (K, C, 1, 1), jnp.float32),
        "offset_b": 0.05 * jax.random.normal(k2, (K,), jnp.float32),
        "scope_w": 0.5 * jax.random.normal(k3, (K, C, 1, 1), jnp.float32),
        "end_w": 0.2 * jax.random.normal(k4, (out_ch, C, 1, 1), jnp.float32),
        "end_b": 0.1 * jax.random.normal(k5, (out_ch,), jnp.float32),
    }
    x = jax.random.normal(kx, (B, C, H, W), jnp.float32)

    ref = dysample_reference(x, params, scale, groups)

    # default (auto-chosen) pixel tile
    fwd = jax.jit(functools.partial(dysample_forward, scale=scale, groups=groups))
    out = jax.block_until_ready(fwd(params, x))
    assert out.shape == (B, out_ch, scale * H, scale * W), out.shape
    assert bool(jnp.all(jnp.isfinite(out)))
    err = float(jnp.max(jnp.abs(out - ref)))
    assert err < 5e-2, f"max abs err vs reference (auto tile) = {err}"

    # forced tile_m=128 exercises the multi-tile grid (Mt > 1) path as well
    fwd_t = jax.jit(functools.partial(dysample_forward, scale=scale, groups=groups,
                                      tile_m=128))
    out_t = jax.block_until_ready(fwd_t(params, x))
    err_t = float(jnp.max(jnp.abs(out_t - ref)))
    assert err_t < 5e-2, f"max abs err vs reference (tiled) = {err_t}"

    print("KERNEL_OK")
</pallas_src>

<mosaic_0001>
module attributes {stable_mosaic.version = 11 : i64} {
  func.func @_dysample_kernel(%arg0: i32, %arg1: i32, %arg2: i32, %arg3: memref<2x256xf32, #tpu.memory_space<vmem>>, %arg4: memref<256x2xi32, #tpu.memory_space<vmem>>, %arg5: memref<1x32x256xf32, #tpu.memory_space<vmem>>, %arg6: memref<1x8x256xf32, #tpu.memory_space<vmem>>, %arg7: memref<1x16x32xf32, #tpu.memory_space<vmem>>, %arg8: memref<1x8x1xf32, #tpu.memory_space<vmem>>, %arg9: memref<1x8x1xf32, #tpu.memory_space<vmem>>, %arg10: memref<1x3x8xf32, #tpu.memory_space<vmem>>, %arg11: memref<3x1xf32, #tpu.memory_space<vmem>>, %arg12: memref<1x4x3x256xf32, #tpu.memory_space<vmem>>, %arg13: memref<4x3x256xf32, #tpu.memory_space<vmem>>) attributes {dimension_semantics = [#tpu.dimension_semantics<parallel>, #tpu.dimension_semantics<parallel>, #tpu.dimension_semantics<arbitrary>], iteration_bounds = array<i64: 2, 1, 4>, scalar_prefetch = 0 : i64, scratch_operands = 1 : i64, tpu.core_type = #tpu.core_type<tc>, window_params = [{transform_indices = @transform_0, window_bounds = array<i64: 2, 256>}, {pipeline_mode = #tpu.pipeline_mode<synchronous>, transform_indices = @transform_1, window_bounds = array<i64: 256, 2>}, {transform_indices = @transform_2, window_bounds = array<i64: 1, 32, 256>}, {transform_indices = @transform_3, window_bounds = array<i64: 1, 8, 256>}, {transform_indices = @transform_4, window_bounds = array<i64: 1, 16, 32>}, {transform_indices = @transform_5, window_bounds = array<i64: 1, 8, 1>}, {transform_indices = @transform_6, window_bounds = array<i64: 1, 8, 1>}, {transform_indices = @transform_7, window_bounds = array<i64: 1, 3, 8>}, {pipeline_mode = #tpu.pipeline_mode<synchronous>, transform_indices = @transform_8, window_bounds = array<i64: 3, 1>}, {transform_indices = @transform_9, window_bounds = array<i64: 1, 4, 3, 256>}]} {
    %c0_i32 = arith.constant 0 : i32
    %0 = arith.cmpi eq, %arg2, %c0_i32 : i32
    %1 = arith.extui %0 : i1 to i32
    %c0_i32_0 = arith.constant 0 : i32
    %2 = arith.cmpi ne, %1, %c0_i32_0 : i32
    scf.if %2 {
      %cst_91 = arith.constant 0.000000e+00 : f32
      %285 = vector.broadcast %cst_91 : f32 to vector<4x3x256xf32>
      %c0_92 = arith.constant 0 : index
      %c0_93 = arith.constant 0 : index
      %c0_94 = arith.constant 0 : index
      %286 = vector.load %arg13[%c0_92, %c0_93, %c0_94] : memref<4x3x256xf32, #tpu.memory_space<vmem>>, vector<4x3x256xf32>
      tpu.vector_store %arg13[%c0_92, %c0_93, %c0_94], %285 {strides = array<i32>} : memref<4x3x256xf32, #tpu.memory_space<vmem>>, vector<4x3x256xf32>,
    } else {
    }
    %c0 = arith.constant 0 : index
    %c0_1 = arith.constant 0 : index
    %c0_2 = arith.constant 0 : index
    %3 = vector.load %arg5[%c0, %c0_1, %c0_2] : memref<1x32x256xf32, #tpu.memory_space<vmem>>, vector<1x32x256xf32>
    %4 = vector.shape_cast %3 : vector<1x32x256xf32> to vector<32x256xf32>
    %c0_3 = arith.constant 0 : index
    %c0_4 = arith.constant 0 : index
    %c0_5 = arith.constant 0 : index
    %5 = vector.load %arg6[%c0_3, %c0_4, %c0_5] : memref<1x8x256xf32, #tpu.memory_space<vmem>>, vector<1x8x256xf32>
    %6 = vector.shape_cast %5 : vector<1x8x256xf32> to vector<8x256xf32>
    %c0_6 = arith.constant 0 : index
    %c0_7 = arith.constant 0 : index
    %c0_8 = arith.constant 0 : index
    %7 = vector.load %arg7[%c0_6, %c0_7, %c0_8] : memref<1x16x32xf32, #tpu.memory_space<vmem>>, vector<1x16x32xf32>
    %8 = vector.shape_cast %7 : vector<1x16x32xf32> to vector<16x32xf32>
    %c0_9 = arith.constant 0 : index
    %c0_10 = arith.constant 0 : index
    %c0_11 = arith.constant 0 : index
    %9 = vector.load %arg10[%c0_9, %c0_10, %c0_11] : memref<1x3x8xf32, #tpu.memory_space<vmem>>, vector<1x3x8xf32>
    %10 = vector.shape_cast %9 : vector<1x3x8xf32> to vector<3x8xf32>
    %cst = arith.constant dense<0.000000e+00> : vector<16x256xf32>
    %11 = tpu.matmul %8, %4, %cst {dimension_numbers = #tpu.dot_dimension_numbers<[1], [0], [0], [1], [0, 0, 1, 1], [], []>} : vector<16x32xf32>, vector<32x256xf32>, vector<16x256xf32> -> vector<16x256xf32>
    %12 = vector.extract_strided_slice %11 {offsets = [0, 0], sizes = [8, 256], strides = [1, 1]} : vector<16x256xf32> to vector<8x256xf32>
    %c0_12 = arith.constant 0 : index
    %c0_13 = arith.constant 0 : index
    %c0_14 = arith.constant 0 : index
    %13 = vector.load %arg8[%c0_12, %c0_13, %c0_14] : memref<1x8x1xf32, #tpu.memory_space<vmem>>, vector<1x8x1xf32>
    %14 = vector.shape_cast %13 : vector<1x8x1xf32> to vector<8x1xf32>
    %15 = vector.broadcast %14 : vector<8x1xf32> to vector<8x256xf32>
    %16 = arith.addf %12, %15 : vector<8x256xf32>
    %17 = vector.extract_strided_slice %11 {offsets = [8, 0], sizes = [8, 256], strides = [1, 1]} : vector<16x256xf32> to vector<8x256xf32>
    %18 = arith.negf %17 : vector<8x256xf32>
    %19 = math.exp %18 : vector<8x256xf32>
    %cst_15 = arith.constant 1.000000e+00 : f32
    %20 = vector.broadcast %cst_15 : f32 to vector<8x256xf32>
    %21 = arith.addf %20, %19 : vector<8x256xf32>
    %22 = arith.divf %20, %21 : vector<8x256xf32>
    %23 = arith.mulf %16, %22 : vector<8x256xf32>
    %cst_16 = arith.constant 5.000000e-01 : f32
    %24 = vector.broadcast %cst_16 : f32 to vector<8x256xf32>
    %25 = arith.mulf %23, %24 : vector<8x256xf32>
    %c0_17 = arith.constant 0 : index
    %c0_18 = arith.constant 0 : index
    %c0_19 = arith.constant 0 : index
    %26 = vector.load %arg9[%c0_17, %c0_18, %c0_19] : memref<1x8x1xf32, #tpu.memory_space<vmem>>, vector<1x8x1xf32>
    %27 = vector.shape_cast %26 : vector<1x8x1xf32> to vector<8x1xf32>
    %28 = vector.broadcast %27 : vector<8x1xf32> to vector<8x256xf32>
    %29 = arith.addf %25, %28 : vector<8x256xf32>
    %cst_20 = arith.constant dense<0.000000e+00> : vector<3x256xf32>
    %30 = tpu.matmul %10, %6, %cst_20 {dimension_numbers = #tpu.dot_dimension_numbers<[1], [0], [0], [1], [0, 0, 1, 1], [], []>} : vector<3x8xf32>, vector<8x256xf32>, vector<3x256xf32> -> vector<3x256xf32>
    %31 = arith.truncf %30 : vector<3x256xf32> to vector<3x256xbf16>
    %c0_21 = arith.constant 0 : index
    %c0_22 = arith.constant 0 : index
    %32 = vector.load %arg3[%c0_21, %c0_22] : memref<2x256xf32, #tpu.memory_space<vmem>>, vector<1x256xf32>
    %c1 = arith.constant 1 : index
    %c0_23 = arith.constant 0 : index
    %33 = vector.load %arg3[%c1, %c0_23] : memref<2x256xf32, #tpu.memory_space<vmem>>, vector<1x256xf32>
    %c0_24 = arith.constant 0 : index
    %c0_25 = arith.constant 0 : index
    %34 = vector.load %arg4[%c0_24, %c0_25] : memref<256x2xi32, #tpu.memory_space<vmem>>, vector<256x1xi32>
    %c0_26 = arith.constant 0 : index
    %c1_27 = arith.constant 1 : index
    %35 = vector.load %arg4[%c0_26, %c1_27] : memref<256x2xi32, #tpu.memory_space<vmem>>, vector<256x1xi32>
    %36 = vector.extract_strided_slice %29 {offsets = [0, 0], sizes = [1, 256], strides = [1, 1]} : vector<8x256xf32> to vector<1x256xf32>
    %37 = arith.addf %32, %36 : vector<1x256xf32>
    %cst_28 = arith.constant 0.000000e+00 : f32
    %cst_29 = arith.constant 1.500000e+01 : f32
    %38 = vector.broadcast %cst_28 : f32 to vector<1x256xf32>
    %39 = arith.maximumf %38, %37 : vector<1x256xf32>
    %40 = vector.broadcast %cst_29 : f32 to vector<1x256xf32>
    %41 = arith.minimumf %40, %39 : vector<1x256xf32>
    %42 = vector.extract_strided_slice %29 {offsets = [4, 0], sizes = [1, 256], strides = [1, 1]} : vector<8x256xf32> to vector<1x256xf32>
    %43 = arith.addf %33, %42 : vector<1x256xf32>
    %cst_30 = arith.constant 0.000000e+00 : f32
    %cst_31 = arith.constant 1.500000e+01 : f32
    %44 = vector.broadcast %cst_30 : f32 to vector<1x256xf32>
    %45 = arith.maximumf %44, %43 : vector<1x256xf32>
    %46 = vector.broadcast %cst_31 : f32 to vector<1x256xf32>
    %47 = arith.minimumf %46, %45 : vector<1x256xf32>
    %48 = math.floor %41 : vector<1x256xf32>
    %49 = math.floor %47 : vector<1x256xf32>
    %50 = arith.subf %41, %48 : vector<1x256xf32>
    %51 = arith.subf %47, %49 : vector<1x256xf32>
    %52 = arith.fptosi %48 : vector<1x256xf32> to vector<1x256xi32>
    %53 = arith.fptosi %49 : vector<1x256xf32> to vector<1x256xi32>
    %54 = vector.broadcast %35 : vector<256x1xi32> to vector<256x256xi32>
    %55 = vector.broadcast %53 : vector<1x256xi32> to vector<256x256xi32>
    %56 = arith.cmpi eq, %54, %55 : vector<256x256xi32>
    %cst_32 = arith.constant 1.000000e+00 : f32
    %57 = vector.broadcast %cst_32 : f32 to vector<1x256xf32>
    %58 = arith.subf %57, %51 : vector<1x256xf32>
    %c1_i32 = arith.constant 1 : i32
    %59 = vector.broadcast %c1_i32 : i32 to vector<1x256xi32>
    %60 = arith.addi %53, %59 : vector<1x256xi32>
    %61 = vector.broadcast %35 : vector<256x1xi32> to vector<256x256xi32>
    %62 = vector.broadcast %60 : vector<1x256xi32> to vector<256x256xi32>
    %63 = arith.cmpi eq, %61, %62 : vector<256x256xi32>
    %cst_33 = arith.constant 0.000000e+00 : f32
    %64 = vector.shape_cast %51 : vector<1x256xf32> to vector<1x256xf32>
    %65 = vector.broadcast %64 : vector<1x256xf32> to vector<256x256xf32>
    %66 = vector.broadcast %cst_33 : f32 to vector<256x256xf32>
    %67 = arith.select %63, %65, %66 : vector<256x256xi1>, vector<256x256xf32>
    %68 = vector.shape_cast %58 : vector<1x256xf32> to vector<1x256xf32>
    %69 = vector.broadcast %68 : vector<1x256xf32> to vector<256x256xf32>
    %70 = arith.select %56, %69, %67 : vector<256x256xi1>, vector<256x256xf32>
    %71 = vector.broadcast %34 : vector<256x1xi32> to vector<256x256xi32>
    %72 = vector.broadcast %52 : vector<1x256xi32> to vector<256x256xi32>
    %73 = arith.cmpi eq, %71, %72 : vector<256x256xi32>
    %cst_34 = arith.constant 1.000000e+00 : f32
    %74 = vector.broadcast %cst_34 : f32 to vector<1x256xf32>
    %75 = arith.subf %74, %50 : vector<1x256xf32>
    %c1_i32_35 = arith.constant 1 : i32
    %76 = vector.broadcast %c1_i32_35 : i32 to vector<1x256xi32>
    %77 = arith.addi %52, %76 : vector<1x256xi32>
    %78 = vector.broadcast %34 : vector<256x1xi32> to vector<256x256xi32>
    %79 = vector.broadcast %77 : vector<1x256xi32> to vector<256x256xi32>
    %80 = arith.cmpi eq, %78, %79 : vector<256x256xi32>
    %cst_36 = arith.constant 0.000000e+00 : f32
    %81 = vector.shape_cast %50 : vector<1x256xf32> to vector<1x256xf32>
    %82 = vector.broadcast %81 : vector<1x256xf32> to vector<256x256xf32>
    %83 = vector.broadcast %cst_36 : f32 to vector<256x256xf32>
    %84 = arith.select %80, %82, %83 : vector<256x256xi1>, vector<256x256xf32>
    %85 = vector.shape_cast %75 : vector<1x256xf32> to vector<1x256xf32>
    %86 = vector.broadcast %85 : vector<1x256xf32> to vector<256x256xf32>
    %87 = arith.select %73, %86, %84 : vector<256x256xi1>, vector<256x256xf32>
    %88 = arith.mulf %70, %87 : vector<256x256xf32>
    %89 = arith.truncf %88 : vector<256x256xf32> to vector<256x256xbf16>
    %90 = vector.extract_strided_slice %29 {offsets = [1, 0], sizes = [1, 256], strides = [1, 1]} : vector<8x256xf32> to vector<1x256xf32>
    %91 = arith.addf %32, %90 : vector<1x256xf32>
    %cst_37 = arith.constant 0.000000e+00 : f32
    %cst_38 = arith.constant 1.500000e+01 : f32
    %92 = vector.broadcast %cst_37 : f32 to vector<1x256xf32>
    %93 = arith.maximumf %92, %91 : vector<1x256xf32>
    %94 = vector.broadcast %cst_38 : f32 to vector<1x256xf32>
    %95 = arith.minimumf %94, %93 : vector<1x256xf32>
    %96 = vector.extract_strided_slice %29 {offsets = [5, 0], sizes = [1, 256], strides = [1, 1]} : vector<8x256xf32> to vector<1x256xf32>
    %97 = arith.addf %33, %96 : vector<1x256xf32>
    %cst_39 = arith.constant 0.000000e+00 : f32
    %cst_40 = arith.constant 1.500000e+01 : f32
    %98 = vector.broadcast %cst_39 : f32 to vector<1x256xf32>
    %99 = arith.maximumf %98, %97 : vector<1x256xf32>
    %100 = vector.broadcast %cst_40 : f32 to vector<1x256xf32>
    %101 = arith.minimumf %100, %99 : vector<1x256xf32>
    %102 = math.floor %95 : vector<1x256xf32>
    %103 = math.floor %101 : vector<1x256xf32>
    %104 = arith.subf %95, %102 : vector<1x256xf32>
    %105 = arith.subf %101, %103 : vector<1x256xf32>
    %106 = arith.fptosi %102 : vector<1x256xf32> to vector<1x256xi32>
    %107 = arith.fptosi %103 : vector<1x256xf32> to vector<1x256xi32>
    %108 = vector.broadcast %35 : vector<256x1xi32> to vector<256x256xi32>
    %109 = vector.broadcast %107 : vector<1x256xi32> to vector<256x256xi32>
    %110 = arith.cmpi eq, %108, %109 : vector<256x256xi32>
    %cst_41 = arith.constant 1.000000e+00 : f32
    %111 = vector.broadcast %cst_41 : f32 to vector<1x256xf32>
    %112 = arith.subf %111, %105 : vector<1x256xf32>
    %c1_i32_42 = arith.constant 1 : i32
    %113 = vector.broadcast %c1_i32_42 : i32 to vector<1x256xi32>
    %114 = arith.addi %107, %113 : vector<1x256xi32>
    %115 = vector.broadcast %35 : vector<256x1xi32> to vector<256x256xi32>
    %116 = vector.broadcast %114 : vector<1x256xi32> to vector<256x256xi32>
    %117 = arith.cmpi eq, %115, %116 : vector<256x256xi32>
    %cst_43 = arith.constant 0.000000e+00 : f32
    %118 = vector.shape_cast %105 : vector<1x256xf32> to vector<1x256xf32>
    %119 = vector.broadcast %118 : vector<1x256xf32> to vector<256x256xf32>
    %120 = vector.broadcast %cst_43 : f32 to vector<256x256xf32>
    %121 = arith.select %117, %119, %120 : vector<256x256xi1>, vector<256x256xf32>
    %122 = vector.shape_cast %112 : vector<1x256xf32> to vector<1x256xf32>
    %123 = vector.broadcast %122 : vector<1x256xf32> to vector<256x256xf32>
    %124 = arith.select %110, %123, %121 : vector<256x256xi1>, vector<256x256xf32>
    %125 = vector.broadcast %34 : vector<256x1xi32> to vector<256x256xi32>
    %126 = vector.broadcast %106 : vector<1x256xi32> to vector<256x256xi32>
    %127 = arith.cmpi eq, %125, %126 : vector<256x256xi32>
    %cst_44 = arith.constant 1.000000e+00 : f32
    %128 = vector.broadcast %cst_44 : f32 to vector<1x256xf32>
    %129 = arith.subf %128, %104 : vector<1x256xf32>
    %c1_i32_45 = arith.constant 1 : i32
    %130 = vector.broadcast %c1_i32_45 : i32 to vector<1x256xi32>
    %131 = arith.addi %106, %130 : vector<1x256xi32>
    %132 = vector.broadcast %34 : vector<256x1xi32> to vector<256x256xi32>
    %133 = vector.broadcast %131 : vector<1x256xi32> to vector<256x256xi32>
    %134 = arith.cmpi eq, %132, %133 : vector<256x256xi32>
    %cst_46 = arith.constant 0.000000e+00 : f32
    %135 = vector.shape_cast %104 : vector<1x256xf32> to vector<1x256xf32>
    %136 = vector.broadcast %135 : vector<1x256xf32> to vector<256x256xf32>
    %137 = vector.broadcast %cst_46 : f32 to vector<256x256xf32>
    %138 = arith.select %134, %136, %137 : vector<256x256xi1>, vector<256x256xf32>
    %139 = vector.shape_cast %129 : vector<1x256xf32> to vector<1x256xf32>
    %140 = vector.broadcast %139 : vector<1x256xf32> to vector<256x256xf32>
    %141 = arith.select %127, %140, %138 : vector<256x256xi1>, vector<256x256xf32>
    %142 = arith.mulf %124, %141 : vector<256x256xf32>
    %143 = arith.truncf %142 : vector<256x256xf32> to vector<256x256xbf16>
    %144 = vector.extract_strided_slice %29 {offsets = [2, 0], sizes = [1, 256], strides = [1, 1]} : vector<8x256xf32> to vector<1x256xf32>
    %145 = arith.addf %32, %144 : vector<1x256xf32>
    %cst_47 = arith.constant 0.000000e+00 : f32
    %cst_48 = arith.constant 1.500000e+01 : f32
    %146 = vector.broadcast %cst_47 : f32 to vector<1x256xf32>
    %147 = arith.maximumf %146, %145 : vector<1x256xf32>
    %148 = vector.broadcast %cst_48 : f32 to vector<1x256xf32>
    %149 = arith.minimumf %148, %147 : vector<1x256xf32>
    %150 = vector.extract_strided_slice %29 {offsets = [6, 0], sizes = [1, 256], strides = [1, 1]} : vector<8x256xf32> to vector<1x256xf32>
    %151 = arith.addf %33, %150 : vector<1x256xf32>
    %cst_49 = arith.constant 0.000000e+00 : f32
    %cst_50 = arith.constant 1.500000e+01 : f32
    %152 = vector.broadcast %cst_49 : f32 to vector<1x256xf32>
    %153 = arith.maximumf %152, %151 : vector<1x256xf32>
    %154 = vector.broadcast %cst_50 : f32 to vector<1x256xf32>
    %155 = arith.minimumf %154, %153 : vector<1x256xf32>
    %156 = math.floor %149 : vector<1x256xf32>
    %157 = math.floor %155 : vector<1x256xf32>
    %158 = arith.subf %149, %156 : vector<1x256xf32>
    %159 = arith.subf %155, %157 : vector<1x256xf32>
    %160 = arith.fptosi %156 : vector<1x256xf32> to vector<1x256xi32>
    %161 = arith.fptosi %157 : vector<1x256xf32> to vector<1x256xi32>
    %162 = vector.broadcast %35 : vector<256x1xi32> to vector<256x256xi32>
    %163 = vector.broadcast %161 : vector<1x256xi32> to vector<256x256xi32>
    %164 = arith.cmpi eq, %162, %163 : vector<256x256xi32>
    %cst_51 = arith.constant 1.000000e+00 : f32
    %165 = vector.broadcast %cst_51 : f32 to vector<1x256xf32>
    %166 = arith.subf %165, %159 : vector<1x256xf32>
    %c1_i32_52 = arith.constant 1 : i32
    %167 = vector.broadcast %c1_i32_52 : i32 to vector<1x256xi32>
    %168 = arith.addi %161, %167 : vector<1x256xi32>
    %169 = vector.broadcast %35 : vector<256x1xi32> to vector<256x256xi32>
    %170 = vector.broadcast %168 : vector<1x256xi32> to vector<256x256xi32>
    %171 = arith.cmpi eq, %169, %170 : vector<256x256xi32>
    %cst_53 = arith.constant 0.000000e+00 : f32
    %172 = vector.shape_cast %159 : vector<1x256xf32> to vector<1x256xf32>
    %173 = vector.broadcast %172 : vector<1x256xf32> to vector<256x256xf32>
    %174 = vector.broadcast %cst_53 : f32 to vector<256x256xf32>
    %175 = arith.select %171, %173, %174 : vector<256x256xi1>, vector<256x256xf32>
    %176 = vector.shape_cast %166 : vector<1x256xf32> to vector<1x256xf32>
    %177 = vector.broadcast %176 : vector<1x256xf32> to vector<256x256xf32>
    %178 = arith.select %164, %177, %175 : vector<256x256xi1>, vector<256x256xf32>
    %179 = vector.broadcast %34 : vector<256x1xi32> to vector<256x256xi32>
    %180 = vector.broadcast %160 : vector<1x256xi32> to vector<256x256xi32>
    %181 = arith.cmpi eq, %179, %180 : vector<256x256xi32>
    %cst_54 = arith.constant 1.000000e+00 : f32
    %182 = vector.broadcast %cst_54 : f32 to vector<1x256xf32>
    %183 = arith.subf %182, %158 : vector<1x256xf32>
    %c1_i32_55 = arith.constant 1 : i32
    %184 = vector.broadcast %c1_i32_55 : i32 to vector<1x256xi32>
    %185 = arith.addi %160, %184 : vector<1x256xi32>
    %186 = vector.broadcast %34 : vector<256x1xi32> to vector<256x256xi32>
    %187 = vector.broadcast %185 : vector<1x256xi32> to vector<256x256xi32>
    %188 = arith.cmpi eq, %186, %187 : vector<256x256xi32>
    %cst_56 = arith.constant 0.000000e+00 : f32
    %189 = vector.shape_cast %158 : vector<1x256xf32> to vector<1x256xf32>
    %190 = vector.broadcast %189 : vector<1x256xf32> to vector<256x256xf32>
    %191 = vector.broadcast %cst_56 : f32 to vector<256x256xf32>
    %192 = arith.select %188, %190, %191 : vector<256x256xi1>, vector<256x256xf32>
    %193 = vector.shape_cast %183 : vector<1x256xf32> to vector<1x256xf32>
    %194 = vector.broadcast %193 : vector<1x256xf32> to vector<256x256xf32>
    %195 = arith.select %181, %194, %192 : vector<256x256xi1>, vector<256x256xf32>
    %196 = arith.mulf %178, %195 : vector<256x256xf32>
    %197 = arith.truncf %196 : vector<256x256xf32> to vector<256x256xbf16>
    %198 = vector.extract_strided_slice %29 {offsets = [3, 0], sizes = [1, 256], strides = [1, 1]} : vector<8x256xf32> to vector<1x256xf32>
    %199 = arith.addf %32, %198 : vector<1x256xf32>
    %cst_57 = arith.constant 0.000000e+00 : f32
    %cst_58 = arith.constant 1.500000e+01 : f32
    %200 = vector.broadcast %cst_57 : f32 to vector<1x256xf32>
    %201 = arith.maximumf %200, %199 : vector<1x256xf32>
    %202 = vector.broadcast %cst_58 : f32 to vector<1x256xf32>
    %203 = arith.minimumf %202, %201 : vector<1x256xf32>
    %204 = vector.extract_strided_slice %29 {offsets = [7, 0], sizes = [1, 256], strides = [1, 1]} : vector<8x256xf32> to vector<1x256xf32>
    %205 = arith.addf %33, %204 : vector<1x256xf32>
    %cst_59 = arith.constant 0.000000e+00 : f32
    %cst_60 = arith.constant 1.500000e+01 : f32
    %206 = vector.broadcast %cst_59 : f32 to vector<1x256xf32>
    %207 = arith.maximumf %206, %205 : vector<1x256xf32>
    %208 = vector.broadcast %cst_60 : f32 to vector<1x256xf32>
    %209 = arith.minimumf %208, %207 : vector<1x256xf32>
    %210 = math.floor %203 : vector<1x256xf32>
    %211 = math.floor %209 : vector<1x256xf32>
    %212 = arith.subf %203, %210 : vector<1x256xf32>
    %213 = arith.subf %209, %211 : vector<1x256xf32>
    %214 = arith.fptosi %210 : vector<1x256xf32> to vector<1x256xi32>
    %215 = arith.fptosi %211 : vector<1x256xf32> to vector<1x256xi32>
    %216 = vector.broadcast %35 : vector<256x1xi32> to vector<256x256xi32>
    %217 = vector.broadcast %215 : vector<1x256xi32> to vector<256x256xi32>
    %218 = arith.cmpi eq, %216, %217 : vector<256x256xi32>
    %cst_61 = arith.constant 1.000000e+00 : f32
    %219 = vector.broadcast %cst_61 : f32 to vector<1x256xf32>
    %220 = arith.subf %219, %213 : vector<1x256xf32>
    %c1_i32_62 = arith.constant 1 : i32
    %221 = vector.broadcast %c1_i32_62 : i32 to vector<1x256xi32>
    %222 = arith.addi %215, %221 : vector<1x256xi32>
    %223 = vector.broadcast %35 : vector<256x1xi32> to vector<256x256xi32>
    %224 = vector.broadcast %222 : vector<1x256xi32> to vector<256x256xi32>
    %225 = arith.cmpi eq, %223, %224 : vector<256x256xi32>
    %cst_63 = arith.constant 0.000000e+00 : f32
    %226 = vector.shape_cast %213 : vector<1x256xf32> to vector<1x256xf32>
    %227 = vector.broadcast %226 : vector<1x256xf32> to vector<256x256xf32>
    %228 = vector.broadcast %cst_63 : f32 to vector<256x256xf32>
    %229 = arith.select %225, %227, %228 : vector<256x256xi1>, vector<256x256xf32>
    %230 = vector.shape_cast %220 : vector<1x256xf32> to vector<1x256xf32>
    %231 = vector.broadcast %230 : vector<1x256xf32> to vector<256x256xf32>
    %232 = arith.select %218, %231, %229 : vector<256x256xi1>, vector<256x256xf32>
    %233 = vector.broadcast %34 : vector<256x1xi32> to vector<256x256xi32>
    %234 = vector.broadcast %214 : vector<1x256xi32> to vector<256x256xi32>
    %235 = arith.cmpi eq, %233, %234 : vector<256x256xi32>
    %cst_64 = arith.constant 1.000000e+00 : f32
    %236 = vector.broadcast %cst_64 : f32 to vector<1x256xf32>
    %237 = arith.subf %236, %212 : vector<1x256xf32>
    %c1_i32_65 = arith.constant 1 : i32
    %238 = vector.broadcast %c1_i32_65 : i32 to vector<1x256xi32>
    %239 = arith.addi %214, %238 : vector<1x256xi32>
    %240 = vector.broadcast %34 : vector<256x1xi32> to vector<256x256xi32>
    %241 = vector.broadcast %239 : vector<1x256xi32> to vector<256x256xi32>
    %242 = arith.cmpi eq, %240, %241 : vector<256x256xi32>
    %cst_66 = arith.constant 0.000000e+00 : f32
    %243 = vector.shape_cast %212 : vector<1x256xf32> to vector<1x256xf32>
    %244 = vector.broadcast %243 : vector<1x256xf32> to vector<256x256xf32>
    %245 = vector.broadcast %cst_66 : f32 to vector<256x256xf32>
    %246 = arith.select %242, %244, %245 : vector<256x256xi1>, vector<256x256xf32>
    %247 = vector.shape_cast %237 : vector<1x256xf32> to vector<1x256xf32>
    %248 = vector.broadcast %247 : vector<1x256xf32> to vector<256x256xf32>
    %249 = arith.select %235, %248, %246 : vector<256x256xi1>, vector<256x256xf32>
    %250 = arith.mulf %232, %249 : vector<256x256xf32>
    %251 = arith.truncf %250 : vector<256x256xf32> to vector<256x256xbf16>
    %252 = tpu.concatenate %89, %143, %197, %251 in 1 : vector<256x256xbf16>, vector<256x256xbf16>, vector<256x256xbf16>, vector<256x256xbf16> -> vector<256x1024xbf16>
    %cst_67 = arith.constant dense<0.000000e+00> : vector<3x1024xf32>
    %253 = tpu.matmul %31, %252, %cst_67 {dimension_numbers = #tpu.dot_dimension_numbers<[1], [0], [0], [1], [0, 0, 1, 1], [], []>} : vector<3x256xbf16>, vector<256x1024xbf16>, vector<3x1024xf32> -> vector<3x1024xf32>
    %c0_68 = arith.constant 0 : index
    %c0_69 = arith.constant 0 : index
    %c0_70 = arith.constant 0 : index
    %254 = vector.load %arg13[%c0_68, %c0_69, %c0_70] : memref<4x3x256xf32, #tpu.memory_space<vmem>>, vector<1x3x256xf32>
    %255 = vector.shape_cast %254 : vector<1x3x256xf32> to vector<3x256xf32>
    %256 = vector.extract_strided_slice %253 {offsets = [0, 0], sizes = [3, 256], strides = [1, 1]} : vector<3x1024xf32> to vector<3x256xf32>
    %257 = arith.addf %255, %256 : vector<3x256xf32>
    %c0_71 = arith.constant 0 : index
    %c0_72 = arith.constant 0 : index
    %c0_73 = arith.constant 0 : index
    %258 = vector.load %arg13[%c0_71, %c0_72, %c0_73] : memref<4x3x256xf32, #tpu.memory_space<vmem>>, vector<1x3x256xf32>
    %259 = vector.shape_cast %258 : vector<1x3x256xf32> to vector<3x256xf32>
    %260 = vector.shape_cast %257 : vector<3x256xf32> to vector<1x3x256xf32>
    tpu.vector_store %arg13[%c0_71, %c0_72, %c0_73], %260 {strides = array<i32>} : memref<4x3x256xf32, #tpu.memory_space<vmem>>, vector<1x3x256xf32>,
    %c1_74 = arith.constant 1 : index
    %c0_75 = arith.constant 0 : index
    %c0_76 = arith.constant 0 : index
    %261 = vector.load %arg13[%c1_74, %c0_75, %c0_76] : memref<4x3x256xf32, #tpu.memory_space<vmem>>, vector<1x3x256xf32>
    %262 = vector.shape_cast %261 : vector<1x3x256xf32> to vector<3x256xf32>
    %263 = vector.extract_strided_slice %253 {offsets = [0, 256], sizes = [3, 256], strides = [1, 1]} : vector<3x1024xf32> to vector<3x256xf32>
    %264 = arith.addf %262, %263 : vector<3x256xf32>
    %c1_77 = arith.constant 1 : index
    %c0_78 = arith.constant 0 : index
    %c0_79 = arith.constant 0 : index
    %265 = vector.load %arg13[%c1_77, %c0_78, %c0_79] : memref<4x3x256xf32, #tpu.memory_space<vmem>>, vector<1x3x256xf32>
    %266 = vector.shape_cast %265 : vector<1x3x256xf32> to vector<3x256xf32>
    %267 = vector.shape_cast %264 : vector<3x256xf32> to vector<1x3x256xf32>
    tpu.vector_store %arg13[%c1_77, %c0_78, %c0_79], %267 {strides = array<i32>} : memref<4x3x256xf32, #tpu.memory_space<vmem>>, vector<1x3x256xf32>,
    %c2 = arith.constant 2 : index
    %c0_80 = arith.constant 0 : index
    %c0_81 = arith.constant 0 : index
    %268 = vector.load %arg13[%c2, %c0_80, %c0_81] : memref<4x3x256xf32, #tpu.memory_space<vmem>>, vector<1x3x256xf32>
    %269 = vector.shape_cast %268 : vector<1x3x256xf32> to vector<3x256xf32>
    %270 = vector.extract_strided_slice %253 {offsets = [0, 512], sizes = [3, 256], strides = [1, 1]} : vector<3x1024xf32> to vector<3x256xf32>
    %271 = arith.addf %269, %270 : vector<3x256xf32>
    %c2_82 = arith.constant 2 : index
    %c0_83 = arith.constant 0 : index
    %c0_84 = arith.constant 0 : index
    %272 = vector.load %arg13[%c2_82, %c0_83, %c0_84] : memref<4x3x256xf32, #tpu.memory_space<vmem>>, vector<1x3x256xf32>
    %273 = vector.shape_cast %272 : vector<1x3x256xf32> to vector<3x256xf32>
    %274 = vector.shape_cast %271 : vector<3x256xf32> to vector<1x3x256xf32>
    tpu.vector_store %arg13[%c2_82, %c0_83, %c0_84], %274 {strides = array<i32>} : memref<4x3x256xf32, #tpu.memory_space<vmem>>, vector<1x3x256xf32>,
    %c3 = arith.constant 3 : index
    %c0_85 = arith.constant 0 : index
    %c0_86 = arith.constant 0 : index
    %275 = vector.load %arg13[%c3, %c0_85, %c0_86] : memref<4x3x256xf32, #tpu.memory_space<vmem>>, vector<1x3x256xf32>
    %276 = vector.shape_cast %275 : vector<1x3x256xf32> to vector<3x256xf32>
    %277 = vector.extract_strided_slice %253 {offsets = [0, 768], sizes = [3, 256], strides = [1, 1]} : vector<3x1024xf32> to vector<3x256xf32>
    %278 = arith.addf %276, %277 : vector<3x256xf32>
    %c3_87 = arith.constant 3 : index
    %c0_88 = arith.constant 0 : index
    %c0_89 = arith.constant 0 : index
    %279 = vector.load %arg13[%c3_87, %c0_88, %c0_89] : memref<4x3x256xf32, #tpu.memory_space<vmem>>, vector<1x3x256xf32>
    %280 = vector.shape_cast %279 : vector<1x3x256xf32> to vector<3x256xf32>
    %281 = vector.shape_cast %278 : vector<3x256xf32> to vector<1x3x256xf32>
    tpu.vector_store %arg13[%c3_87, %c0_88, %c0_89], %281 {strides = array<i32>} : memref<4x3x256xf32, #tpu.memory_space<vmem>>, vector<1x3x256xf32>,
    %c3_i32 = arith.constant 3 : i32
    %282 = arith.cmpi eq, %arg2, %c3_i32 : i32
    %283 = arith.extui %282 : i1 to i32
    %c0_i32_90 = arith.constant 0 : i32
    %284 = arith.cmpi ne, %283, %c0_i32_90 : i32
    scf.if %284 {
      %c0_91 = arith.constant 0 : index
      %c0_92 = arith.constant 0 : index
      %c0_93 = arith.constant 0 : index
      %285 = vector.load %arg13[%c0_91, %c0_92, %c0_93] : memref<4x3x256xf32, #tpu.memory_space<vmem>>, vector<4x3x256xf32>
      %c0_94 = arith.constant 0 : index
      %c0_95 = arith.constant 0 : index
      %286 = vector.load %arg11[%c0_94, %c0_95] : memref<3x1xf32, #tpu.memory_space<vmem>>, vector<3x1xf32>
      %287 = vector.shape_cast %286 : vector<3x1xf32> to vector<1x3x1xf32>
      %288 = vector.broadcast %287 : vector<1x3x1xf32> to vector<4x3x256xf32>
      %289 = arith.addf %285, %288 : vector<4x3x256xf32>
      %c0_96 = arith.constant 0 : index
      %c0_97 = arith.constant 0 : index
      %c0_98 = arith.constant 0 : index
      %c0_99 = arith.constant 0 : index
      %290 = vector.load %arg12[%c0_96, %c0_97, %c0_98, %c0_99] : memref<1x4x3x256xf32, #tpu.memory_space<vmem>>, vector<1x4x3x256xf32>
      %291 = vector.shape_cast %290 : vector<1x4x3x256xf32> to vector<4x3x256xf32>
      %292 = vector.shape_cast %289 : vector<4x3x256xf32> to vector<1x4x3x256xf32>
      tpu.vector_store %arg12[%c0_96, %c0_97, %c0_98, %c0_99], %292 {strides = array<i32>} : memref<1x4x3x256xf32, #tpu.memory_space<vmem>>, vector<1x4x3x256xf32>,
    } else {
    }
    return
  }
  func.func @transform_0(%arg0: i32, %arg1: i32, %arg2: i32) -> (i32, i32) {
    %c0_i32 = arith.constant 0 : i32
    %c0_i32_0 = arith.constant 0 : i32
    return %c0_i32, %arg1 : i32, i32
  }
  func.func @transform_1(%arg0: i32, %arg1: i32, %arg2: i32) -> (i32, i32) {
    %c0_i32 = arith.constant 0 : i32
    %c0_i32_0 = arith.constant 0 : i32
    %c0_i32_1 = arith.constant 0 : i32
    return %c0_i32, %c0_i32_0 : i32, i32
  }
  func.func @transform_2(%arg0: i32, %arg1: i32, %arg2: i32) -> (i32, i32, i32) {
    %c0_i32 = arith.constant 0 : i32
    %c0_i32_0 = arith.constant 0 : i32
    return %arg0, %c0_i32, %arg1 : i32, i32, i32
  }
  func.func @transform_3(%arg0: i32, %arg1: i32, %arg2: i32) -> (i32, i32, i32) {
    %c0_i32 = arith.constant 0 : i32
    %c0_i32_0 = arith.constant 0 : i32
    return %arg0, %arg2, %c0_i32 : i32, i32, i32
  }
  func.func @transform_4(%arg0: i32, %arg1: i32, %arg2: i32) -> (i32, i32, i32) {
    %c0_i32 = arith.constant 0 : i32
    %c0_i32_0 = arith.constant 0 : i32
    %c0_i32_1 = arith.constant 0 : i32
    return %arg2, %c0_i32, %c0_i32_0 : i32, i32, i32
  }
  func.func @transform_5(%arg0: i32, %arg1: i32, %arg2: i32) -> (i32, i32, i32) {
    %c0_i32 = arith.constant 0 : i32
    %c0_i32_0 = arith.constant 0 : i32
    %c0_i32_1 = arith.constant 0 : i32
    return %arg2, %c0_i32, %c0_i32_0 : i32, i32, i32
  }
  func.func @transform_6(%arg0: i32, %arg1: i32, %arg2: i32) -> (i32, i32, i32) {
    %c0_i32 = arith.constant 0 : i32
    %c0_i32_0 = arith.constant 0 : i32
    %c0_i32_1 = arith.constant 0 : i32
    return %arg2, %c0_i32, %c0_i32_0 : i32, i32, i32
  }
  func.func @transform_7(%arg0: i32, %arg1: i32, %arg2: i32) -> (i32, i32, i32) {
    %c0_i32 = arith.constant 0 : i32
    %c0_i32_0 = arith.constant 0 : i32
    %c0_i32_1 = arith.constant 0 : i32
    return %arg2, %c0_i32, %c0_i32_0 : i32, i32, i32
  }
  func.func @transform_8(%arg0: i32, %arg1: i32, %arg2: i32) -> (i32, i32) {
    %c0_i32 = arith.constant 0 : i32
    %c0_i32_0 = arith.constant 0 : i32
    %c0_i32_1 = arith.constant 0 : i32
    return %c0_i32, %c0_i32_0 : i32, i32
  }
  func.func @transform_9(%arg0: i32, %arg1: i32, %arg2: i32) -> (i32, i32, i32, i32) {
    %c0_i32 = arith.constant 0 : i32
    %c0_i32_0 = arith.constant 0 : i32
    %c0_i32_1 = arith.constant 0 : i32
    return %arg0, %c0_i32, %c0_i32_0, %arg1 : i32, i32, i32, i32
  }
}

</mosaic_0001>

<llo_original>
// kernel: tile.18
$region0: #{tile.18}
  #allocation0 [shape = 's32[1]{0}', space=sflag, size = 0x4, scoped, tag = 'scoped memory for tile.18']
  %s0 = inlined_call_operand.vmem [shape: f32[2], index: 0, kind: input, shape index: {}]
  %s1 = inlined_call_operand.vmem [shape: f32[2,1,1,2], index: 1, kind: output, shape index: {}]
  // Predicated region
  $region2: #{tile.18} parent=0 // pred_check
    _
  $region3: #{tile.18} parent=0 // pred_check_branch
    %3 = sbr.rel (0) target = $region5
  $region4: #{tile.18} parent=0 // pred_region
    _
  $region5: #{tile.18} parent=0 // pred_fallthru
    _
  %v4 = vld [vmem:[%s0] ss:$0 sm:$0xff]
  %5 = vst [vmem:[%s1] sm:$0x3] %v4

// kernel: tile.24
$region0: #{tile.24}
  %s0 = inlined_call_operand.vmem [shape: f32[2,1,1,2], index: 0, kind: input, shape index: {}]
  %s1 = inlined_call_operand.vmem [shape: f32[4], index: 1, kind: output, shape index: {}]
  $region1: #{tile.24} parent=0
    #allocation0 [shape = 'u8[4096]{0}', space=vmem, size = 0x1000, scoped, tag = 'scoped mem for output reshape']
    #allocation1 [shape = 'u8[4096]{0}', space=vmem, size = 0x1000, scoped, tag = 'scoped mem for input reshape']
    %s3 = sshllo.u32 0, 2
    %v4 = vld [vmem:[%s0] sm:%s3]
    %5 = vst [vmem:[#allocation1] sm:%s3] %v4
    %v6 = vld [vmem:[#allocation1] sm:$0x1]
    %vm7 = vcmask 15360
    %8 = vst.msk [vmem:[#allocation0] sm:$0x1] %vm7, %v6
    %s9 = scalar_lea.vmem [#allocation1], 1
    %v10 = vld [vmem:[%s9] sm:$0x1]
    %11 = vrot.lane.b32.xlu0 %v10, 2
    %v12 = vpop.permute.xlu0 %11
    %vm13 = vcmask 31760
    %14 = vst.msk [vmem:[#allocation0] sm:$0x1] %vm13, %v12
    %s16 = sshllo.u32 0, 1
    %v18 = vld [vmem:[#allocation0] sm:%s16]
    %s19 = sshllo.u32 0, 1
    %20 = vst [vmem:[%s1] sm:%s19] %v18

// kernel: tile.25
$region0: #{tile.25}
  #allocation0 [shape = 's32[1]{0}', space=sflag, size = 0x4, scoped, tag = 'scoped memory for tile.25']
  %s0 = inlined_call_operand.vmem [shape: f32[4], index: 0, kind: input, shape index: {}]
  %s1 = inlined_call_operand.vmem [shape: f32[4,4], index: 1, kind: output, shape index: {}]
  // Predicated region
  $region2: #{tile.25} parent=0 // pred_check
    _
  $region3: #{tile.25} parent=0 // pred_check_branch
    %3 = sbr.rel (0) target = $region5
  $region4: #{tile.25} parent=0 // pred_region
    _
  $region5: #{tile.25} parent=0 // pred_fallthru
    _
  %v4 = vld [vmem:[%s0] ss:$0 sm:$0xff]
  %5 = vst [vmem:[%s1] sm:$0xf] %v4

// kernel: tile.26
$region0: #{tile.26}
  %s0 = inlined_call_operand.vmem [shape: f32[4,4], index: 0, kind: input, shape index: {}]
  %s1 = inlined_call_operand.vmem [shape: f32[16], index: 1, kind: output, shape index: {}]
  $region1: #{tile.26} parent=0
    #allocation0 [shape = 'u8[4096]{0}', space=vmem, size = 0x1000, scoped, tag = 'scoped mem for output reshape']
    #allocation1 [shape = 'u8[4096]{0}', space=vmem, size = 0x1000, scoped, tag = 'scoped mem for input reshape']
    %s3 = sshllo.u32 0, 4
    %v4 = vld [vmem:[%s0] sm:%s3]
    %5 = vst [vmem:[#allocation1] sm:%s3] %v4
    %v6 = vld [vmem:[#allocation1] sm:$0x1]
    %vm7 = vcmask 31744
    %8 = vst.msk [vmem:[#allocation0] sm:$0x1] %vm7, %v6
    %s9 = scalar_lea.vmem [#allocation1], 3
    %v10 = vld [vmem:[%s9] sm:$0x1]
    %11 = vrot.lane.b32.xlu0 %v10, 12
    %v12 = vpop.permute.xlu0 %11
    %vm13 = vcmask 130144
    %14 = vst.msk [vmem:[#allocation0] sm:$0x1] %vm13, %v12
    %s15 = scalar_lea.vmem [#allocation1], 2
    %v16 = vld [vmem:[%s15] sm:$0x1]
    %17 = vrot.lane.b32.xlu0 %v16, 8
    %v18 = vpop.permute.xlu0 %17
    %vm19 = vcmask 97344
    %20 = vst.msk [vmem:[#allocation0] sm:$0x1] %vm19, %v18
    %s21 = scalar_lea.vmem [#allocation1], 1
    %v22 = vld [vmem:[%s21] sm:$0x1]
    %23 = vrot.lane.b32.xlu0 %v22, 4
    %v24 = vpop.permute.xlu0 %23
    %vm25 = vcmask 64544
    %26 = vst.msk [vmem:[#allocation0] sm:$0x1] %vm25, %v24
    %s28 = sshllo.u32 0, 1
    %v30 = vld [vmem:[#allocation0] sm:%s28]
    %s31 = sshllo.u32 0, 1
    %32 = vst [vmem:[%s1] sm:%s31] %v30

// kernel: dysample_forward.1
$region0: #{dysample_forward.1}
  #allocation0 [shape = 'u32[]', space=smem, size = 0x4, offset = 0x4, fixed_abs, tag = 'smem constant byte address 0x4 - core index']
  #allocation1 [shape = 'u32[144,128]{1,0:T(1,128)}', space=vmem, size = 0x12000, scoped, tag = 'internal scratch']
  #allocation2 [shape = 'f32[4,3,256]{2,1,0:T(4,128)}', space=vmem, size = 0x4000, scoped, tag = 'scratch operand']
  %s0 = inlined_call_operand.vmem [shape: f32[2,256], index: 0, kind: input, shape index: {}]
  %s1 = inlined_call_operand.vmem [shape: s32[256,2], index: 1, kind: input, shape index: {}]
  %s2 = inlined_call_operand.vmem [shape: f32[2,32,256], index: 2, kind: input, shape index: {}, may-alias: {2,3}]
  %s3 = inlined_call_operand.vmem [shape: f32[2,32,256], index: 3, kind: input, shape index: {}, may-alias: {2,3}]
  %s4 = inlined_call_operand.vmem [shape: f32[4,16,32], index: 4, kind: input, shape index: {}]
  %s5 = inlined_call_operand.vmem [shape: f32[4,8,1], index: 5, kind: input, shape index: {}]
  %s6 = inlined_call_operand.vmem [shape: f32[4,8,1], index: 6, kind: input, shape index: {}]
  %s7 = inlined_call_operand.vmem [shape: f32[4,3,8], index: 7, kind: input, shape index: {}]
  %s8 = inlined_call_operand.vmem [shape: f32[3,1], index: 8, kind: input, shape index: {}]
  %s9 = inlined_call_operand.vmem [shape: f32[2,4,3,256], index: 9, kind: output, shape index: {}]
  %s10 = sld [smem:[#allocation0]]
  $region77: #{dysample_forward.1} parent=0
    _
  %s12 = ssub.s32 1, %s10
  %s13 = scalar_select 0, %s12, %s10
  loop: start=0, step=1, limit=10
  $region2: #{dysample_forward.1} parent=0 // loop_pre_header
    _
  $region3: #{dysample_forward.1} parent=0 // loop_header
    %s15 = sphi 0, %s19
    %p16 = scmp.ge.s32.totalorder %s15, 10
    %s22 = sphi 0, %s41
    %s23 = sphi 0, %s37
    %s24 = sphi 0, %s33
    %s25 = sphi 0, %s22
    %s26 = sphi 0, %s23
    %s27 = sphi 0, %s24
    %s28 = sphi 0, %s25
    %s29 = sphi 0, %s26
    %s30 = sphi 0, %s27
    %s44 = sphi 0, %s46
    %s47 = sphi 0, %s44
    %s48 = sphi 0, %s47
    %s64 = sphi 0, %s48
    %s68 = sphi 0, %s68
    %s70 = sphi 0, %s68
    %s71 = sphi 0, %s70
    %s85 = sphi 0, %s71
    %s93 = sphi 0, %s95
    %s96 = sphi 0, %s93
    %s97 = sphi 0, %s96
    %s113 = sphi 0, %s97
    %s121 = sphi 0, %s123
    %s124 = sphi 0, %s121
    %s125 = sphi 0, %s124
    %s141 = sphi 0, %s125
    %s147 = sphi 0, %s149
    %s150 = sphi 0, %s147
    %s151 = sphi 0, %s150
    %s167 = sphi 0, %s151
    %s173 = sphi 0, %s175
    %s176 = sphi 0, %s173
    %s177 = sphi 0, %s176
    %s193 = sphi 0, %s177
    %s199 = sphi 0, %s201
    %s202 = sphi 0, %s199
    %s203 = sphi 0, %s202
    %s219 = sphi 0, %s203
    %s225 = sphi 0, %s227
    %s228 = sphi 0, %s225
    %s229 = sphi 0, %s228
    %s245 = sphi 0, %s229
    %s249 = sphi 0, %s249
    %s251 = sphi 0, %s249
    %s252 = sphi 0, %s251
    %s266 = sphi 0, %s252
    %s274 = sphi 0, %s276
    %s277 = sphi 0, %s274
    %s278 = sphi 0, %s277
    %s294 = sphi 0, %s278
  $region4: #{dysample_forward.1} parent=0 // loop_header_branch
    %18 = sbr.rel (%p16) target = $region8
  $region5: #{dysample_forward.1} parent=0 // loop_body
    %s20 = ssub.s32 %s15, 1
    %s21 = ssub.s32 %s15, 2
    %s31 = sadd.s32 1, %s24
    %p32 = scmp.ge.s32.totalorder %s31, 4
    %s33 = scalar_select %p32, 0, %s31
    %s34 = sadd.s32 1, %s23
    %s35 = scalar_select %p32, %s34, %s23
    %p36 = scmp.ge.s32.totalorder %s35, 1
    %s37 = scalar_select %p36, 0, %s35
    %s38 = sadd.s32 1, %s22
    %s39 = scalar_select %p36, %s38, %s22
    %p40 = scmp.ge.s32.totalorder %s39, 2
    %s41 = scalar_select %p40, 0, %s39
    %s42 = ssub.s32 %s23, %s37
    %p43 = scmp.eq.s32.totalorder %s42, 0
    %s45 = sadd.s32 %s44, 1
    %s46 = scalar_select %p43, %s44, %s45
    %p49 = pneg %p43
    %p50 = scmp.eq.s32.totalorder %s15, 7
    %p51 = por %p49, %p50
    %p52 = scmp.ne.s32.totalorder %s44, %s47
    %p53 = scmp.eq.s32.totalorder %s15, 0
    %p54 = por %p52, %p53
    %p55 = scmp.ne.s32.totalorder %s44, %s47
    %p56 = scmp.eq.s32.totalorder %s20, 7
    %p57 = por %p55, %p56
    %p58 = scmp.ne.s32.totalorder %s47, %s48
    %p59 = scmp.eq.s32.totalorder %s20, 0
    %p60 = por %p58, %p59
    %p61 = scmp.ne.s32.totalorder %s47, %s48
    %p62 = scmp.eq.s32.totalorder %s21, 7
    %p63 = por %p61, %p62
    %p65 = scmp.ne.s32.totalorder %s48, %s64
    %p66 = scmp.eq.s32.totalorder %s21, 0
    %p67 = por %p65, %p66
    %s69 = sadd.s32 %s68, 1
    %p72 = scmp.eq.s32.totalorder %s15, 7
    %p73 = scmp.ne.s32.totalorder %s68, %s70
    %p74 = scmp.eq.s32.totalorder %s15, 0
    %p75 = por %p73, %p74
    %p76 = scmp.ne.s32.totalorder %s68, %s70
    %p77 = scmp.eq.s32.totalorder %s20, 7
    %p78 = por %p76, %p77
    %p79 = scmp.ne.s32.totalorder %s70, %s71
    %p80 = scmp.eq.s32.totalorder %s20, 0
    %p81 = por %p79, %p80
    %p82 = scmp.ne.s32.totalorder %s70, %s71
    %p83 = scmp.eq.s32.totalorder %s21, 7
    %p84 = por %p82, %p83
    %p86 = scmp.ne.s32.totalorder %s71, %s85
    %p87 = scmp.eq.s32.totalorder %s21, 0
    %p88 = por %p86, %p87
    %s89 = ssub.s32 %s22, %s41
    %s90 = ssub.s32 %s23, %s37
    %s91 = sor.u32 %s89, %s90
    %p92 = scmp.eq.s32.totalorder %s91, 0
    %s94 = sadd.s32 %s93, 1
    %s95 = scalar_select %p92, %s93, %s94
    %p98 = pneg %p92
    %p99 = scmp.eq.s32.totalorder %s15, 7
    %p100 = por %p98, %p99
    %p101 = scmp.ne.s32.totalorder %s93, %s96
    %p102 = scmp.eq.s32.totalorder %s15, 0
    %p103 = por %p101, %p102
    %p104 = scmp.ne.s32.totalorder %s93, %s96
    %p105 = scmp.eq.s32.totalorder %s20, 7
    %p106 = por %p104, %p105
    %p107 = scmp.ne.s32.totalorder %s96, %s97
    %p108 = scmp.eq.s32.totalorder %s20, 0
    %p109 = por %p107, %p108
    %p110 = scmp.ne.s32.totalorder %s96, %s97
    %p111 = scmp.eq.s32.totalorder %s21, 7
    %p112 = por %p110, %p111
    %p114 = scmp.ne.s32.totalorder %s97, %s113
    %p115 = scmp.eq.s32.totalorder %s21, 0
    %p116 = por %p114, %p115
    %s117 = ssub.s32 %s22, %s41
    %s118 = ssub.s32 %s24, %s33
    %s119 = sor.u32 %s117, %s118
    %p120 = scmp.eq.s32.totalorder %s119, 0
    %s122 = sadd.s32 %s121, 1
    %s123 = scalar_select %p120, %s121, %s122
    %p126 = pneg %p120
    %p127 = scmp.eq.s32.totalorder %s15, 7
    %p128 = por %p126, %p127
    %p129 = scmp.ne.s32.totalorder %s121, %s124
    %p130 = scmp.eq.s32.totalorder %s15, 0
    %p131 = por %p129, %p130
    %p132 = scmp.ne.s32.totalorder %s121, %s124
    %p133 = scmp.eq.s32.totalorder %s20, 7
    %p134 = por %p132, %p133
    %p135 = scmp.ne.s32.totalorder %s124, %s125
    %p136 = scmp.eq.s32.totalorder %s20, 0
    %p137 = por %p135, %p136
    %p138 = scmp.ne.s32.totalorder %s124, %s125
    %p139 = scmp.eq.s32.totalorder %s21, 7
    %p140 = por %p138, %p139
    %p142 = scmp.ne.s32.totalorder %s125, %s141
    %p143 = scmp.eq.s32.totalorder %s21, 0
    %p144 = por %p142, %p143
    %s145 = ssub.s32 %s24, %s33
    %p146 = scmp.eq.s32.totalorder %s145, 0
    %s148 = sadd.s32 %s147, 1
    %s149 = scalar_select %p146, %s147, %s148
    %p152 = pneg %p146
    %p153 = scmp.eq.s32.totalorder %s15, 7
    %p154 = por %p152, %p153
    %p155 = scmp.ne.s32.totalorder %s147, %s150
    %p156 = scmp.eq.s32.totalorder %s15, 0
    %p157 = por %p155, %p156
    %p158 = scmp.ne.s32.totalorder %s147, %s150
    %p159 = scmp.eq.s32.totalorder %s20, 7
    %p160 = por %p158, %p159
    %p161 = scmp.ne.s32.totalorder %s150, %s151
    %p162 = scmp.eq.s32.totalorder %s20, 0
    %p163 = por %p161, %p162
    %p164 = scmp.ne.s32.totalorder %s150, %s151
    %p165 = scmp.eq.s32.totalorder %s21, 7
    %p166 = por %p164, %p165
    %p168 = scmp.ne.s32.totalorder %s151, %s167
    %p169 = scmp.eq.s32.totalorder %s21, 0
    %p170 = por %p168, %p169
    %s171 = ssub.s32 %s24, %s33
    %p172 = scmp.eq.s32.totalorder %s171, 0
    %s174 = sadd.s32 %s173, 1
    %s175 = scalar_select %p172, %s173, %s174
    %p178 = pneg %p172
    %p179 = scmp.eq.s32.totalorder %s15, 7
    %p180 = por %p178, %p179
    %p181 = scmp.ne.s32.totalorder %s173, %s176
    %p182 = scmp.eq.s32.totalorder %s15, 0
    %p183 = por %p181, %p182
    %p184 = scmp.ne.s32.totalorder %s173, %s176
    %p185 = scmp.eq.s32.totalorder %s20, 7
    %p186 = por %p184, %p185
    %p187 = scmp.ne.s32.totalorder %s176, %s177
    %p188 = scmp.eq.s32.totalorder %s20, 0
    %p189 = por %p187, %p188
    %p190 = scmp.ne.s32.totalorder %s176, %s177
    %p191 = scmp.eq.s32.totalorder %s21, 7
    %p192 = por %p190, %p191
    %p194 = scmp.ne.s32.totalorder %s177, %s193
    %p195 = scmp.eq.s32.totalorder %s21, 0
    %p196 = por %p194, %p195
    %s197 = ssub.s32 %s24, %s33
    %p198 = scmp.eq.s32.totalorder %s197, 0
    %s200 = sadd.s32 %s199, 1
    %s201 = scalar_select %p198, %s199, %s200
    %p204 = pneg %p198
    %p205 = scmp.eq.s32.totalorder %s15, 7
    %p206 = por %p204, %p205
    %p207 = scmp.ne.s32.totalorder %s199, %s202
    %p208 = scmp.eq.s32.totalorder %s15, 0
    %p209 = por %p207, %p208
    %p210 = scmp.ne.s32.totalorder %s199, %s202
    %p211 = scmp.eq.s32.totalorder %s20, 7
    %p212 = por %p210, %p211
    %p213 = scmp.ne.s32.totalorder %s202, %s203
    %p214 = scmp.eq.s32.totalorder %s20, 0
    %p215 = por %p213, %p214
    %p216 = scmp.ne.s32.totalorder %s202, %s203
    %p217 = scmp.eq.s32.totalorder %s21, 7
    %p218 = por %p216, %p217
    %p220 = scmp.ne.s32.totalorder %s203, %s219
    %p221 = scmp.eq.s32.totalorder %s21, 0
    %p222 = por %p220, %p221
    %s223 = ssub.s32 %s24, %s33
    %p224 = scmp.eq.s32.totalorder %s223, 0
    %s226 = sadd.s32 %s225, 1
    %s227 = scalar_select %p224, %s225, %s226
    %p230 = pneg %p224
    %p231 = scmp.eq.s32.totalorder %s15, 7
    %p232 = por %p230, %p231
    %p233 = scmp.ne.s32.totalorder %s225, %s228
    %p234 = scmp.eq.s32.totalorder %s15, 0
    %p235 = por %p233, %p234
    %p236 = scmp.ne.s32.totalorder %s225, %s228
    %p237 = scmp.eq.s32.totalorder %s20, 7
    %p238 = por %p236, %p237
    %p239 = scmp.ne.s32.totalorder %s228, %s229
    %p240 = scmp.eq.s32.totalorder %s20, 0
    %p241 = por %p239, %p240
    %p242 = scmp.ne.s32.totalorder %s228, %s229
    %p243 = scmp.eq.s32.totalorder %s21, 7
    %p244 = por %p242, %p243
    %p246 = scmp.ne.s32.totalorder %s229, %s245
    %p247 = scmp.eq.s32.totalorder %s21, 0
    %p248 = por %p246, %p247
    %s250 = sadd.s32 %s249, 1
    %p253 = scmp.eq.s32.totalorder %s15, 7
    %p254 = scmp.ne.s32.totalorder %s249, %s251
    %p255 = scmp.eq.s32.totalorder %s15, 0
    %p256 = por %p254, %p255
    %p257 = scmp.ne.s32.totalorder %s249, %s251
    %p258 = scmp.eq.s32.totalorder %s20, 7
    %p259 = por %p257, %p258
    %p260 = scmp.ne.s32.totalorder %s251, %s252
    %p261 = scmp.eq.s32.totalorder %s20, 0
    %p262 = por %p260, %p261
    %p263 = scmp.ne.s32.totalorder %s251, %s252
    %p264 = scmp.eq.s32.totalorder %s21, 7
    %p265 = por %p263, %p264
    %p267 = scmp.ne.s32.totalorder %s252, %s266
    %p268 = scmp.eq.s32.totalorder %s21, 0
    %p269 = por %p267, %p268
    %s270 = ssub.s32 %s22, %s41
    %s271 = ssub.s32 %s23, %s37
    %s272 = sor.u32 %s270, %s271
    %p273 = scmp.eq.s32.totalorder %s272, 0
    %s275 = sadd.s32 %s274, 1
    %s276 = scalar_select %p273, %s274, %s275
    %p279 = pneg %p273
    %p280 = scmp.eq.s32.totalorder %s15, 7
    %p281 = por %p279, %p280
    %p282 = scmp.ne.s32.totalorder %s274, %s277
    %p283 = scmp.eq.s32.totalorder %s15, 0
    %p284 = por %p282, %p283
    %p285 = scmp.ne.s32.totalorder %s274, %s277
    %p286 = scmp.eq.s32.totalorder %s20, 7
    %p287 = por %p285, %p286
    %p288 = scmp.ne.s32.totalorder %s277, %s278
    %p289 = scmp.eq.s32.totalorder %s20, 0
    %p290 = por %p288, %p289
    %p291 = scmp.ne.s32.totalorder %s277, %s278
    %p292 = scmp.eq.s32.totalorder %s21, 7
    %p293 = por %p291, %p292
    %p295 = scmp.ne.s32.totalorder %s278, %s294
    %p296 = scmp.eq.s32.totalorder %s21, 0
    %p297 = por %p295, %p296
    %p298 = scmp.le.s32.totalorder 1, %s15
    %p299 = scmp.lt.s32.totalorder %s15, 9
    %p300 = pnand %p298, %p299
    %p301 = pneg %p300
    // Predicated region
    $region9: #{dysample_forward.1} parent=5 // pred_check
      _
    $region10: #{dysample_forward.1} parent=5 // pred_check_branch
      %303 = sbr.rel (%p300) target = $region12
    $region11: #{dysample_forward.1} parent=5 // pred_region
      %s304 = ssub.s32 %s15, 1
      // Predicated region
      $region13: #{dysample_forward.1} parent=11 // pred_check
        %p305 = pneg %p60
      $region14: #{dysample_forward.1} parent=11 // pred_check_branch
        %307 = sbr.rel (%p305) target = $region16
      $region15: #{dysample_forward.1} parent=11 // pred_region
        %s308 = smul.u32 2, %s26
        %p309 = scmp.lt.s32.totalorder %s308, 1
        %s310 = scalar_select %p309, %s308, 1
        %s311 = smul.addr %s310, 2
        %s312 = scalar_lea.vmem %s0, %s311
        %s313 = smul.u32 2, %s26
      $region16: #{dysample_forward.1} parent=11 // pred_fallthru
        _
      // Predicated region
      $region17: #{dysample_forward.1} parent=11 // pred_check
        %p314 = pneg %p81
      $region18: #{dysample_forward.1} parent=11 // pred_check_branch
        %316 = sbr.rel (%p314) target = $region20
      $region19: #{dysample_forward.1} parent=11 // pred_region
        _
      $region20: #{dysample_forward.1} parent=11 // pred_fallthru
        _
      // Predicated region
      $region21: #{dysample_forward.1} parent=11 // pred_check
        %p317 = pneg %p262
      $region22: #{dysample_forward.1} parent=11 // pred_check_branch
        %319 = sbr.rel (%p317) target = $region24
      $region23: #{dysample_forward.1} parent=11 // pred_region
        _
      $region24: #{dysample_forward.1} parent=11 // pred_fallthru
        _
    $region12: #{dysample_forward.1} parent=5 // pred_fallthru
      _
    %p320 = scmp.lt.s32.totalorder %s15, 8
    // Predicated region
    $region25: #{dysample_forward.1} parent=5 // pred_check
      %p321 = pneg %p320
    $region26: #{dysample_forward.1} parent=5 // pred_check_branch
      %323 = sbr.rel (%p321) target = $region28
    $region27: #{dysample_forward.1} parent=5 // pred_region
      // Predicated region
      $region29: #{dysample_forward.1} parent=27 // pred_check
        %p324 = pneg %p103
      $region30: #{dysample_forward.1} parent=27 // pred_check_branch
        %326 = sbr.rel (%p324) target = $region32
      $region31: #{dysample_forward.1} parent=27 // pred_region
        %s327 = smul.u32 2, %s23
        %p328 = scmp.lt.s32.totalorder %s22, 1
        %s329 = scalar_select %p328, %s22, 1
        %p330 = scmp.lt.s32.totalorder %s327, 1
        %s331 = scalar_select %p330, %s327, 1
        %s332 = smul.addr %s329, 8
        %s333 = sadd.s32 %s331, %s332
        %s334 = smul.addr %s333, 8
        %s335 = scalar_lea.vmem %s2, %s334
        %s336 = smul.u32 2, %s23
      $region32: #{dysample_forward.1} parent=27 // pred_fallthru
        _
      // Predicated region
      $region33: #{dysample_forward.1} parent=27 // pred_check
        %p337 = pneg %p131
      $region34: #{dysample_forward.1} parent=27 // pred_check_branch
        %339 = sbr.rel (%p337) target = $region36
      $region35: #{dysample_forward.1} parent=27 // pred_region
        %p340 = scmp.lt.s32.totalorder %s22, 1
        %s341 = scalar_select %p340, %s22, 1
        %p342 = scmp.lt.s32.totalorder %s24, 3
        %s343 = scalar_select %p342, %s24, 3
        %s344 = smul.addr %s343, 2
        %s345 = smul.addr %s341, 8
        %s346 = sadd.s32 %s344, %s345
        %s347 = smul.addr %s346, 8
        %s348 = scalar_lea.vmem %s3, %s347
      $region36: #{dysample_forward.1} parent=27 // pred_fallthru
        _
      // Predicated region
      $region37: #{dysample_forward.1} parent=27 // pred_check
        %p349 = pneg %p157
      $region38: #{dysample_forward.1} parent=27 // pred_check_branch
        %351 = sbr.rel (%p349) target = $region40
      $region39: #{dysample_forward.1} parent=27 // pred_region
        %p352 = scmp.lt.s32.totalorder %s24, 3
        %s353 = scalar_select %p352, %s24, 3
        %s354 = smul.addr %s353, 2
        %s355 = smul.addr %s354, 8
        %s356 = scalar_lea.vmem %s4, %s355
      $region40: #{dysample_forward.1} parent=27 // pred_fallthru
        _
      // Predicated region
      $region41: #{dysample_forward.1} parent=27 // pred_check
        %p357 = pneg %p183
      $region42: #{dysample_forward.1} parent=27 // pred_check_branch
        %359 = sbr.rel (%p357) target = $region44
      $region43: #{dysample_forward.1} parent=27 // pred_region
        %p360 = scmp.lt.s32.totalorder %s24, 3
        %s361 = scalar_select %p360, %s24, 3
        %s362 = smul.addr %s361, 8
        %s363 = scalar_lea.vmem %s5, %s362
      $region44: #{dysample_forward.1} parent=27 // pred_fallthru
        _
      // Predicated region
      $region45: #{dysample_forward.1} parent=27 // pred_check
        %p364 = pneg %p209
      $region46: #{dysample_forward.1} parent=27 // pred_check_branch
        %366 = sbr.rel (%p364) target = $region48
      $region47: #{dysample_forward.1} parent=27 // pred_region
        %p367 = scmp.lt.s32.totalorder %s24, 3
        %s368 = scalar_select %p367, %s24, 3
        %s369 = smul.addr %s368, 8
        %s370 = scalar_lea.vmem %s6, %s369
      $region48: #{dysample_forward.1} parent=27 // pred_fallthru
        _
      // Predicated region
      $region49: #{dysample_forward.1} parent=27 // pred_check
        %p371 = pneg %p235
      $region50: #{dysample_forward.1} parent=27 // pred_check_branch
        %373 = sbr.rel (%p371) target = $region52
      $region51: #{dysample_forward.1} parent=27 // pred_region
        %p374 = scmp.lt.s32.totalorder %s24, 3
        %s375 = scalar_select %p374, %s24, 3
        %s376 = smul.addr %s375, 4
        %s377 = scalar_lea.vmem %s7, %s376
      $region52: #{dysample_forward.1} parent=27 // pred_fallthru
        _
    $region28: #{dysample_forward.1} parent=5 // pred_fallthru
      _
    %p378 = scmp.le.s32.totalorder 1, %s15
    %p379 = scmp.lt.s32.totalorder %s15, 9
    %p380 = pnand %p378, %p379
    %p381 = pneg %p380
    // Predicated region
    $region53: #{dysample_forward.1} parent=5 // pred_check
      _
    $region54: #{dysample_forward.1} parent=5 // pred_check_branch
      %383 = sbr.rel (%p380) target = $region56
    $region55: #{dysample_forward.1} parent=5 // pred_region
      %s384 = ssub.s32 %s15, 1
      %s385 = smul.u32 2, %s26
      %p386 = scmp.lt.s32.totalorder %s385, 1
      %s387 = scalar_select %p386, %s385, 1
      %s388 = smul.addr %s387, 2
      %s389 = scalar_lea.vmem %s0, %s388
      %p390 = pneg %p60
      %p391 = pneg %p57
      %p392 = pneg %p81
      %p393 = pneg %p78
      %s394 = smul.u32 2, %s26
      %p395 = scmp.lt.s32.totalorder %s25, 1
      %s396 = scalar_select %p395, %s25, 1
      %p397 = scmp.lt.s32.totalorder %s394, 1
      %s398 = scalar_select %p397, %s394, 1
      %s399 = smul.addr %s396, 8
      %s400 = sadd.s32 %s398, %s399
      %s401 = smul.addr %s400, 8
      %s402 = scalar_lea.vmem %s2, %s401
      %p403 = pneg %p109
      %p404 = pneg %p106
      %p405 = scmp.lt.s32.totalorder %s25, 1
      %s406 = scalar_select %p405, %s25, 1
      %p407 = scmp.lt.s32.totalorder %s27, 3
      %s408 = scalar_select %p407, %s27, 3
      %s409 = smul.addr %s408, 2
      %s410 = smul.addr %s406, 8
      %s411 = sadd.s32 %s409, %s410
      %s412 = smul.addr %s411, 8
      %s413 = scalar_lea.vmem %s3, %s412
      %p414 = pneg %p137
      %p415 = pneg %p134
      %p416 = scmp.lt.s32.totalorder %s27, 3
      %s417 = scalar_select %p416, %s27, 3
      %s418 = smul.addr %s417, 2
      %s419 = smul.addr %s418, 8
      %s420 = scalar_lea.vmem %s4, %s419
      %p421 = pneg %p163
      %p422 = pneg %p160
      %p423 = scmp.lt.s32.totalorder %s27, 3
      %s424 = scalar_select %p423, %s27, 3
      %s425 = smul.addr %s424, 8
      %s426 = scalar_lea.vmem %s5, %s425
      %p427 = pneg %p189
      %p428 = pneg %p186
      %p429 = scmp.lt.s32.totalorder %s27, 3
      %s430 = scalar_select %p429, %s27, 3
      %s431 = smul.addr %s430, 8
      %s432 = scalar_lea.vmem %s6, %s431
      %p433 = pneg %p215
      %p434 = pneg %p212
      %p435 = scmp.lt.s32.totalorder %s27, 3
      %s436 = scalar_select %p435, %s27, 3
      %s437 = smul.addr %s436, 4
      %s438 = scalar_lea.vmem %s7, %s437
      %p439 = pneg %p241
      %p440 = pneg %p238
      %p441 = pneg %p262
      %p442 = pneg %p259
      %p443 = pneg %p290
      %p444 = pneg %p287
      %s445 = smul.u32 2, %s26
      %p446 = scmp.lt.s32.totalorder %s25, 1
      %s447 = scalar_select %p446, %s25, 1
      %p448 = scmp.lt.s32.totalorder %s445, 1
      %s449 = scalar_select %p448, %s445, 1
      %s450 = smul.addr %s447, 8
      %s451 = sadd.s32 %s449, %s450
      %s452 = smul.addr %s451, 4
      %s453 = scalar_lea.vmem %s9, %s452
      %s454 = smul.u32 2, %s26
      %p455 = scmp.lt.s32.totalorder %s454, 1
      %s456 = scalar_select %p455, %s454, 1
      %s457 = smul.addr %s456, 2
      %s458 = scalar_lea.vmem %s0, %s457
      %s459 = smul.u32 2, %s26
      %s460 = smul.u32 2, %s26
      %p461 = scmp.lt.s32.totalorder %s25, 1
      %s462 = scalar_select %p461, %s25, 1
      %p463 = scmp.lt.s32.totalorder %s460, 1
      %s464 = scalar_select %p463, %s460, 1
      %s465 = smul.addr %s462, 8
      %s466 = sadd.s32 %s464, %s465
      %s467 = smul.addr %s466, 8
      %s468 = scalar_lea.vmem %s2, %s467
      %s469 = smul.u32 2, %s26
      %p470 = scmp.lt.s32.totalorder %s25, 1
      %s471 = scalar_select %p470, %s25, 1
      %p472 = scmp.lt.s32.totalorder %s27, 3
      %s473 = scalar_select %p472, %s27, 3
      %s474 = smul.addr %s473, 2
      %s475 = smul.addr %s471, 8
      %s476 = sadd.s32 %s474, %s475
      %s477 = smul.addr %s476, 8
      %s478 = scalar_lea.vmem %s3, %s477
      %p479 = scmp.lt.s32.totalorder %s27, 3
      %s480 = scalar_select %p479, %s27, 3
      %s481 = smul.addr %s480, 2
      %s482 = smul.addr %s481, 8
      %s483 = scalar_lea.vmem %s4, %s482
      %p484 = scmp.lt.s32.totalorder %s27, 3
      %s485 = scalar_select %p484, %s27, 3
      %s486 = smul.addr %s485, 8
      %s487 = scalar_lea.vmem %s5, %s486
      %p488 = scmp.lt.s32.totalorder %s27, 3
      %s489 = scalar_select %p488, %s27, 3
      %s490 = smul.addr %s489, 8
      %s491 = scalar_lea.vmem %s6, %s490
      %p492 = scmp.lt.s32.totalorder %s27, 3
      %s493 = scalar_select %p492, %s27, 3
      %s494 = smul.addr %s493, 4
      %s495 = scalar_lea.vmem %s7, %s494
      %s496 = smul.u32 2, %s26
      %p497 = scmp.lt.s32.totalorder %s25, 1
      %s498 = scalar_select %p497, %s25, 1
      %p499 = scmp.lt.s32.totalorder %s496, 1
      %s500 = scalar_select %p499, %s496, 1
      %s501 = smul.addr %s498, 8
      %s502 = sadd.s32 %s500, %s501
      %s503 = smul.addr %s502, 4
      %s504 = scalar_lea.vmem %s9, %s503
      %s505 = smul.u32 2, %s26
      %p506 = scmp.eq.s32.totalorder %s27, 0
      // Predicated region
      $region57: #{dysample_forward.1} parent=55 // pred_check
        %p507 = pneg %p506
      $region58: #{dysample_forward.1} parent=55 // pred_check_branch
        %509 = sbr.rel (%p507) target = $region60
      $region59: #{dysample_forward.1} parent=55 // pred_region
        %510 = vst [vmem:[#allocation2] sm:$0x77] 0.0
        %511 = vst [vmem:[#allocation2 + $0x8] sm:$0x77] 0.0
        %512 = vst [vmem:[#allocation2 + $0x10] sm:$0x77] 0.0
        %513 = vst [vmem:[#allocation2 + $0x18] sm:$0x77] 0.0
      $region60: #{dysample_forward.1} parent=55 // pred_fallthru
        _
      %v514 = vld [vmem:[%s468] sm:$0xff]
      %v515 = vld [vmem:[%s468 + $0x8] sm:$0xff]
      %v516 = vld [vmem:[%s468 + $0x10] sm:$0xff]
      %v517 = vld [vmem:[%s468 + $0x18] sm:$0xff]
      %v518 = vld [vmem:[%s468 + $0x20] sm:$0xff]
      %v519 = vld [vmem:[%s468 + $0x28] sm:$0xff]
      %v520 = vld [vmem:[%s468 + $0x30] sm:$0xff]
      %v521 = vld [vmem:[%s468 + $0x38] sm:$0xff]
      %v522 = vld [vmem:[%s478] sm:$0xff]
      %v523 = vld [vmem:[%s478 + $0x8] sm:$0xff]
      %v524 = vld [vmem:[%s483] sm:$0xff]
      %v525 = vld [vmem:[%s483 + $0x8] sm:$0xff]
      %v526 = vld [vmem:[%s495] sm:$0x7]
      %vm527 = vcmask 261120
      %v529 = vsel %vm527, %v524, 0
      %v532 = vsel %vm527, %v525, 0
      %534 = vmatprep.subr.mxu0 %v515
      %535 = vmatpush1.msra.mxu0 %v514
      %536 = vmatprep.subr.mxu0 %v517
      %537 = vmatpush1.msra.mxu0 %v516
      %538 = vmatprep.subr.mxu0 %v519
      %539 = vmatpush1.msra.mxu0 %v518
      %540 = vmatprep.subr.mxu0 %v521
      %541 = vmatpush1.msra.mxu0 %v520
      %542 = vmatprep.subr.mxu0 0.0
      %543 = vmatpush1.msra.mxu0 0.0
      %544 = vmatprep.subr.mxu0 0.0
      %545 = vmatpush1.msra.mxu0 0.0
      %546 = vmatprep.subr.mxu0 0.0
      %547 = vmatpush1.msra.mxu0 0.0
      %548 = vmatprep.subr.mxu0 0.0
      %549 = vmatpush1.msra.mxu0 0.0
      %550 = vmatprep.subr.mxu0 0.0
      %551 = vmatpush1.msra.mxu0 0.0
      %552 = vmatprep.subr.mxu0 0.0
      %553 = vmatpush1.msra.mxu0 0.0
      %554 = vmatprep.subr.mxu0 0.0
      %555 = vmatpush1.msra.mxu0 0.0
      %556 = vmatprep.subr.mxu0 0.0
      %557 = vmatpush1.msra.mxu0 0.0
      %558 = vmatprep.subr.mxu0 0.0
      %559 = vmatpush1.msra.mxu0 0.0
      %560 = vmatprep.subr.mxu0 0.0
      %561 = vmatpush1.msra.mxu0 0.0
      %562 = vmatprep.subr.mxu0 0.0
      %563 = vmatpush1.msra.mxu0 0.0
      %564 = vmatprep.subr.mxu0 0.0
      %565 = vmatpush1.msra.mxu0 0.0
      %566 = vmatprep.subr.mxu0 0.0
      %567 = vmatpush1.msra.mxu0 0.0
      %568 = vmatprep.subr.mxu0 0.0
      %569 = vmatpush1.msra.mxu0 0.0
      %570 = vmatprep.subr.mxu0 0.0
      %571 = vmatpush1.msra.mxu0 0.0
      %572 = vmatprep.subr.mxu0 0.0
      %573 = vmatpush1.msra.mxu0 0.0
      %574 = vmatprep.subr.mxu0 0.0
      %575 = vmatpush1.msra.mxu0 0.0
      %576 = vmatprep.subr.mxu0 0.0
      %577 = vmatpush1.msra.mxu0 0.0
      %578 = vmatprep.subr.mxu0 0.0
      %579 = vmatpush1.msra.mxu0 0.0
      %580 = vmatprep.subr.mxu0 0.0
      %581 = vmatpush1.msra.mxu0 0.0
      %582 = vmatprep.subr.mxu0 0.0
      %583 = vmatpush1.msra.mxu0 0.0
      %584 = vmatprep.subr.mxu0 0.0
      %585 = vmatpush1.msra.mxu0 0.0
      %586 = vmatprep.subr.mxu0 0.0
      %587 = vmatpush1.msra.mxu0 0.0
      %588 = vmatprep.subr.mxu0 0.0
      %589 = vmatpush1.msra.mxu0 0.0
      %590 = vmatprep.subr.mxu0 0.0
      %591 = vmatpush1.msra.mxu0 0.0
      %592 = vmatprep.subr.mxu0 0.0
      %593 = vmatpush1.msra.mxu0 0.0
      %594 = vmatprep.subr.mxu0 0.0
      %595 = vmatpush1.msra.mxu0 0.0
      %596 = vmatprep.subr.mxu0 0.0
      %597 = vmatpush1.msra.mxu0 0.0
      %598 = vmatprep.mubr.f32.mxu0 0.0
      %599 = vmatmul.mubr.f32.gmra.mrb[0].mxu0 %v529
      %v600 = vpop.f32.mrb[0].mxu0
      %v601 = vadd.f32 0.0, %v600
      %v602 = vpop.f32.mrb[0].mxu0
      %v603 = vadd.f32 0.0, %v602
      %604 = vmatprep.mubr.f32.mxu0 0.0
      %605 = vmatmul.mubr.f32.gmra.mrb[0].mxu0 %v532
      %v606 = vpop.f32.mrb[0].mxu0
      %v607 = vadd.f32 0.0, %v606
      %v608 = vpop.f32.mrb[0].mxu0
      %v609 = vadd.f32 0.0, %v608
      %610 = vdwg.mxu0
      %v611 = vld [vmem:[%s487] sm:$0xff]
      %613 = vset.pattern.permute.xlu0 0
      %614 = vperm.xlu0 %613, %v611
      %v615 = vpop.permute.xlu0 %614
      %v617 = vadd.f32 %v601, %v615
      %v618 = vadd.f32 %v603, %v615
      %v619 = vxor.u32 %v607, 2147483648
      %v620 = vxor.u32 %v609, 2147483648
      %v621 = vmul.f32 %v619, 1.442695
      %v622 = vpow.pop %v621
      %v623 = vmul.f32 %v620, 1.442695
      %v624 = vpow.pop %v623
      %v625 = vadd.f32 %v622, 1.0
      %v626 = vadd.f32 %v624, 1.0
      %v627 = vrcp.pop %v625
      %v628 = vmul.f32 1.0, %v627
      %v629 = vrcp.pop %v626
      %v630 = vmul.f32 1.0, %v629
      %v631 = vmul.f32 %v617, %v628
      %v632 = vmul.f32 %v618, %v630
      %v633 = vmul.f32 %v631, 0.5
      %v634 = vmul.f32 %v632, 0.5
      %v635 = vld [vmem:[%s491] sm:$0xff]
      %637 = vset.pattern.permute.xlu0 0
      %638 = vperm.xlu0 %637, %v635
      %v639 = vpop.permute.xlu0 %638
      %v641 = vadd.f32 %v633, %v639
      %v642 = vadd.f32 %v634, %v639
      %vm643 = vcmask 64512
      %v645 = vsel %vm643, %v526, 0
      %647 = vmatprep.subr.mxu0 %v523
      %648 = vmatpush1.msra.mxu0 %v522
      %649 = vmatprep.subr.mxu0 0.0
      %650 = vmatpush1.msra.mxu0 0.0
      %651 = vmatprep.subr.mxu0 0.0
      %652 = vmatpush1.msra.mxu0 0.0
      %653 = vmatprep.subr.mxu0 0.0
      %654 = vmatpush1.msra.mxu0 0.0
      %655 = vmatprep.subr.mxu0 0.0
      %656 = vmatpush1.msra.mxu0 0.0
      %657 = vmatprep.subr.mxu0 0.0
      %658 = vmatpush1.msra.mxu0 0.0
      %659 = vmatprep.subr.mxu0 0.0
      %660 = vmatpush1.msra.mxu0 0.0
      %661 = vmatprep.subr.mxu0 0.0
      %662 = vmatpush1.msra.mxu0 0.0
      %663 = vmatprep.subr.mxu0 0.0
      %664 = vmatpush1.msra.mxu0 0.0
      %665 = vmatprep.subr.mxu0 0.0
      %666 = vmatpush1.msra.mxu0 0.0
      %667 = vmatprep.subr.mxu0 0.0
      %668 = vmatpush1.msra.mxu0 0.0
      %669 = vmatprep.subr.mxu0 0.0
      %670 = vmatpush1.msra.mxu0 0.0
      %671 = vmatprep.subr.mxu0 0.0
      %672 = vmatpush1.msra.mxu0 0.0
      %673 = vmatprep.subr.mxu0 0.0
      %674 = vmatpush1.msra.mxu0 0.0
      %675 = vmatprep.subr.mxu0 0.0
      %676 = vmatpush1.msra.mxu0 0.0
      %677 = vmatprep.subr.mxu0 0.0
      %678 = vmatpush1.msra.mxu0 0.0
      %679 = vmatprep.subr.mxu0 0.0
      %680 = vmatpush1.msra.mxu0 0.0
      %681 = vmatprep.subr.mxu0 0.0
      %682 = vmatpush1.msra.mxu0 0.0
      %683 = vmatprep.subr.mxu0 0.0
      %684 = vmatpush1.msra.mxu0 0.0
      %685 = vmatprep.subr.mxu0 0.0
      %686 = vmatpush1.msra.mxu0 0.0
      %687 = vmatprep.subr.mxu0 0.0
      %688 = vmatpush1.msra.mxu0 0.0
      %689 = vmatprep.subr.mxu0 0.0
      %690 = vmatpush1.msra.mxu0 0.0
      %691 = vmatprep.subr.mxu0 0.0
      %692 = vmatpush1.msra.mxu0 0.0
      %693 = vmatprep.subr.mxu0 0.0
      %694 = vmatpush1.msra.mxu0 0.0
      %695 = vmatprep.subr.mxu0 0.0
      %696 = vmatpush1.msra.mxu0 0.0
      %697 = vmatprep.subr.mxu0 0.0
      %698 = vmatpush1.msra.mxu0 0.0
      %699 = vmatprep.subr.mxu0 0.0
      %700 = vmatpush1.msra.mxu0 0.0
      %701 = vmatprep.subr.mxu0 0.0
      %702 = vmatpush1.msra.mxu0 0.0
      %703 = vmatprep.subr.mxu0 0.0
      %704 = vmatpush1.msra.mxu0 0.0
      %705 = vmatprep.subr.mxu0 0.0
      %706 = vmatpush1.msra.mxu0 0.0
      %707 = vmatprep.subr.mxu0 0.0
      %708 = vmatpush1.msra.mxu0 0.0
      %709 = vmatprep.subr.mxu0 0.0
      %710 = vmatpush1.msra.mxu0 0.0
      %711 = vmatprep.mubr.f32.mxu0 0.0
      %712 = vmatmul.mubr.f32.gmra.mrb[0].mxu0 %v645
      %v713 = vpop.f32.mrb[0].mxu0
      %v714 = vadd.f32 0.0, %v713
      %v715 = vpop.f32.mrb[0].mxu0
      %v716 = vadd.f32 0.0, %v715
      %717 = vdwg.mxu0
      %v718 = vpack.c.bf16 %v714, %v714
      %v719 = vpack.c.bf16 %v716, %v716
      %v720 = vld [vmem:[%s458] ss:$2 sm:$0x3]
      %s721 = scalar_lea.vmem %s458, 1
      %v722 = vld [vmem:[%s721] ss:$2 sm:$0x3]
      %v723 = vld [vmem:[%s1] sm:$0xff]
      %v724 = vld [vmem:[%s1 + $0x8] sm:$0xff]
      %v725 = vld [vmem:[%s1 + $0x10] sm:$0xff]
      %v726 = vld [vmem:[%s1 + $0x18] sm:$0xff]
      %v727 = vld [vmem:[%s1 + $0x20] sm:$0xff]
      %v728 = vld [vmem:[%s1 + $0x28] sm:$0xff]
      %v729 = vld [vmem:[%s1 + $0x30] sm:$0xff]
      %v730 = vld [vmem:[%s1 + $0x38] sm:$0xff]
      %v731 = vld [vmem:[%s1 + $0x40] sm:$0xff]
      %v732 = vld [vmem:[%s1 + $0x48] sm:$0xff]
      %v733 = vld [vmem:[%s1 + $0x50] sm:$0xff]
      %v734 = vld [vmem:[%s1 + $0x58] sm:$0xff]
      %v735 = vld [vmem:[%s1 + $0x60] sm:$0xff]
      %v736 = vld [vmem:[%s1 + $0x68] sm:$0xff]
      %v737 = vld [vmem:[%s1 + $0x70] sm:$0xff]
      %v738 = vld [vmem:[%s1 + $0x78] sm:$0xff]
      %v739 = vld [vmem:[%s1 + $0x80] sm:$0xff]
      %v740 = vld [vmem:[%s1 + $0x88] sm:$0xff]
      %v741 = vld [vmem:[%s1 + $0x90] sm:$0xff]
      %v742 = vld [vmem:[%s1 + $0x98] sm:$0xff]
      %v743 = vld [vmem:[%s1 + $0xa0] sm:$0xff]
      %v744 = vld [vmem:[%s1 + $0xa8] sm:$0xff]
      %v745 = vld [vmem:[%s1 + $0xb0] sm:$0xff]
      %v746 = vld [vmem:[%s1 + $0xb8] sm:$0xff]
      %v747 = vld [vmem:[%s1 + $0xc0] sm:$0xff]
      %v748 = vld [vmem:[%s1 + $0xc8] sm:$0xff]
      %v749 = vld [vmem:[%s1 + $0xd0] sm:$0xff]
      %v750 = vld [vmem:[%s1 + $0xd8] sm:$0xff]
      %v751 = vld [vmem:[%s1 + $0xe0] sm:$0xff]
      %v752 = vld [vmem:[%s1 + $0xe8] sm:$0xff]
      %v753 = vld [vmem:[%s1 + $0xf0] sm:$0xff]
      %v754 = vld [vmem:[%s1 + $0xf8] sm:$0xff]
      %v757 = vcombine.low %v641, %v642
      %v759 = vunpack.c.l.s4 1966171168
      %v760 = vunpack.c.0.s8 %v759
      %v761 = vlaneseq
      %v762 = vshrl.u32 %v761, 7
      %v763 = vsub.s32 %v760, %v762
      %v764 = vrot.slane %v757, %v763
      %v766 = vunpack.c.l.s4 1966171168
      %v767 = vunpack.c.0.s8 %v766
      %v768 = vlaneseq
      %v769 = vshrl.u32 %v768, 7
      %v770 = vsub.s32 %v767, %v769
      %v771 = vrot.slane %v764, %v770
      %v773 = vadd.f32 %v720, %v771
      %v774 = vmax.f32 %v773, 0.0
      %v775 = vmin.f32 %v774, 15.0
      %v776 = vcombine.high %v641, %v642
      %v778 = vunpack.c.l.s4 1966171168
      %v779 = vunpack.c.0.s8 %v778
      %v780 = vlaneseq
      %v781 = vshrl.u32 %v780, 7
      %v782 = vsub.s32 %v779, %v781
      %v783 = vrot.slane %v776, %v782
      %v785 = vunpack.c.l.s4 1966171168
      %v786 = vunpack.c.0.s8 %v785
      %v787 = vlaneseq
      %v788 = vshrl.u32 %v787, 7
      %v789 = vsub.s32 %v786, %v788
      %v790 = vrot.slane %v783, %v789
      %v792 = vadd.f32 %v722, %v790
      %v793 = vmax.f32 %v792, 0.0
      %v794 = vmin.f32 %v793, 15.0
      %v795 = vfloor.f32 %v775
      %v796 = vfloor.f32 %v794
      %v797 = vsub.f32 %v775, %v795
      %v798 = vsub.f32 %v794, %v796
      %v799 = vcvt.f32.s32.to.zero.pseudo %v795
      %v800 = vcvt.f32.s32.to.zero.pseudo %v796
      %801 = vset.pattern.permute.xlu0 1
      %802 = vperm.xlu0 %801, %v723
      %v803 = vpop.permute.xlu0 %802
      %804 = vset.pattern.permute.xlu0 1
      %805 = vperm.xlu0 %804, %v724
      %v806 = vpop.permute.xlu0 %805
      %807 = vset.pattern.permute.xlu0 1
      %808 = vperm.xlu0 %807, %v725
      %v809 = vpop.permute.xlu0 %808
      %810 = vset.pattern.permute.xlu0 1
      %811 = vperm.xlu0 %810, %v726
      %v812 = vpop.permute.xlu0 %811
      %813 = vset.pattern.permute.xlu0 1
      %814 = vperm.xlu0 %813, %v727
      %v815 = vpop.permute.xlu0 %814
      %816 = vset.pattern.permute.xlu0 1
      %817 = vperm.xlu0 %816, %v728
      %v818 = vpop.permute.xlu0 %817
      %819 = vset.pattern.permute.xlu0 1
      %820 = vperm.xlu0 %819, %v729
      %v821 = vpop.permute.xlu0 %820
      %822 = vset.pattern.permute.xlu0 1
      %823 = vperm.xlu0 %822, %v730
      %v824 = vpop.permute.xlu0 %823
      %825 = vset.pattern.permute.xlu0 1
      %826 = vperm.xlu0 %825, %v731
      %v827 = vpop.permute.xlu0 %826
      %828 = vset.pattern.permute.xlu0 1
      %829 = vperm.xlu0 %828, %v732
      %v830 = vpop.permute.xlu0 %829
      %831 = vset.pattern.permute.xlu0 1
      %832 = vperm.xlu0 %831, %v733
      %v833 = vpop.permute.xlu0 %832
      %834 = vset.pattern.permute.xlu0 1
      %835 = vperm.xlu0 %834, %v734
      %v836 = vpop.permute.xlu0 %835
      %837 = vset.pattern.permute.xlu0 1
      %838 = vperm.xlu0 %837, %v735
      %v839 = vpop.permute.xlu0 %838
      %840 = vset.pattern.permute.xlu0 1
      %841 = vperm.xlu0 %840, %v736
      %v842 = vpop.permute.xlu0 %841
      %843 = vset.pattern.permute.xlu0 1
      %844 = vperm.xlu0 %843, %v737
      %v845 = vpop.permute.xlu0 %844
      %846 = vset.pattern.permute.xlu0 1
      %847 = vperm.xlu0 %846, %v738
      %v848 = vpop.permute.xlu0 %847
      %849 = vset.pattern.permute.xlu0 1
      %850 = vperm.xlu0 %849, %v739
      %v851 = vpop.permute.xlu0 %850
      %852 = vset.pattern.permute.xlu0 1
      %853 = vperm.xlu0 %852, %v740
      %v854 = vpop.permute.xlu0 %853
      %855 = vset.pattern.permute.xlu0 1
      %856 = vperm.xlu0 %855, %v741
      %v857 = vpop.permute.xlu0 %856
      %858 = vset.pattern.permute.xlu0 1
      %859 = vperm.xlu0 %858, %v742
      %v860 = vpop.permute.xlu0 %859
      %861 = vset.pattern.permute.xlu0 1
      %862 = vperm.xlu0 %861, %v743
      %v863 = vpop.permute.xlu0 %862
      %864 = vset.pattern.permute.xlu0 1
      %865 = vperm.xlu0 %864, %v744
      %v866 = vpop.permute.xlu0 %865
      %867 = vset.pattern.permute.xlu0 1
      %868 = vperm.xlu0 %867, %v745
      %v869 = vpop.permute.xlu0 %868
      %870 = vset.pattern.permute.xlu0 1
      %871 = vperm.xlu0 %870, %v746
      %v872 = vpop.permute.xlu0 %871
      %873 = vset.pattern.permute.xlu0 1
      %874 = vperm.xlu0 %873, %v747
      %v875 = vpop.permute.xlu0 %874
      %876 = vset.pattern.permute.xlu0 1
      %877 = vperm.xlu0 %876, %v748
      %v878 = vpop.permute.xlu0 %877
      %879 = vset.pattern.permute.xlu0 1
      %880 = vperm.xlu0 %879, %v749
      %v881 = vpop.permute.xlu0 %880
      %882 = vset.pattern.permute.xlu0 1
      %883 = vperm.xlu0 %882, %v750
      %v884 = vpop.permute.xlu0 %883
      %885 = vset.pattern.permute.xlu0 1
      %886 = vperm.xlu0 %885, %v751
      %v887 = vpop.permute.xlu0 %886
      %888 = vset.pattern.permute.xlu0 1
      %889 = vperm.xlu0 %888, %v752
      %v890 = vpop.permute.xlu0 %889
      %891 = vset.pattern.permute.xlu0 1
      %892 = vperm.xlu0 %891, %v753
      %v893 = vpop.permute.xlu0 %892
      %894 = vset.pattern.permute.xlu0 1
      %895 = vperm.xlu0 %894, %v754
      %v896 = vpop.permute.xlu0 %895
      %v897 = vlaneseq
      %v898 = vshrl.u32 %v897, 7
      %v899 = vsub.s32 0, %v898
      %v900 = vrot.slane %v800, %v899
      %v901 = vlaneseq
      %v902 = vshrl.u32 %v901, 7
      %v903 = vsub.s32 1, %v902
      %v904 = vrot.slane %v800, %v903
      %vm905 = vcmp.eq.s32.totalorder %v803, %v900
      %vm906 = vcmp.eq.s32.totalorder %v803, %v904
      %vm907 = vcmp.eq.s32.totalorder %v806, %v900
      %vm908 = vcmp.eq.s32.totalorder %v806, %v904
      %vm909 = vcmp.eq.s32.totalorder %v809, %v900
      %vm910 = vcmp.eq.s32.totalorder %v809, %v904
      %vm911 = vcmp.eq.s32.totalorder %v812, %v900
      %vm912 = vcmp.eq.s32.totalorder %v812, %v904
      %vm913 = vcmp.eq.s32.totalorder %v815, %v900
      %vm914 = vcmp.eq.s32.totalorder %v815, %v904
      %vm915 = vcmp.eq.s32.totalorder %v818, %v900
      %vm916 = vcmp.eq.s32.totalorder %v818, %v904
      %vm917 = vcmp.eq.s32.totalorder %v821, %v900
      %vm918 = vcmp.eq.s32.totalorder %v821, %v904
      %vm919 = vcmp.eq.s32.totalorder %v824, %v900
      %vm920 = vcmp.eq.s32.totalorder %v824, %v904
      %vm921 = vcmp.eq.s32.totalorder %v827, %v900
      %vm922 = vcmp.eq.s32.totalorder %v827, %v904
      %vm923 = vcmp.eq.s32.totalorder %v830, %v900
      %vm924 = vcmp.eq.s32.totalorder %v830, %v904
      %vm925 = vcmp.eq.s32.totalorder %v833, %v900
      %vm926 = vcmp.eq.s32.totalorder %v833, %v904
      %vm927 = vcmp.eq.s32.totalorder %v836, %v900
      %vm928 = vcmp.eq.s32.totalorder %v836, %v904
      %vm929 = vcmp.eq.s32.totalorder %v839, %v900
      %vm930 = vcmp.eq.s32.totalorder %v839, %v904
      %vm931 = vcmp.eq.s32.totalorder %v842, %v900
      %vm932 = vcmp.eq.s32.totalorder %v842, %v904
      %vm933 = vcmp.eq.s32.totalorder %v845, %v900
      %vm934 = vcmp.eq.s32.totalorder %v845, %v904
      %vm935 = vcmp.eq.s32.totalorder %v848, %v900
      %vm936 = vcmp.eq.s32.totalorder %v848, %v904
      %vm937 = vcmp.eq.s32.totalorder %v851, %v900
      %vm938 = vcmp.eq.s32.totalorder %v851, %v904
      %vm939 = vcmp.eq.s32.totalorder %v854, %v900
      %vm940 = vcmp.eq.s32.totalorder %v854, %v904
      %vm941 = vcmp.eq.s32.totalorder %v857, %v900
      %vm942 = vcmp.eq.s32.totalorder %v857, %v904
      %vm943 = vcmp.eq.s32.totalorder %v860, %v900
      %vm944 = vcmp.eq.s32.totalorder %v860, %v904
      %vm945 = vcmp.eq.s32.totalorder %v863, %v900
      %vm946 = vcmp.eq.s32.totalorder %v863, %v904
      %vm947 = vcmp.eq.s32.totalorder %v866, %v900
      %vm948 = vcmp.eq.s32.totalorder %v866, %v904
      %vm949 = vcmp.eq.s32.totalorder %v869, %v900
      %vm950 = vcmp.eq.s32.totalorder %v869, %v904
      %vm951 = vcmp.eq.s32.totalorder %v872, %v900
      %vm952 = vcmp.eq.s32.totalorder %v872, %v904
      %vm953 = vcmp.eq.s32.totalorder %v875, %v900
      %vm954 = vcmp.eq.s32.totalorder %v875, %v904
      %vm955 = vcmp.eq.s32.totalorder %v878, %v900
      %vm956 = vcmp.eq.s32.totalorder %v878, %v904
      %vm957 = vcmp.eq.s32.totalorder %v881, %v900
      %vm958 = vcmp.eq.s32.totalorder %v881, %v904
      %vm959 = vcmp.eq.s32.totalorder %v884, %v900
      %vm960 = vcmp.eq.s32.totalorder %v884, %v904
      %vm961 = vcmp.eq.s32.totalorder %v887, %v900
      %vm962 = vcmp.eq.s32.totalorder %v887, %v904
      %vm963 = vcmp.eq.s32.totalorder %v890, %v900
      %vm964 = vcmp.eq.s32.totalorder %v890, %v904
      %vm965 = vcmp.eq.s32.totalorder %v893, %v900
      %vm966 = vcmp.eq.s32.totalorder %v893, %v904
      %vm967 = vcmp.eq.s32.totalorder %v896, %v900
      %vm968 = vcmp.eq.s32.totalorder %v896, %v904
      %v969 = vsub.f32 1.0, %v798
      %v970 = vadd.s32 %v800, 1
      %v971 = vlaneseq
      %v972 = vshrl.u32 %v971, 7
      %v973 = vsub.s32 0, %v972
      %v974 = vrot.slane %v970, %v973
      %v975 = vlaneseq
      %v976 = vshrl.u32 %v975, 7
      %v977 = vsub.s32 1, %v976
      %v978 = vrot.slane %v970, %v977
      %vm979 = vcmp.eq.s32.totalorder %v803, %v974
      %vm980 = vcmp.eq.s32.totalorder %v803, %v978
      %vm981 = vcmp.eq.s32.totalorder %v806, %v974
      %vm982 = vcmp.eq.s32.totalorder %v806, %v978
      %vm983 = vcmp.eq.s32.totalorder %v809, %v974
      %vm984 = vcmp.eq.s32.totalorder %v809, %v978
      %vm985 = vcmp.eq.s32.totalorder %v812, %v974
      %vm986 = vcmp.eq.s32.totalorder %v812, %v978
      %vm987 = vcmp.eq.s32.totalorder %v815, %v974
      %vm988 = vcmp.eq.s32.totalorder %v815, %v978
      %vm989 = vcmp.eq.s32.totalorder %v818, %v974
      %vm990 = vcmp.eq.s32.totalorder %v818, %v978
      %vm991 = vcmp.eq.s32.totalorder %v821, %v974
      %vm992 = vcmp.eq.s32.totalorder %v821, %v978
      %vm993 = vcmp.eq.s32.totalorder %v824, %v974
      %vm994 = vcmp.eq.s32.totalorder %v824, %v978
      %vm995 = vcmp.eq.s32.totalorder %v827, %v974
      %vm996 = vcmp.eq.s32.totalorder %v827, %v978
      %vm997 = vcmp.eq.s32.totalorder %v830, %v974
      %vm998 = vcmp.eq.s32.totalorder %v830, %v978
      %vm999 = vcmp.eq.s32.totalorder %v833, %v974
      %vm1000 = vcmp.eq.s32.totalorder %v833, %v978
      %vm1001 = vcmp.eq.s32.totalorder %v836, %v974
      %vm1002 = vcmp.eq.s32.totalorder %v836, %v978
      %vm1003 = vcmp.eq.s32.totalorder %v839, %v974
      %vm1004 = vcmp.eq.s32.totalorder %v839, %v978
      %vm1005 = vcmp.eq.s32.totalorder %v842, %v974
      %vm1006 = vcmp.eq.s32.totalorder %v842, %v978
      %vm1007 = vcmp.eq.s32.totalorder %v845, %v974
      %vm1008 = vcmp.eq.s32.totalorder %v845, %v978
      %vm1009 = vcmp.eq.s32.totalorder %v848, %v974
      %vm1010 = vcmp.eq.s32.totalorder %v848, %v978
      %vm1011 = vcmp.eq.s32.totalorder %v851, %v974
      %vm1012 = vcmp.eq.s32.totalorder %v851, %v978
      %vm1013 = vcmp.eq.s32.totalorder %v854, %v974
      %vm1014 = vcmp.eq.s32.totalorder %v854, %v978
      %vm1015 = vcmp.eq.s32.totalorder %v857, %v974
      %vm1016 = vcmp.eq.s32.totalorder %v857, %v978
      %vm1017 = vcmp.eq.s32.totalorder %v860, %v974
      %vm1018 = vcmp.eq.s32.totalorder %v860, %v978
      %vm1019 = vcmp.eq.s32.totalorder %v863, %v974
      %vm1020 = vcmp.eq.s32.totalorder %v863, %v978
      %vm1021 = vcmp.eq.s32.totalorder %v866, %v974
      %vm1022 = vcmp.eq.s32.totalorder %v866, %v978
      %vm1023 = vcmp.eq.s32.totalorder %v869, %v974
      %vm1024 = vcmp.eq.s32.totalorder %v869, %v978
      %vm1025 = vcmp.eq.s32.totalorder %v872, %v974
      %vm1026 = vcmp.eq.s32.totalorder %v872, %v978
      %vm1027 = vcmp.eq.s32.totalorder %v875, %v974
      %vm1028 = vcmp.eq.s32.totalorder %v875, %v978
      %vm1029 = vcmp.eq.s32.totalorder %v878, %v974
      %vm1030 = vcmp.eq.s32.totalorder %v878, %v978
      %vm1031 = vcmp.eq.s32.totalorder %v881, %v974
      %vm1032 = vcmp.eq.s32.totalorder %v881, %v978
      %vm1033 = vcmp.eq.s32.totalorder %v884, %v974
      %vm1034 = vcmp.eq.s32.totalorder %v884, %v978
      %vm1035 = vcmp.eq.s32.totalorder %v887, %v974
      %vm1036 = vcmp.eq.s32.totalorder %v887, %v978
      %vm1037 = vcmp.eq.s32.totalorder %v890, %v974
      %vm1038 = vcmp.eq.s32.totalorder %v890, %v978
      %vm1039 = vcmp.eq.s32.totalorder %v893, %v974
      %vm1040 = vcmp.eq.s32.totalorder %v893, %v978
      %vm1041 = vcmp.eq.s32.totalorder %v896, %v974
      %vm1042 = vcmp.eq.s32.totalorder %v896, %v978
      %v1044 = vlaneseq
      %v1045 = vshrl.u32 %v1044, 7
      %v1046 = vsub.s32 0, %v1045
      %v1047 = vrot.slane %v798, %v1046
      %v1048 = vlaneseq
      %v1049 = vshrl.u32 %v1048, 7
      %v1050 = vsub.s32 1, %v1049
      %v1051 = vrot.slane %v798, %v1050
      %v1054 = vsel %vm979, %v1047, 0.0
      %v1055 = vsel %vm980, %v1051, 0.0
      %v1056 = vsel %vm981, %v1047, 0.0
      %v1057 = vsel %vm982, %v1051, 0.0
      %v1058 = vsel %vm983, %v1047, 0.0
      %v1059 = vsel %vm984, %v1051, 0.0
      %v1060 = vsel %vm985, %v1047, 0.0
      %v1061 = vsel %vm986, %v1051, 0.0
      %v1062 = vsel %vm987, %v1047, 0.0
      %v1063 = vsel %vm988, %v1051, 0.0
      %v1064 = vsel %vm989, %v1047, 0.0
      %v1065 = vsel %vm990, %v1051, 0.0
      %v1066 = vsel %vm991, %v1047, 0.0
      %v1067 = vsel %vm992, %v1051, 0.0
      %v1068 = vsel %vm993, %v1047, 0.0
      %v1069 = vsel %vm994, %v1051, 0.0
      %v1070 = vsel %vm995, %v1047, 0.0
      %v1071 = vsel %vm996, %v1051, 0.0
      %v1072 = vsel %vm997, %v1047, 0.0
      %v1073 = vsel %vm998, %v1051, 0.0
      %v1074 = vsel %vm999, %v1047, 0.0
      %v1075 = vsel %vm1000, %v1051, 0.0
      %v1076 = vsel %vm1001, %v1047, 0.0
      %v1077 = vsel %vm1002, %v1051, 0.0
      %v1078 = vsel %vm1003, %v1047, 0.0
      %v1079 = vsel %vm1004, %v1051, 0.0
      %v1080 = vsel %vm1005, %v1047, 0.0
      %v1081 = vsel %vm1006, %v1051, 0.0
      %v1082 = vsel %vm1007, %v1047, 0.0
      %v1083 = vsel %vm1008, %v1051, 0.0
      %v1084 = vsel %vm1009, %v1047, 0.0
      %v1085 = vsel %vm1010, %v1051, 0.0
      %v1086 = vsel %vm1011, %v1047, 0.0
      %v1087 = vsel %vm1012, %v1051, 0.0
      %v1088 = vsel %vm1013, %v1047, 0.0
      %v1089 = vsel %vm1014, %v1051, 0.0
      %v1090 = vsel %vm1015, %v1047, 0.0
      %v1091 = vsel %vm1016, %v1051, 0.0
      %v1092 = vsel %vm1017, %v1047, 0.0
      %v1093 = vsel %vm1018, %v1051, 0.0
      %v1094 = vsel %vm1019, %v1047, 0.0
      %v1095 = vsel %vm1020, %v1051, 0.0
      %v1096 = vsel %vm1021, %v1047, 0.0
      %v1097 = vsel %vm1022, %v1051, 0.0
      %v1098 = vsel %vm1023, %v1047, 0.0
      %v1099 = vsel %vm1024, %v1051, 0.0
      %v1100 = vsel %vm1025, %v1047, 0.0
      %v1101 = vsel %vm1026, %v1051, 0.0
      %v1102 = vsel %vm1027, %v1047, 0.0
      %v1103 = vsel %vm1028, %v1051, 0.0
      %v1104 = vsel %vm1029, %v1047, 0.0
      %v1105 = vsel %vm1030, %v1051, 0.0
      %v1106 = vsel %vm1031, %v1047, 0.0
      %v1107 = vsel %vm1032, %v1051, 0.0
      %v1108 = vsel %vm1033, %v1047, 0.0
      %v1109 = vsel %vm1034, %v1051, 0.0
      %v1110 = vsel %vm1035, %v1047, 0.0
      %v1111 = vsel %vm1036, %v1051, 0.0
      %v1112 = vsel %vm1037, %v1047, 0.0
      %v1113 = vsel %vm1038, %v1051, 0.0
      %v1114 = vsel %vm1039, %v1047, 0.0
      %v1115 = vsel %vm1040, %v1051, 0.0
      %v1116 = vsel %vm1041, %v1047, 0.0
      %v1117 = vsel %vm1042, %v1051, 0.0
      %v1119 = vlaneseq
      %v1120 = vshrl.u32 %v1119, 7
      %v1121 = vsub.s32 0, %v1120
      %v1122 = vrot.slane %v969, %v1121
      %v1123 = vlaneseq
      %v1124 = vshrl.u32 %v1123, 7
      %v1125 = vsub.s32 1, %v1124
      %v1126 = vrot.slane %v969, %v1125
      %v1129 = vsel %vm905, %v1122, %v1054
      %v1130 = vsel %vm906, %v1126, %v1055
      %v1131 = vsel %vm907, %v1122, %v1056
      %v1132 = vsel %vm908, %v1126, %v1057
      %v1133 = vsel %vm909, %v1122, %v1058
      %v1134 = vsel %vm910, %v1126, %v1059
      %v1135 = vsel %vm911, %v1122, %v1060
      %v1136 = vsel %vm912, %v1126, %v1061
      %v1137 = vsel %vm913, %v1122, %v1062
      %v1138 = vsel %vm914, %v1126, %v1063
      %v1139 = vsel %vm915, %v1122, %v1064
      %v1140 = vsel %vm916, %v1126, %v1065
      %v1141 = vsel %vm917, %v1122, %v1066
      %v1142 = vsel %vm918, %v1126, %v1067
      %v1143 = vsel %vm919, %v1122, %v1068
      %v1144 = vsel %vm920, %v1126, %v1069
      %v1145 = vsel %vm921, %v1122, %v1070
      %v1146 = vsel %vm922, %v1126, %v1071
      %v1147 = vsel %vm923, %v1122, %v1072
      %v1148 = vsel %vm924, %v1126, %v1073
      %v1149 = vsel %vm925, %v1122, %v1074
      %v1150 = vsel %vm926, %v1126, %v1075
      %v1151 = vsel %vm927, %v1122, %v1076
      %v1152 = vsel %vm928, %v1126, %v1077
      %v1153 = vsel %vm929, %v1122, %v1078
      %v1154 = vsel %vm930, %v1126, %v1079
      %v1155 = vsel %vm931, %v1122, %v1080
      %v1156 = vsel %vm932, %v1126, %v1081
      %v1157 = vsel %vm933, %v1122, %v1082
      %v1158 = vsel %vm934, %v1126, %v1083
      %v1159 = vsel %vm935, %v1122, %v1084
      %v1160 = vsel %vm936, %v1126, %v1085
      %v1161 = vsel %vm937, %v1122, %v1086
      %v1162 = vsel %vm938, %v1126, %v1087
      %v1163 = vsel %vm939, %v1122, %v1088
      %v1164 = vsel %vm940, %v1126, %v1089
      %v1165 = vsel %vm941, %v1122, %v1090
      %v1166 = vsel %vm942, %v1126, %v1091
      %v1167 = vsel %vm943, %v1122, %v1092
      %v1168 = vsel %vm944, %v1126, %v1093
      %v1169 = vsel %vm945, %v1122, %v1094
      %v1170 = vsel %vm946, %v1126, %v1095
      %v1171 = vsel %vm947, %v1122, %v1096
      %v1172 = vsel %vm948, %v1126, %v1097
      %v1173 = vsel %vm949, %v1122, %v1098
      %v1174 = vsel %vm950, %v1126, %v1099
      %v1175 = vsel %vm951, %v1122, %v1100
      %v1176 = vsel %vm952, %v1126, %v1101
      %v1177 = vsel %vm953, %v1122, %v1102
      %v1178 = vsel %vm954, %v1126, %v1103
      %v1179 = vsel %vm955, %v1122, %v1104
      %v1180 = vsel %vm956, %v1126, %v1105
      %v1181 = vsel %vm957, %v1122, %v1106
      %v1182 = vsel %vm958, %v1126, %v1107
      %v1183 = vsel %vm959, %v1122, %v1108
      %v1184 = vsel %vm960, %v1126, %v1109
      %v1185 = vsel %vm961, %v1122, %v1110
      %v1186 = vsel %vm962, %v1126, %v1111
      %v1187 = vsel %vm963, %v1122, %v1112
      %v1188 = vsel %vm964, %v1126, %v1113
      %v1189 = vsel %vm965, %v1122, %v1114
      %v1190 = vsel %vm966, %v1126, %v1115
      %v1191 = vsel %vm967, %v1122, %v1116
      %v1192 = vsel %vm968, %v1126, %v1117
      %1193 = vset.pattern.permute.xlu0 0
      %1194 = vperm.xlu0 %1193, %v723
      %v1195 = vpop.permute.xlu0 %1194
      %1196 = vset.pattern.permute.xlu0 0
      %1197 = vperm.xlu0 %1196, %v724
      %v1198 = vpop.permute.xlu0 %1197
      %1199 = vset.pattern.permute.xlu0 0
      %1200 = vperm.xlu0 %1199, %v725
      %v1201 = vpop.permute.xlu0 %1200
      %1202 = vset.pattern.permute.xlu0 0
      %1203 = vperm.xlu0 %1202, %v726
      %v1204 = vpop.permute.xlu0 %1203
      %1205 = vset.pattern.permute.xlu0 0
      %1206 = vperm.xlu0 %1205, %v727
      %v1207 = vpop.permute.xlu0 %1206
      %1208 = vset.pattern.permute.xlu0 0
      %1209 = vperm.xlu0 %1208, %v728
      %v1210 = vpop.permute.xlu0 %1209
      %1211 = vset.pattern.permute.xlu0 0
      %1212 = vperm.xlu0 %1211, %v729
      %v1213 = vpop.permute.xlu0 %1212
      %1214 = vset.pattern.permute.xlu0 0
      %1215 = vperm.xlu0 %1214, %v730
      %v1216 = vpop.permute.xlu0 %1215
      %1217 = vset.pattern.permute.xlu0 0
      %1218 = vperm.xlu0 %1217, %v731
      %v1219 = vpop.permute.xlu0 %1218
      %1220 = vset.pattern.permute.xlu0 0
      %1221 = vperm.xlu0 %1220, %v732
      %v1222 = vpop.permute.xlu0 %1221
      %1223 = vset.pattern.permute.xlu0 0
      %1224 = vperm.xlu0 %1223, %v733
      %v1225 = vpop.permute.xlu0 %1224
      %1226 = vset.pattern.permute.xlu0 0
      %1227 = vperm.xlu0 %1226, %v734
      %v1228 = vpop.permute.xlu0 %1227
      %1229 = vset.pattern.permute.xlu0 0
      %1230 = vperm.xlu0 %1229, %v735
      %v1231 = vpop.permute.xlu0 %1230
      %1232 = vset.pattern.permute.xlu0 0
      %1233 = vperm.xlu0 %1232, %v736
      %v1234 = vpop.permute.xlu0 %1233
      %1235 = vset.pattern.permute.xlu0 0
      %1236 = vperm.xlu0 %1235, %v737
      %v1237 = vpop.permute.xlu0 %1236
      %1238 = vset.pattern.permute.xlu0 0
      %1239 = vperm.xlu0 %1238, %v738
      %v1240 = vpop.permute.xlu0 %1239
      %1241 = vset.pattern.permute.xlu0 0
      %1242 = vperm.xlu0 %1241, %v739
      %v1243 = vpop.permute.xlu0 %1242
      %1244 = vset.pattern.permute.xlu0 0
      %1245 = vperm.xlu0 %1244, %v740
      %v1246 = vpop.permute.xlu0 %1245
      %1247 = vset.pattern.permute.xlu0 0
      %1248 = vperm.xlu0 %1247, %v741
      %v1249 = vpop.permute.xlu0 %1248
      %1250 = vset.pattern.permute.xlu0 0
      %1251 = vperm.xlu0 %1250, %v742
      %v1252 = vpop.permute.xlu0 %1251
      %1253 = vset.pattern.permute.xlu0 0
      %1254 = vperm.xlu0 %1253, %v743
      %v1255 = vpop.permute.xlu0 %1254
      %1256 = vset.pattern.permute.xlu0 0
      %1257 = vperm.xlu0 %1256, %v744
      %v1258 = vpop.permute.xlu0 %1257
      %1259 = vset.pattern.permute.xlu0 0
      %1260 = vperm.xlu0 %1259, %v745
      %v1261 = vpop.permute.xlu0 %1260
      %1262 = vset.pattern.permute.xlu0 0
      %1263 = vperm.xlu0 %1262, %v746
      %v1264 = vpop.permute.xlu0 %1263
      %1265 = vset.pattern.permute.xlu0 0
      %1266 = vperm.xlu0 %1265, %v747
      %v1267 = vpop.permute.xlu0 %1266
      %1268 = vset.pattern.permute.xlu0 0
      %1269 = vperm.xlu0 %1268, %v748
      %v1270 = vpop.permute.xlu0 %1269
      %1271 = vset.pattern.permute.xlu0 0
      %1272 = vperm.xlu0 %1271, %v749
      %v1273 = vpop.permute.xlu0 %1272
      %1274 = vset.pattern.permute.xlu0 0
      %1275 = vperm.xlu0 %1274, %v750
      %v1276 = vpop.permute.xlu0 %1275
      %1277 = vset.pattern.permute.xlu0 0
      %1278 = vperm.xlu0 %1277, %v751
      %v1279 = vpop.permute.xlu0 %1278
      %1280 = vset.pattern.permute.xlu0 0
      %1281 = vperm.xlu0 %1280, %v752
      %v1282 = vpop.permute.xlu0 %1281
      %1283 = vset.pattern.permute.xlu0 0
      %1284 = vperm.xlu0 %1283, %v753
      %v1285 = vpop.permute.xlu0 %1284
      %1286 = vset.pattern.permute.xlu0 0
      %1287 = vperm.xlu0 %1286, %v754
      %v1288 = vpop.permute.xlu0 %1287
      %v1289 = vlaneseq
      %v1290 = vshrl.u32 %v1289, 7
      %v1291 = vsub.s32 0, %v1290
      %v1292 = vrot.slane %v799, %v1291
      %v1293 = vlaneseq
      %v1294 = vshrl.u32 %v1293, 7
      %v1295 = vsub.s32 1, %v1294
      %v1296 = vrot.slane %v799, %v1295
      %vm1297 = vcmp.eq.s32.totalorder %v1195, %v1292
      %vm1298 = vcmp.eq.s32.totalorder %v1195, %v1296
      %vm1299 = vcmp.eq.s32.totalorder %v1198, %v1292
      %vm1300 = vcmp.eq.s32.totalorder %v1198, %v1296
      %vm1301 = vcmp.eq.s32.totalorder %v1201, %v1292
      %vm1302 = vcmp.eq.s32.totalorder %v1201, %v1296
      %vm1303 = vcmp.eq.s32.totalorder %v1204, %v1292
      %vm1304 = vcmp.eq.s32.totalorder %v1204, %v1296
      %vm1305 = vcmp.eq.s32.totalorder %v1207, %v1292
      %vm1306 = vcmp.eq.s32.totalorder %v1207, %v1296
      %vm1307 = vcmp.eq.s32.totalorder %v1210, %v1292
      %vm1308 = vcmp.eq.s32.totalorder %v1210, %v1296
      %vm1309 = vcmp.eq.s32.totalorder %v1213, %v1292
      %vm1310 = vcmp.eq.s32.totalorder %v1213, %v1296
      %vm1311 = vcmp.eq.s32.totalorder %v1216, %v1292
      %vm1312 = vcmp.eq.s32.totalorder %v1216, %v1296
      %vm1313 = vcmp.eq.s32.totalorder %v1219, %v1292
      %vm1314 = vcmp.eq.s32.totalorder %v1219, %v1296
      %vm1315 = vcmp.eq.s32.totalorder %v1222, %v1292
      %vm1316 = vcmp.eq.s32.totalorder %v1222, %v1296
      %vm1317 = vcmp.eq.s32.totalorder %v1225, %v1292
      %vm1318 = vcmp.eq.s32.totalorder %v1225, %v1296
      %vm1319 = vcmp.eq.s32.totalorder %v1228, %v1292
      %vm1320 = vcmp.eq.s32.totalorder %v1228, %v1296
      %vm1321 = vcmp.eq.s32.totalorder %v1231, %v1292
      %vm1322 = vcmp.eq.s32.totalorder %v1231, %v1296
      %vm1323 = vcmp.eq.s32.totalorder %v1234, %v1292
      %vm1324 = vcmp.eq.s32.totalorder %v1234, %v1296
      %vm1325 = vcmp.eq.s32.totalorder %v1237, %v1292
      %vm1326 = vcmp.eq.s32.totalorder %v1237, %v1296
      %vm1327 = vcmp.eq.s32.totalorder %v1240, %v1292
      %vm1328 = vcmp.eq.s32.totalorder %v1240, %v1296
      %vm1329 = vcmp.eq.s32.totalorder %v1243, %v1292
      %vm1330 = vcmp.eq.s32.totalorder %v1243, %v1296
      %vm1331 = vcmp.eq.s32.totalorder %v1246, %v1292
      %vm1332 = vcmp.eq.s32.totalorder %v1246, %v1296
      %vm1333 = vcmp.eq.s32.totalorder %v1249, %v1292
      %vm1334 = vcmp.eq.s32.totalorder %v1249, %v1296
      %vm1335 = vcmp.eq.s32.totalorder %v1252, %v1292
      %vm1336 = vcmp.eq.s32.totalorder %v1252, %v1296
      %vm1337 = vcmp.eq.s32.totalorder %v1255, %v1292
      %vm1338 = vcmp.eq.s32.totalorder %v1255, %v1296
      %vm1339 = vcmp.eq.s32.totalorder %v1258, %v1292
      %vm1340 = vcmp.eq.s32.totalorder %v1258, %v1296
      %vm1341 = vcmp.eq.s32.totalorder %v1261, %v1292
      %vm1342 = vcmp.eq.s32.totalorder %v1261, %v1296
      %vm1343 = vcmp.eq.s32.totalorder %v1264, %v1292
      %vm1344 = vcmp.eq.s32.totalorder %v1264, %v1296
      %vm1345 = vcmp.eq.s32.totalorder %v1267, %v1292
      %vm1346 = vcmp.eq.s32.totalorder %v1267, %v1296
      %vm1347 = vcmp.eq.s32.totalorder %v1270, %v1292
      %vm1348 = vcmp.eq.s32.totalorder %v1270, %v1296
      %vm1349 = vcmp.eq.s32.totalorder %v1273, %v1292
      %vm1350 = vcmp.eq.s32.totalorder %v1273, %v1296
      %vm1351 = vcmp.eq.s32.totalorder %v1276, %v1292
      %vm1352 = vcmp.eq.s32.totalorder %v1276, %v1296
      %vm1353 = vcmp.eq.s32.totalorder %v1279, %v1292
      %vm1354 = vcmp.eq.s32.totalorder %v1279, %v1296
      %vm1355 = vcmp.eq.s32.totalorder %v1282, %v1292
      %vm1356 = vcmp.eq.s32.totalorder %v1282, %v1296
      %vm1357 = vcmp.eq.s32.totalorder %v1285, %v1292
      %vm1358 = vcmp.eq.s32.totalorder %v1285, %v1296
      %vm1359 = vcmp.eq.s32.totalorder %v1288, %v1292
      %vm1360 = vcmp.eq.s32.totalorder %v1288, %v1296
      %v1361 = vsub.f32 1.0, %v797
      %v1362 = vadd.s32 %v799, 1
      %v1363 = vlaneseq
      %v1364 = vshrl.u32 %v1363, 7
      %v1365 = vsub.s32 0, %v1364
      %v1366 = vrot.slane %v1362, %v1365
      %v1367 = vlaneseq
      %v1368 = vshrl.u32 %v1367, 7
      %v1369 = vsub.s32 1, %v1368
      %v1370 = vrot.slane %v1362, %v1369
      %vm1371 = vcmp.eq.s32.totalorder %v1195, %v1366
      %vm1372 = vcmp.eq.s32.totalorder %v1195, %v1370
      %vm1373 = vcmp.eq.s32.totalorder %v1198, %v1366
      %vm1374 = vcmp.eq.s32.totalorder %v1198, %v1370
      %vm1375 = vcmp.eq.s32.totalorder %v1201, %v1366
      %vm1376 = vcmp.eq.s32.totalorder %v1201, %v1370
      %vm1377 = vcmp.eq.s32.totalorder %v1204, %v1366
      %vm1378 = vcmp.eq.s32.totalorder %v1204, %v1370
      %vm1379 = vcmp.eq.s32.totalorder %v1207, %v1366
      %vm1380 = vcmp.eq.s32.totalorder %v1207, %v1370
      %vm1381 = vcmp.eq.s32.totalorder %v1210, %v1366
      %vm1382 = vcmp.eq.s32.totalorder %v1210, %v1370
      %vm1383 = vcmp.eq.s32.totalorder %v1213, %v1366
      %vm1384 = vcmp.eq.s32.totalorder %v1213, %v1370
      %vm1385 = vcmp.eq.s32.totalorder %v1216, %v1366
      %vm1386 = vcmp.eq.s32.totalorder %v1216, %v1370
      %vm1387 = vcmp.eq.s32.totalorder %v1219, %v1366
      %vm1388 = vcmp.eq.s32.totalorder %v1219, %v1370
      %vm1389 = vcmp.eq.s32.totalorder %v1222, %v1366
      %vm1390 = vcmp.eq.s32.totalorder %v1222, %v1370
      %vm1391 = vcmp.eq.s32.totalorder %v1225, %v1366
      %vm1392 = vcmp.eq.s32.totalorder %v1225, %v1370
      %vm1393 = vcmp.eq.s32.totalorder %v1228, %v1366
      %vm1394 = vcmp.eq.s32.totalorder %v1228, %v1370
      %vm1395 = vcmp.eq.s32.totalorder %v1231, %v1366
      %vm1396 = vcmp.eq.s32.totalorder %v1231, %v1370
      %vm1397 = vcmp.eq.s32.totalorder %v1234, %v1366
      %vm1398 = vcmp.eq.s32.totalorder %v1234, %v1370
      %vm1399 = vcmp.eq.s32.totalorder %v1237, %v1366
      %vm1400 = vcmp.eq.s32.totalorder %v1237, %v1370
      %vm1401 = vcmp.eq.s32.totalorder %v1240, %v1366
      %vm1402 = vcmp.eq.s32.totalorder %v1240, %v1370
      %vm1403 = vcmp.eq.s32.totalorder %v1243, %v1366
      %vm1404 = vcmp.eq.s32.totalorder %v1243, %v1370
      %vm1405 = vcmp.eq.s32.totalorder %v1246, %v1366
      %vm1406 = vcmp.eq.s32.totalorder %v1246, %v1370
      %vm1407 = vcmp.eq.s32.totalorder %v1249, %v1366
      %vm1408 = vcmp.eq.s32.totalorder %v1249, %v1370
      %vm1409 = vcmp.eq.s32.totalorder %v1252, %v1366
      %vm1410 = vcmp.eq.s32.totalorder %v1252, %v1370
      %vm1411 = vcmp.eq.s32.totalorder %v1255, %v1366
      %vm1412 = vcmp.eq.s32.totalorder %v1255, %v1370
      %vm1413 = vcmp.eq.s32.totalorder %v1258, %v1366
      %vm1414 = vcmp.eq.s32.totalorder %v1258, %v1370
      %vm1415 = vcmp.eq.s32.totalorder %v1261, %v1366
      %vm1416 = vcmp.eq.s32.totalorder %v1261, %v1370
      %vm1417 = vcmp.eq.s32.totalorder %v1264, %v1366
      %vm1418 = vcmp.eq.s32.totalorder %v1264, %v1370
      %vm1419 = vcmp.eq.s32.totalorder %v1267, %v1366
      %vm1420 = vcmp.eq.s32.totalorder %v1267, %v1370
      %vm1421 = vcmp.eq.s32.totalorder %v1270, %v1366
      %vm1422 = vcmp.eq.s32.totalorder %v1270, %v1370
      %vm1423 = vcmp.eq.s32.totalorder %v1273, %v1366
      %vm1424 = vcmp.eq.s32.totalorder %v1273, %v1370
      %vm1425 = vcmp.eq.s32.totalorder %v1276, %v1366
      %vm1426 = vcmp.eq.s32.totalorder %v1276, %v1370
      %vm1427 = vcmp.eq.s32.totalorder %v1279, %v1366
      %vm1428 = vcmp.eq.s32.totalorder %v1279, %v1370
      %vm1429 = vcmp.eq.s32.totalorder %v1282, %v1366
      %vm1430 = vcmp.eq.s32.totalorder %v1282, %v1370
      %vm1431 = vcmp.eq.s32.totalorder %v1285, %v1366
      %vm1432 = vcmp.eq.s32.totalorder %v1285, %v1370
      %vm1433 = vcmp.eq.s32.totalorder %v1288, %v1366
      %vm1434 = vcmp.eq.s32.totalorder %v1288, %v1370
      %v1436 = vlaneseq
      %v1437 = vshrl.u32 %v1436, 7
      %v1438 = vsub.s32 0, %v1437
      %v1439 = vrot.slane %v797, %v1438
      %v1440 = vlaneseq
      %v1441 = vshrl.u32 %v1440, 7
      %v1442 = vsub.s32 1, %v1441
      %v1443 = vrot.slane %v797, %v1442
      %v1446 = vsel %vm1371, %v1439, 0.0
      %v1447 = vsel %vm1372, %v1443, 0.0
      %v1448 = vsel %vm1373, %v1439, 0.0
      %v1449 = vsel %vm1374, %v1443, 0.0
      %v1450 = vsel %vm1375, %v1439, 0.0
      %v1451 = vsel %vm1376, %v1443, 0.0
      %v1452 = vsel %vm1377, %v1439, 0.0
      %v1453 = vsel %vm1378, %v1443, 0.0
      %v1454 = vsel %vm1379, %v1439, 0.0
      %v1455 = vsel %vm1380, %v1443, 0.0
      %v1456 = vsel %vm1381, %v1439, 0.0
      %v1457 = vsel %vm1382, %v1443, 0.0
      %v1458 = vsel %vm1383, %v1439, 0.0
      %v1459 = vsel %vm1384, %v1443, 0.0
      %v1460 = vsel %vm1385, %v1439, 0.0
      %v1461 = vsel %vm1386, %v1443, 0.0
      %v1462 = vsel %vm1387, %v1439, 0.0
      %v1463 = vsel %vm1388, %v1443, 0.0
      %v1464 = vsel %vm1389, %v1439, 0.0
      %v1465 = vsel %vm1390, %v1443, 0.0
      %v1466 = vsel %vm1391, %v1439, 0.0
      %v1467 = vsel %vm1392, %v1443, 0.0
      %v1468 = vsel %vm1393, %v1439, 0.0
      %v1469 = vsel %vm1394, %v1443, 0.0
      %v1470 = vsel %vm1395, %v1439, 0.0
      %v1471 = vsel %vm1396, %v1443, 0.0
      %v1472 = vsel %vm1397, %v1439, 0.0
      %v1473 = vsel %vm1398, %v1443, 0.0
      %v1474 = vsel %vm1399, %v1439, 0.0
      %v1475 = vsel %vm1400, %v1443, 0.0
      %v1476 = vsel %vm1401, %v1439, 0.0
      %v1477 = vsel %vm1402, %v1443, 0.0
      %v1478 = vsel %vm1403, %v1439, 0.0
      %v1479 = vsel %vm1404, %v1443, 0.0
      %v1480 = vsel %vm1405, %v1439, 0.0
      %v1481 = vsel %vm1406, %v1443, 0.0
      %v1482 = vsel %vm1407, %v1439, 0.0
      %v1483 = vsel %vm1408, %v1443, 0.0
      %v1484 = vsel %vm1409, %v1439, 0.0
      %v1485 = vsel %vm1410, %v1443, 0.0
      %v1486 = vsel %vm1411, %v1439, 0.0
      %v1487 = vsel %vm1412, %v1443, 0.0
      %v1488 = vsel %vm1413, %v1439, 0.0
      %v1489 = vsel %vm1414, %v1443, 0.0
      %v1490 = vsel %vm1415, %v1439, 0.0
      %v1491 = vsel %vm1416, %v1443, 0.0
      %v1492 = vsel %vm1417, %v1439, 0.0
      %v1493 = vsel %vm1418, %v1443, 0.0
      %v1494 = vsel %vm1419, %v1439, 0.0
      %v1495 = vsel %vm1420, %v1443, 0.0
      %v1496 = vsel %vm1421, %v1439, 0.0
      %v1497 = vsel %vm1422, %v1443, 0.0
      %v1498 = vsel %vm1423, %v1439, 0.0
      %v1499 = vsel %vm1424, %v1443, 0.0
      %v1500 = vsel %vm1425, %v1439, 0.0
      %v1501 = vsel %vm1426, %v1443, 0.0
      %v1502 = vsel %vm1427, %v1439, 0.0
      %v1503 = vsel %vm1428, %v1443, 0.0
      %v1504 = vsel %vm1429, %v1439, 0.0
      %v1505 = vsel %vm1430, %v1443, 0.0
      %v1506 = vsel %vm1431, %v1439, 0.0
      %v1507 = vsel %vm1432, %v1443, 0.0
      %v1508 = vsel %vm1433, %v1439, 0.0
      %v1509 = vsel %vm1434, %v1443, 0.0
      %v1511 = vlaneseq
      %v1512 = vshrl.u32 %v1511, 7
      %v1513 = vsub.s32 0, %v1512
      %v1514 = vrot.slane %v1361, %v1513
      %v1515 = vlaneseq
      %v1516 = vshrl.u32 %v1515, 7
      %v1517 = vsub.s32 1, %v1516
      %v1518 = vrot.slane %v1361, %v1517
      %v1521 = vsel %vm1297, %v1514, %v1446
      %v1522 = vsel %vm1298, %v1518, %v1447
      %v1523 = vsel %vm1299, %v1514, %v1448
      %v1524 = vsel %vm1300, %v1518, %v1449
      %v1525 = vsel %vm1301, %v1514, %v1450
      %v1526 = vsel %vm1302, %v1518, %v1451
      %v1527 = vsel %vm1303, %v1514, %v1452
      %v1528 = vsel %vm1304, %v1518, %v1453
      %v1529 = vsel %vm1305, %v1514, %v1454
      %v1530 = vsel %vm1306, %v1518, %v1455
      %v1531 = vsel %vm1307, %v1514, %v1456
      %v1532 = vsel %vm1308, %v1518, %v1457
      %v1533 = vsel %vm1309, %v1514, %v1458
      %v1534 = vsel %vm1310, %v1518, %v1459
      %v1535 = vsel %vm1311, %v1514, %v1460
      %v1536 = vsel %vm1312, %v1518, %v1461
      %v1537 = vsel %vm1313, %v1514, %v1462
      %v1538 = vsel %vm1314, %v1518, %v1463
      %v1539 = vsel %vm1315, %v1514, %v1464
      %v1540 = vsel %vm1316, %v1518, %v1465
      %v1541 = vsel %vm1317, %v1514, %v1466
      %v1542 = vsel %vm1318, %v1518, %v1467
      %v1543 = vsel %vm1319, %v1514, %v1468
      %v1544 = vsel %vm1320, %v1518, %v1469
      %v1545 = vsel %vm1321, %v1514, %v1470
      %v1546 = vsel %vm1322, %v1518, %v1471
      %v1547 = vsel %vm1323, %v1514, %v1472
      %v1548 = vsel %vm1324, %v1518, %v1473
      %v1549 = vsel %vm1325, %v1514, %v1474
      %v1550 = vsel %vm1326, %v1518, %v1475
      %v1551 = vsel %vm1327, %v1514, %v1476
      %v1552 = vsel %vm1328, %v1518, %v1477
      %v1553 = vsel %vm1329, %v1514, %v1478
      %v1554 = vsel %vm1330, %v1518, %v1479
      %v1555 = vsel %vm1331, %v1514, %v1480
      %v1556 = vsel %vm1332, %v1518, %v1481
      %v1557 = vsel %vm1333, %v1514, %v1482
      %v1558 = vsel %vm1334, %v1518, %v1483
      %v1559 = vsel %vm1335, %v1514, %v1484
      %v1560 = vsel %vm1336, %v1518, %v1485
      %v1561 = vsel %vm1337, %v1514, %v1486
      %v1562 = vsel %vm1338, %v1518, %v1487
      %v1563 = vsel %vm1339, %v1514, %v1488
      %v1564 = vsel %vm1340, %v1518, %v1489
      %v1565 = vsel %vm1341, %v1514, %v1490
      %v1566 = vsel %vm1342, %v1518, %v1491
      %v1567 = vsel %vm1343, %v1514, %v1492
      %v1568 = vsel %vm1344, %v1518, %v1493
      %v1569 = vsel %vm1345, %v1514, %v1494
      %v1570 = vsel %vm1346, %v1518, %v1495
      %v1571 = vsel %vm1347, %v1514, %v1496
      %v1572 = vsel %vm1348, %v1518, %v1497
      %v1573 = vsel %vm1349, %v1514, %v1498
      %v1574 = vsel %vm1350, %v1518, %v1499
      %v1575 = vsel %vm1351, %v1514, %v1500
      %v1576 = vsel %vm1352, %v1518, %v1501
      %v1577 = vsel %vm1353, %v1514, %v1502
      %v1578 = vsel %vm1354, %v1518, %v1503
      %v1579 = vsel %vm1355, %v1514, %v1504
      %v1580 = vsel %vm1356, %v1518, %v1505
      %v1581 = vsel %vm1357, %v1514, %v1506
      %v1582 = vsel %vm1358, %v1518, %v1507
      %v1583 = vsel %vm1359, %v1514, %v1508
      %v1584 = vsel %vm1360, %v1518, %v1509
      %v1585 = vmul.f32 %v1129, %v1521
      %v1586 = vmul.f32 %v1130, %v1522
      %v1587 = vmul.f32 %v1131, %v1523
      %v1588 = vmul.f32 %v1132, %v1524
      %v1589 = vmul.f32 %v1133, %v1525
      %v1590 = vmul.f32 %v1134, %v1526
      %v1591 = vmul.f32 %v1135, %v1527
      %v1592 = vmul.f32 %v1136, %v1528
      %v1593 = vmul.f32 %v1137, %v1529
      %v1594 = vmul.f32 %v1138, %v1530
      %v1595 = vmul.f32 %v1139, %v1531
      %v1596 = vmul.f32 %v1140, %v1532
      %v1597 = vmul.f32 %v1141, %v1533
      %v1598 = vmul.f32 %v1142, %v1534
      %v1599 = vmul.f32 %v1143, %v1535
      %v1600 = vmul.f32 %v1144, %v1536
      %v1601 = vmul.f32 %v1145, %v1537
      %v1602 = vmul.f32 %v1146, %v1538
      %v1603 = vmul.f32 %v1147, %v1539
      %v1604 = vmul.f32 %v1148, %v1540
      %v1605 = vmul.f32 %v1149, %v1541
      %v1606 = vmul.f32 %v1150, %v1542
      %v1607 = vmul.f32 %v1151, %v1543
      %v1608 = vmul.f32 %v1152, %v1544
      %v1609 = vmul.f32 %v1153, %v1545
      %v1610 = vmul.f32 %v1154, %v1546
      %v1611 = vmul.f32 %v1155, %v1547
      %v1612 = vmul.f32 %v1156, %v1548
      %v1613 = vmul.f32 %v1157, %v1549
      %v1614 = vmul.f32 %v1158, %v1550
      %v1615 = vmul.f32 %v1159, %v1551
      %v1616 = vmul.f32 %v1160, %v1552
      %v1617 = vmul.f32 %v1161, %v1553
      %v1618 = vmul.f32 %v1162, %v1554
      %v1619 = vmul.f32 %v1163, %v1555
      %v1620 = vmul.f32 %v1164, %v1556
      %v1621 = vmul.f32 %v1165, %v1557
      %v1622 = vmul.f32 %v1166, %v1558
      %v1623 = vmul.f32 %v1167, %v1559
      %v1624 = vmul.f32 %v1168, %v1560
      %v1625 = vmul.f32 %v1169, %v1561
      %v1626 = vmul.f32 %v1170, %v1562
      %v1627 = vmul.f32 %v1171, %v1563
      %v1628 = vmul.f32 %v1172, %v1564
      %v1629 = vmul.f32 %v1173, %v1565
      %v1630 = vmul.f32 %v1174, %v1566
      %v1631 = vmul.f32 %v1175, %v1567
      %v1632 = vmul.f32 %v1176, %v1568
      %v1633 = vmul.f32 %v1177, %v1569
      %v1634 = vmul.f32 %v1178, %v1570
      %v1635 = vmul.f32 %v1179, %v1571
      %v1636 = vmul.f32 %v1180, %v1572
      %v1637 = vmul.f32 %v1181, %v1573
      %v1638 = vmul.f32 %v1182, %v1574
      %v1639 = vmul.f32 %v1183, %v1575
      %v1640 = vmul.f32 %v1184, %v1576
      %v1641 = vmul.f32 %v1185, %v1577
      %v1642 = vmul.f32 %v1186, %v1578
      %v1643 = vmul.f32 %v1187, %v1579
      %v1644 = vmul.f32 %v1188, %v1580
      %v1645 = vmul.f32 %v1189, %v1581
      %v1646 = vmul.f32 %v1190, %v1582
      %v1647 = vmul.f32 %v1191, %v1583
      %v1648 = vmul.f32 %v1192, %v1584
      %v1649 = vpack.c.bf16 %v1587, %v1585
      %v1650 = vpack.c.bf16 %v1588, %v1586
      %v1651 = vpack.c.bf16 %v1591, %v1589
      %v1652 = vpack.c.bf16 %v1592, %v1590
      %v1653 = vpack.c.bf16 %v1595, %v1593
      %v1654 = vpack.c.bf16 %v1596, %v1594
      %v1655 = vpack.c.bf16 %v1599, %v1597
      %v1656 = vpack.c.bf16 %v1600, %v1598
      %v1657 = vpack.c.bf16 %v1603, %v1601
      %v1658 = vpack.c.bf16 %v1604, %v1602
      %v1659 = vpack.c.bf16 %v1607, %v1605
      %v1660 = vpack.c.bf16 %v1608, %v1606
      %v1661 = vpack.c.bf16 %v1611, %v1609
      %v1662 = vpack.c.bf16 %v1612, %v1610
      %v1663 = vpack.c.bf16 %v1615, %v1613
      %v1664 = vpack.c.bf16 %v1616, %v1614
      %v1665 = vpack.c.bf16 %v1619, %v1617
      %v1666 = vpack.c.bf16 %v1620, %v1618
      %v1667 = vpack.c.bf16 %v1623, %v1621
      %v1668 = vpack.c.bf16 %v1624, %v1622
      %v1669 = vpack.c.bf16 %v1627, %v1625
      %v1670 = vpack.c.bf16 %v1628, %v1626
      %v1671 = vpack.c.bf16 %v1631, %v1629
      %v1672 = vpack.c.bf16 %v1632, %v1630
      %v1673 = vpack.c.bf16 %v1635, %v1633
      %v1674 = vpack.c.bf16 %v1636, %v1634
      %v1675 = vpack.c.bf16 %v1639, %v1637
      %v1676 = vpack.c.bf16 %v1640, %v1638
      %v1677 = vpack.c.bf16 %v1643, %v1641
      %v1678 = vpack.c.bf16 %v1644, %v1642
      %v1679 = vpack.c.bf16 %v1647, %v1645
      %v1680 = vpack.c.bf16 %v1648, %v1646
      %v1681 = vcombine.high %v764, %v764
      %v1683 = vunpack.c.l.s4 1966171168
      %v1684 = vunpack.c.0.s8 %v1683
      %v1685 = vlaneseq
      %v1686 = vshrl.u32 %v1685, 7
      %v1687 = vsub.s32 %v1684, %v1686
      %v1688 = vrot.slane %v1681, %v1687
      %v1690 = vadd.f32 %v720, %v1688
      %v1691 = vmax.f32 %v1690, 0.0
      %v1692 = vmin.f32 %v1691, 15.0
      %v1693 = vcombine.high %v783, %v783
      %v1695 = vunpack.c.l.s4 1966171168
      %v1696 = vunpack.c.0.s8 %v1695
      %v1697 = vlaneseq
      %v1698 = vshrl.u32 %v1697, 7
      %v1699 = vsub.s32 %v1696, %v1698
      %v1700 = vrot.slane %v1693, %v1699
      %v1702 = vadd.f32 %v722, %v1700
      %v1703 = vmax.f32 %v1702, 0.0
      %v1704 = vmin.f32 %v1703, 15.0
      %v1705 = vfloor.f32 %v1692
      %v1706 = vfloor.f32 %v1704
      %v1707 = vsub.f32 %v1692, %v1705
      %v1708 = vsub.f32 %v1704, %v1706
      %v1709 = vcvt.f32.s32.to.zero.pseudo %v1705
      %v1710 = vcvt.f32.s32.to.zero.pseudo %v1706
      %v1711 = vlaneseq
      %v1712 = vshrl.u32 %v1711, 7
      %v1713 = vsub.s32 0, %v1712
      %v1714 = vrot.slane %v1710, %v1713
      %v1715 = vlaneseq
      %v1716 = vshrl.u32 %v1715, 7
      %v1717 = vsub.s32 1, %v1716
      %v1718 = vrot.slane %v1710, %v1717
      %vm1719 = vcmp.eq.s32.totalorder %v803, %v1714
      %vm1720 = vcmp.eq.s32.totalorder %v803, %v1718
      %vm1721 = vcmp.eq.s32.totalorder %v806, %v1714
      %vm1722 = vcmp.eq.s32.totalorder %v806, %v1718
      %vm1723 = vcmp.eq.s32.totalorder %v809, %v1714
      %vm1724 = vcmp.eq.s32.totalorder %v809, %v1718
      %vm1725 = vcmp.eq.s32.totalorder %v812, %v1714
      %vm1726 = vcmp.eq.s32.totalorder %v812, %v1718
      %vm1727 = vcmp.eq.s32.totalorder %v815, %v1714
      %vm1728 = vcmp.eq.s32.totalorder %v815, %v1718
      %vm1729 = vcmp.eq.s32.totalorder %v818, %v1714
      %vm1730 = vcmp.eq.s32.totalorder %v818, %v1718
      %vm1731 = vcmp.eq.s32.totalorder %v821, %v1714
      %vm1732 = vcmp.eq.s32.totalorder %v821, %v1718
      %vm1733 = vcmp.eq.s32.totalorder %v824, %v1714
      %vm1734 = vcmp.eq.s32.totalorder %v824, %v1718
      %vm1735 = vcmp.eq.s32.totalorder %v827, %v1714
      %vm1736 = vcmp.eq.s32.totalorder %v827, %v1718
      %vm1737 = vcmp.eq.s32.totalorder %v830, %v1714
      %vm1738 = vcmp.eq.s32.totalorder %v830, %v1718
      %vm1739 = vcmp.eq.s32.totalorder %v833, %v1714
      %vm1740 = vcmp.eq.s32.totalorder %v833, %v1718
      %vm1741 = vcmp.eq.s32.totalorder %v836, %v1714
      %vm1742 = vcmp.eq.s32.totalorder %v836, %v1718
      %vm1743 = vcmp.eq.s32.totalorder %v839, %v1714
      %vm1744 = vcmp.eq.s32.totalorder %v839, %v1718
      %vm1745 = vcmp.eq.s32.totalorder %v842, %v1714
      %vm1746 = vcmp.eq.s32.totalorder %v842, %v1718
      %vm1747 = vcmp.eq.s32.totalorder %v845, %v1714
      %vm1748 = vcmp.eq.s32.totalorder %v845, %v1718
      %vm1749 = vcmp.eq.s32.totalorder %v848, %v1714
      %vm1750 = vcmp.eq.s32.totalorder %v848, %v1718
      %vm1751 = vcmp.eq.s32.totalorder %v851, %v1714
      %vm1752 = vcmp.eq.s32.totalorder %v851, %v1718
      %vm1753 = vcmp.eq.s32.totalorder %v854, %v1714
      %vm1754 = vcmp.eq.s32.totalorder %v854, %v1718
      %vm1755 = vcmp.eq.s32.totalorder %v857, %v1714
      %vm1756 = vcmp.eq.s32.totalorder %v857, %v1718
      %vm1757 = vcmp.eq.s32.totalorder %v860, %v1714
      %vm1758 = vcmp.eq.s32.totalorder %v860, %v1718
      %vm1759 = vcmp.eq.s32.totalorder %v863, %v1714
      %vm1760 = vcmp.eq.s32.totalorder %v863, %v1718
      %vm1761 = vcmp.eq.s32.totalorder %v866, %v1714
      %vm1762 = vcmp.eq.s32.totalorder %v866, %v1718
      %vm1763 = vcmp.eq.s32.totalorder %v869, %v1714
      %vm1764 = vcmp.eq.s32.totalorder %v869, %v1718
      %vm1765 = vcmp.eq.s32.totalorder %v872, %v1714
      %vm1766 = vcmp.eq.s32.totalorder %v872, %v1718
      %vm1767 = vcmp.eq.s32.totalorder %v875, %v1714
      %vm1768 = vcmp.eq.s32.totalorder %v875, %v1718
      %vm1769 = vcmp.eq.s32.totalorder %v878, %v1714
      %vm1770 = vcmp.eq.s32.totalorder %v878, %v1718
      %vm1771 = vcmp.eq.s32.totalorder %v881, %v1714
      %vm1772 = vcmp.eq.s32.totalorder %v881, %v1718
      %vm1773 = vcmp.eq.s32.totalorder %v884, %v1714
      %vm1774 = vcmp.eq.s32.totalorder %v884, %v1718
      %vm1775 = vcmp.eq.s32.totalorder %v887, %v1714
      %vm1776 = vcmp.eq.s32.totalorder %v887, %v1718
      %vm1777 = vcmp.eq.s32.totalorder %v890, %v1714
      %vm1778 = vcmp.eq.s32.totalorder %v890, %v1718
      %vm1779 = vcmp.eq.s32.totalorder %v893, %v1714
      %vm1780 = vcmp.eq.s32.totalorder %v893, %v1718
      %vm1781 = vcmp.eq.s32.totalorder %v896, %v1714
      %vm1782 = vcmp.eq.s32.totalorder %v896, %v1718
      %v1783 = vsub.f32 1.0, %v1708
      %v1784 = vadd.s32 %v1710, 1
      %v1785 = vlaneseq
      %v1786 = vshrl.u32 %v1785, 7
      %v1787 = vsub.s32 0, %v1786
      %v1788 = vrot.slane %v1784, %v1787
      %v1789 = vlaneseq
      %v1790 = vshrl.u32 %v1789, 7
      %v1791 = vsub.s32 1, %v1790
      %v1792 = vrot.slane %v1784, %v1791
      %vm1793 = vcmp.eq.s32.totalorder %v803, %v1788
      %vm1794 = vcmp.eq.s32.totalorder %v803, %v1792
      %vm1795 = vcmp.eq.s32.totalorder %v806, %v1788
      %vm1796 = vcmp.eq.s32.totalorder %v806, %v1792
      %vm1797 = vcmp.eq.s32.totalorder %v809, %v1788
      %vm1798 = vcmp.eq.s32.totalorder %v809, %v1792
      %vm1799 = vcmp.eq.s32.totalorder %v812, %v1788
      %vm1800 = vcmp.eq.s32.totalorder %v812, %v1792
      %vm1801 = vcmp.eq.s32.totalorder %v815, %v1788
      %vm1802 = vcmp.eq.s32.totalorder %v815, %v1792
      %vm1803 = vcmp.eq.s32.totalorder %v818, %v1788
      %vm1804 = vcmp.eq.s32.totalorder %v818, %v1792
      %vm1805 = vcmp.eq.s32.totalorder %v821, %v1788
      %vm1806 = vcmp.eq.s32.totalorder %v821, %v1792
      %vm1807 = vcmp.eq.s32.totalorder %v824, %v1788
      %vm1808 = vcmp.eq.s32.totalorder %v824, %v1792
      %vm1809 = vcmp.eq.s32.totalorder %v827, %v1788
      %vm1810 = vcmp.eq.s32.totalorder %v827, %v1792
      %vm1811 = vcmp.eq.s32.totalorder %v830, %v1788
      %vm1812 = vcmp.eq.s32.totalorder %v830, %v1792
      %vm1813 = vcmp.eq.s32.totalorder %v833, %v1788
      %vm1814 = vcmp.eq.s32.totalorder %v833, %v1792
      %vm1815 = vcmp.eq.s32.totalorder %v836, %v1788
      %vm1816 = vcmp.eq.s32.totalorder %v836, %v1792
      %vm1817 = vcmp.eq.s32.totalorder %v839, %v1788
      %vm1818 = vcmp.eq.s32.totalorder %v839, %v1792
      %vm1819 = vcmp.eq.s32.totalorder %v842, %v1788
      %vm1820 = vcmp.eq.s32.totalorder %v842, %v1792
      %vm1821 = vcmp.eq.s32.totalorder %v845, %v1788
      %vm1822 = vcmp.eq.s32.totalorder %v845, %v1792
      %vm1823 = vcmp.eq.s32.totalorder %v848, %v1788
      %vm1824 = vcmp.eq.s32.totalorder %v848, %v1792
      %vm1825 = vcmp.eq.s32.totalorder %v851, %v1788
      %vm1826 = vcmp.eq.s32.totalorder %v851, %v1792
      %vm1827 = vcmp.eq.s32.totalorder %v854, %v1788
      %vm1828 = vcmp.eq.s32.totalorder %v854, %v1792
      %vm1829 = vcmp.eq.s32.totalorder %v857, %v1788
      %vm1830 = vcmp.eq.s32.totalorder %v857, %v1792
      %vm1831 = vcmp.eq.s32.totalorder %v860, %v1788
      %vm1832 = vcmp.eq.s32.totalorder %v860, %v1792
      %vm1833 = vcmp.eq.s32.totalorder %v863, %v1788
      %vm1834 = vcmp.eq.s32.totalorder %v863, %v1792
      %vm1835 = vcmp.eq.s32.totalorder %v866, %v1788
      %vm1836 = vcmp.eq.s32.totalorder %v866, %v1792
      %vm1837 = vcmp.eq.s32.totalorder %v869, %v1788
      %vm1838 = vcmp.eq.s32.totalorder %v869, %v1792
      %vm1839 = vcmp.eq.s32.totalorder %v872, %v1788
      %vm1840 = vcmp.eq.s32.totalorder %v872, %v1792
      %vm1841 = vcmp.eq.s32.totalorder %v875, %v1788
      %vm1842 = vcmp.eq.s32.totalorder %v875, %v1792
      %vm1843 = vcmp.eq.s32.totalorder %v878, %v1788
      %vm1844 = vcmp.eq.s32.totalorder %v878, %v1792
      %vm1845 = vcmp.eq.s32.totalorder %v881, %v1788
      %vm1846 = vcmp.eq.s32.totalorder %v881, %v1792
      %vm1847 = vcmp.eq.s32.totalorder %v884, %v1788
      %vm1848 = vcmp.eq.s32.totalorder %v884, %v1792
      %vm1849 = vcmp.eq.s32.totalorder %v887, %v1788
      %vm1850 = vcmp.eq.s32.totalorder %v887, %v1792
      %vm1851 = vcmp.eq.s32.totalorder %v890, %v1788
      %vm1852 = vcmp.eq.s32.totalorder %v890, %v1792
      %vm1853 = vcmp.eq.s32.totalorder %v893, %v1788
      %vm1854 = vcmp.eq.s32.totalorder %v893, %v1792
      %vm1855 = vcmp.eq.s32.totalorder %v896, %v1788
      %vm1856 = vcmp.eq.s32.totalorder %v896, %v1792
      %v1858 = vlaneseq
      %v1859 = vshrl.u32 %v1858, 7
      %v1860 = vsub.s32 0, %v1859
      %v1861 = vrot.slane %v1708, %v1860
      %v1862 = vlaneseq
      %v1863 = vshrl.u32 %v1862, 7
      %v1864 = vsub.s32 1, %v1863
      %v1865 = vrot.slane %v1708, %v1864
      %v1868 = vsel %vm1793, %v1861, 0.0
      %v1869 = vsel %vm1794, %v1865, 0.0
      %v1870 = vsel %vm1795, %v1861, 0.0
      %v1871 = vsel %vm1796, %v1865, 0.0
      %v1872 = vsel %vm1797, %v1861, 0.0
      %v1873 = vsel %vm1798, %v1865, 0.0
      %v1874 = vsel %vm1799, %v1861, 0.0
      %v1875 = vsel %vm1800, %v1865, 0.0
      %v1876 = vsel %vm1801, %v1861, 0.0
      %v1877 = vsel %vm1802, %v1865, 0.0
      %v1878 = vsel %vm1803, %v1861, 0.0
      %v1879 = vsel %vm1804, %v1865, 0.0
      %v1880 = vsel %vm1805, %v1861, 0.0
      %v1881 = vsel %vm1806, %v1865, 0.0
      %v1882 = vsel %vm1807, %v1861, 0.0
      %v1883 = vsel %vm1808, %v1865, 0.0
      %v1884 = vsel %vm1809, %v1861, 0.0
      %v1885 = vsel %vm1810, %v1865, 0.0
      %v1886 = vsel %vm1811, %v1861, 0.0
      %v1887 = vsel %vm1812, %v1865, 0.0
      %v1888 = vsel %vm1813, %v1861, 0.0
      %v1889 = vsel %vm1814, %v1865, 0.0
      %v1890 = vsel %vm1815, %v1861, 0.0
      %v1891 = vsel %vm1816, %v1865, 0.0
      %v1892 = vsel %vm1817, %v1861, 0.0
      %v1893 = vsel %vm1818, %v1865, 0.0
      %v1894 = vsel %vm1819, %v1861, 0.0
      %v1895 = vsel %vm1820, %v1865, 0.0
      %v1896 = vsel %vm1821, %v1861, 0.0
      %v1897 = vsel %vm1822, %v1865, 0.0
      %v1898 = vsel %vm1823, %v1861, 0.0
      %v1899 = vsel %vm1824, %v1865, 0.0
      %v1900 = vsel %vm1825, %v1861, 0.0
      %v1901 = vsel %vm1826, %v1865, 0.0
      %v1902 = vsel %vm1827, %v1861, 0.0
      %v1903 = vsel %vm1828, %v1865, 0.0
      %v1904 = vsel %vm1829, %v1861, 0.0
      %v1905 = vsel %vm1830, %v1865, 0.0
      %v1906 = vsel %vm1831, %v1861, 0.0
      %v1907 = vsel %vm1832, %v1865, 0.0
      %v1908 = vsel %vm1833, %v1861, 0.0
      %v1909 = vsel %vm1834, %v1865, 0.0
      %v1910 = vsel %vm1835, %v1861, 0.0
      %v1911 = vsel %vm1836, %v1865, 0.0
      %v1912 = vsel %vm1837, %v1861, 0.0
      %v1913 = vsel %vm1838, %v1865, 0.0
      %v1914 = vsel %vm1839, %v1861, 0.0
      %v1915 = vsel %vm1840, %v1865, 0.0
      %v1916 = vsel %vm1841, %v1861, 0.0
      %v1917 = vsel %vm1842, %v1865, 0.0
      %v1918 = vsel %vm1843, %v1861, 0.0
      %v1919 = vsel %vm1844, %v1865, 0.0
      %v1920 = vsel %vm1845, %v1861, 0.0
      %v1921 = vsel %vm1846, %v1865, 0.0
      %v1922 = vsel %vm1847, %v1861, 0.0
      %v1923 = vsel %vm1848, %v1865, 0.0
      %v1924 = vsel %vm1849, %v1861, 0.0
      %v1925 = vsel %vm1850, %v1865, 0.0
      %v1926 = vsel %vm1851, %v1861, 0.0
      %v1927 = vsel %vm1852, %v1865, 0.0
      %v1928 = vsel %vm1853, %v1861, 0.0
      %v1929 = vsel %vm1854, %v1865, 0.0
      %v1930 = vsel %vm1855, %v1861, 0.0
      %v1931 = vsel %vm1856, %v1865, 0.0
      %v1933 = vlaneseq
      %v1934 = vshrl.u32 %v1933, 7
      %v1935 = vsub.s32 0, %v1934
      %v1936 = vrot.slane %v1783, %v1935
      %v1937 = vlaneseq
      %v1938 = vshrl.u32 %v1937, 7
      %v1939 = vsub.s32 1, %v1938
      %v1940 = vrot.slane %v1783, %v1939
      %v1943 = vsel %vm1719, %v1936, %v1868
      %v1944 = vsel %vm1720, %v1940, %v1869
      %v1945 = vsel %vm1721, %v1936, %v1870
      %v1946 = vsel %vm1722, %v1940, %v1871
      %v1947 = vsel %vm1723, %v1936, %v1872
      %v1948 = vsel %vm1724, %v1940, %v1873
      %v1949 = vsel %vm1725, %v1936, %v1874
      %v1950 = vsel %vm1726, %v1940, %v1875
      %v1951 = vsel %vm1727, %v1936, %v1876
      %v1952 = vsel %vm1728, %v1940, %v1877
      %v1953 = vsel %vm1729, %v1936, %v1878
      %v1954 = vsel %vm1730, %v1940, %v1879
      %v1955 = vsel %vm1731, %v1936, %v1880
      %v1956 = vsel %vm1732, %v1940, %v1881
      %v1957 = vsel %vm1733, %v1936, %v1882
      %v1958 = vsel %vm1734, %v1940, %v1883
      %v1959 = vsel %vm1735, %v1936, %v1884
      %v1960 = vsel %vm1736, %v1940, %v1885
      %v1961 = vsel %vm1737, %v1936, %v1886
      %v1962 = vsel %vm1738, %v1940, %v1887
      %v1963 = vsel %vm1739, %v1936, %v1888
      %v1964 = vsel %vm1740, %v1940, %v1889
      %v1965 = vsel %vm1741, %v1936, %v1890
      %v1966 = vsel %vm1742, %v1940, %v1891
      %v1967 = vsel %vm1743, %v1936, %v1892
      %v1968 = vsel %vm1744, %v1940, %v1893
      %v1969 = vsel %vm1745, %v1936, %v1894
      %v1970 = vsel %vm1746, %v1940, %v1895
      %v1971 = vsel %vm1747, %v1936, %v1896
      %v1972 = vsel %vm1748, %v1940, %v1897
      %v1973 = vsel %vm1749, %v1936, %v1898
      %v1974 = vsel %vm1750, %v1940, %v1899
      %v1975 = vsel %vm1751, %v1936, %v1900
      %v1976 = vsel %vm1752, %v1940, %v1901
      %v1977 = vsel %vm1753, %v1936, %v1902
      %v1978 = vsel %vm1754, %v1940, %v1903
      %v1979 = vsel %vm1755, %v1936, %v1904
      %v1980 = vsel %vm1756, %v1940, %v1905
      %v1981 = vsel %vm1757, %v1936, %v1906
      %v1982 = vsel %vm1758, %v1940, %v1907
      %v1983 = vsel %vm1759, %v1936, %v1908
      %v1984 = vsel %vm1760, %v1940, %v1909
      %v1985 = vsel %vm1761, %v1936, %v1910
      %v1986 = vsel %vm1762, %v1940, %v1911
      %v1987 = vsel %vm1763, %v1936, %v1912
      %v1988 = vsel %vm1764, %v1940, %v1913
      %v1989 = vsel %vm1765, %v1936, %v1914
      %v1990 = vsel %vm1766, %v1940, %v1915
      %v1991 = vsel %vm1767, %v1936, %v1916
      %v1992 = vsel %vm1768, %v1940, %v1917
      %v1993 = vsel %vm1769, %v1936, %v1918
      %v1994 = vsel %vm1770, %v1940, %v1919
      %v1995 = vsel %vm1771, %v1936, %v1920
      %v1996 = vsel %vm1772, %v1940, %v1921
      %v1997 = vsel %vm1773, %v1936, %v1922
      %v1998 = vsel %vm1774, %v1940, %v1923
      %v1999 = vsel %vm1775, %v1936, %v1924
      %v2000 = vsel %vm1776, %v1940, %v1925
      %v2001 = vsel %vm1777, %v1936, %v1926
      %v2002 = vsel %vm1778, %v1940, %v1927
      %v2003 = vsel %vm1779, %v1936, %v1928
      %v2004 = vsel %vm1780, %v1940, %v1929
      %v2005 = vsel %vm1781, %v1936, %v1930
      %v2006 = vsel %vm1782, %v1940, %v1931
      %v2007 = vlaneseq
      %v2008 = vshrl.u32 %v2007, 7
      %v2009 = vsub.s32 0, %v2008
      %v2010 = vrot.slane %v1709, %v2009
      %v2011 = vlaneseq
      %v2012 = vshrl.u32 %v2011, 7
      %v2013 = vsub.s32 1, %v2012
      %v2014 = vrot.slane %v1709, %v2013
      %vm2015 = vcmp.eq.s32.totalorder %v1195, %v2010
      %vm2016 = vcmp.eq.s32.totalorder %v1195, %v2014
      %vm2017 = vcmp.eq.s32.totalorder %v1198, %v2010
      %vm2018 = vcmp.eq.s32.totalorder %v1198, %v2014
      %vm2019 = vcmp.eq.s32.totalorder %v1201, %v2010
      %vm2020 = vcmp.eq.s32.totalorder %v1201, %v2014
      %vm2021 = vcmp.eq.s32.totalorder %v1204, %v2010
      %vm2022 = vcmp.eq.s32.totalorder %v1204, %v2014
      %vm2023 = vcmp.eq.s32.totalorder %v1207, %v2010
      %vm2024 = vcmp.eq.s32.totalorder %v1207, %v2014
      %vm2025 = vcmp.eq.s32.totalorder %v1210, %v2010
      %vm2026 = vcmp.eq.s32.totalorder %v1210, %v2014
      %vm2027 = vcmp.eq.s32.totalorder %v1213, %v2010
      %vm2028 = vcmp.eq.s32.totalorder %v1213, %v2014
      %vm2029 = vcmp.eq.s32.totalorder %v1216, %v2010
      %vm2030 = vcmp.eq.s32.totalorder %v1216, %v2014
      %vm2031 = vcmp.eq.s32.totalorder %v1219, %v2010
      %vm2032 = vcmp.eq.s32.totalorder %v1219, %v2014
      %vm2033 = vcmp.eq.s32.totalorder %v1222, %v2010
      %vm2034 = vcmp.eq.s32.totalorder %v1222, %v2014
      %vm2035 = vcmp.eq.s32.totalorder %v1225, %v2010
      %vm2036 = vcmp.eq.s32.totalorder %v1225, %v2014
      %vm2037 = vcmp.eq.s32.totalorder %v1228, %v2010
      %vm2038 = vcmp.eq.s32.totalorder %v1228, %v2014
      %vm2039 = vcmp.eq.s32.totalorder %v1231, %v2010
      %vm2040 = vcmp.eq.s32.totalorder %v1231, %v2014
      %vm2041 = vcmp.eq.s32.totalorder %v1234, %v2010
      %vm2042 = vcmp.eq.s32.totalorder %v1234, %v2014
      %vm2043 = vcmp.eq.s32.totalorder %v1237, %v2010
      %vm2044 = vcmp.eq.s32.totalorder %v1237, %v2014
      %vm2045 = vcmp.eq.s32.totalorder %v1240, %v2010
      %vm2046 = vcmp.eq.s32.totalorder %v1240, %v2014
      %vm2047 = vcmp.eq.s32.totalorder %v1243, %v2010
      %vm2048 = vcmp.eq.s32.totalorder %v1243, %v2014
      %vm2049 = vcmp.eq.s32.totalorder %v1246, %v2010
      %vm2050 = vcmp.eq.s32.totalorder %v1246, %v2014
      %vm2051 = vcmp.eq.s32.totalorder %v1249, %v2010
      %vm2052 = vcmp.eq.s32.totalorder %v1249, %v2014
      %vm2053 = vcmp.eq.s32.totalorder %v1252, %v2010
      %vm2054 = vcmp.eq.s32.totalorder %v1252, %v2014
      %vm2055 = vcmp.eq.s32.totalorder %v1255, %v2010
      %vm2056 = vcmp.eq.s32.totalorder %v1255, %v2014
      %vm2057 = vcmp.eq.s32.totalorder %v1258, %v2010
      %vm2058 = vcmp.eq.s32.totalorder %v1258, %v2014
      %vm2059 = vcmp.eq.s32.totalorder %v1261, %v2010
      %vm2060 = vcmp.eq.s32.totalorder %v1261, %v2014
      %vm2061 = vcmp.eq.s32.totalorder %v1264, %v2010
      %vm2062 = vcmp.eq.s32.totalorder %v1264, %v2014
      %vm2063 = vcmp.eq.s32.totalorder %v1267, %v2010
      %vm2064 = vcmp.eq.s32.totalorder %v1267, %v2014
      %vm2065 = vcmp.eq.s32.totalorder %v1270, %v2010
      %vm2066 = vcmp.eq.s32.totalorder %v1270, %v2014
      %vm2067 = vcmp.eq.s32.totalorder %v1273, %v2010
      %vm2068 = vcmp.eq.s32.totalorder %v1273, %v2014
      %vm2069 = vcmp.eq.s32.totalorder %v1276, %v2010
      %vm2070 = vcmp.eq.s32.totalorder %v1276, %v2014
      %vm2071 = vcmp.eq.s32.totalorder %v1279, %v2010
      %vm2072 = vcmp.eq.s32.totalorder %v1279, %v2014
      %vm2073 = vcmp.eq.s32.totalorder %v1282, %v2010
      %vm2074 = vcmp.eq.s32.totalorder %v1282, %v2014
      %vm2075 = vcmp.eq.s32.totalorder %v1285, %v2010
      %vm2076 = vcmp.eq.s32.totalorder %v1285, %v2014
      %vm2077 = vcmp.eq.s32.totalorder %v1288, %v2010
      %vm2078 = vcmp.eq.s32.totalorder %v1288, %v2014
      %v2079 = vsub.f32 1.0, %v1707
      %v2080 = vadd.s32 %v1709, 1
      %v2081 = vlaneseq
      %v2082 = vshrl.u32 %v2081, 7
      %v2083 = vsub.s32 0, %v2082
      %v2084 = vrot.slane %v2080, %v2083
      %v2085 = vlaneseq
      %v2086 = vshrl.u32 %v2085, 7
      %v2087 = vsub.s32 1, %v2086
      %v2088 = vrot.slane %v2080, %v2087
      %vm2089 = vcmp.eq.s32.totalorder %v1195, %v2084
      %vm2090 = vcmp.eq.s32.totalorder %v1195, %v2088
      %vm2091 = vcmp.eq.s32.totalorder %v1198, %v2084
      %vm2092 = vcmp.eq.s32.totalorder %v1198, %v2088
      %vm2093 = vcmp.eq.s32.totalorder %v1201, %v2084
      %vm2094 = vcmp.eq.s32.totalorder %v1201, %v2088
      %vm2095 = vcmp.eq.s32.totalorder %v1204, %v2084
      %vm2096 = vcmp.eq.s32.totalorder %v1204, %v2088
      %vm2097 = vcmp.eq.s32.totalorder %v1207, %v2084
      %vm2098 = vcmp.eq.s32.totalorder %v1207, %v2088
      %vm2099 = vcmp.eq.s32.totalorder %v1210, %v2084
      %vm2100 = vcmp.eq.s32.totalorder %v1210, %v2088
      %vm2101 = vcmp.eq.s32.totalorder %v1213, %v2084
      %vm2102 = vcmp.eq.s32.totalorder %v1213, %v2088
      %vm2103 = vcmp.eq.s32.totalorder %v1216, %v2084
      %vm2104 = vcmp.eq.s32.totalorder %v1216, %v2088
      %vm2105 = vcmp.eq.s32.totalorder %v1219, %v2084
      %vm2106 = vcmp.eq.s32.totalorder %v1219, %v2088
      %vm2107 = vcmp.eq.s32.totalorder %v1222, %v2084
      %vm2108 = vcmp.eq.s32.totalorder %v1222, %v2088
      %vm2109 = vcmp.eq.s32.totalorder %v1225, %v2084
      %vm2110 = vcmp.eq.s32.totalorder %v1225, %v2088
      %vm2111 = vcmp.eq.s32.totalorder %v1228, %v2084
      %vm2112 = vcmp.eq.s32.totalorder %v1228, %v2088
      %vm2113 = vcmp.eq.s32.totalorder %v1231, %v2084
      %vm2114 = vcmp.eq.s32.totalorder %v1231, %v2088
      %vm2115 = vcmp.eq.s32.totalorder %v1234, %v2084
      %vm2116 = vcmp.eq.s32.totalorder %v1234, %v2088
      %vm2117 = vcmp.eq.s32.totalorder %v1237, %v2084
      %vm2118 = vcmp.eq.s32.totalorder %v1237, %v2088
      %vm2119 = vcmp.eq.s32.totalorder %v1240, %v2084
      %vm2120 = vcmp.eq.s32.totalorder %v1240, %v2088
      %vm2121 = vcmp.eq.s32.totalorder %v1243, %v2084
      %vm2122 = vcmp.eq.s32.totalorder %v1243, %v2088
      %vm2123 = vcmp.eq.s32.totalorder %v1246, %v2084
      %vm2124 = vcmp.eq.s32.totalorder %v1246, %v2088
      %vm2125 = vcmp.eq.s32.totalorder %v1249, %v2084
      %vm2126 = vcmp.eq.s32.totalorder %v1249, %v2088
      %vm2127 = vcmp.eq.s32.totalorder %v1252, %v2084
      %vm2128 = vcmp.eq.s32.totalorder %v1252, %v2088
      %vm2129 = vcmp.eq.s32.totalorder %v1255, %v2084
      %vm2130 = vcmp.eq.s32.totalorder %v1255, %v2088
      %vm2131 = vcmp.eq.s32.totalorder %v1258, %v2084
      %vm2132 = vcmp.eq.s32.totalorder %v1258, %v2088
      %vm2133 = vcmp.eq.s32.totalorder %v1261, %v2084
      %vm2134 = vcmp.eq.s32.totalorder %v1261, %v2088
      %vm2135 = vcmp.eq.s32.totalorder %v1264, %v2084
      %vm2136 = vcmp.eq.s32.totalorder %v1264, %v2088
      %vm2137 = vcmp.eq.s32.totalorder %v1267, %v2084
      %vm2138 = vcmp.eq.s32.totalorder %v1267, %v2088
      %vm2139 = vcmp.eq.s32.totalorder %v1270, %v2084
      %vm2140 = vcmp.eq.s32.totalorder %v1270, %v2088
      %vm2141 = vcmp.eq.s32.totalorder %v1273, %v2084
      %vm2142 = vcmp.eq.s32.totalorder %v1273, %v2088
      %vm2143 = vcmp.eq.s32.totalorder %v1276, %v2084
      %vm2144 = vcmp.eq.s32.totalorder %v1276, %v2088
      %vm2145 = vcmp.eq.s32.totalorder %v1279, %v2084
      %vm2146 = vcmp.eq.s32.totalorder %v1279, %v2088
      %vm2147 = vcmp.eq.s32.totalorder %v1282, %v2084
      %vm2148 = vcmp.eq.s32.totalorder %v1282, %v2088
      %vm2149 = vcmp.eq.s32.totalorder %v1285, %v2084
      %vm2150 = vcmp.eq.s32.totalorder %v1285, %v2088
      %vm2151 = vcmp.eq.s32.totalorder %v1288, %v2084
      %vm2152 = vcmp.eq.s32.totalorder %v1288, %v2088
      %v2154 = vlaneseq
      %v2155 = vshrl.u32 %v2154, 7
      %v2156 = vsub.s32 0, %v2155
      %v2157 = vrot.slane %v1707, %v2156
      %v2158 = vlaneseq
      %v2159 = vshrl.u32 %v2158, 7
      %v2160 = vsub.s32 1, %v2159
      %v2161 = vrot.slane %v1707, %v2160
      %v2164 = vsel %vm2089, %v2157, 0.0
      %v2165 = vsel %vm2090, %v2161, 0.0
      %v2166 = vsel %vm2091, %v2157, 0.0
      %v2167 = vsel %vm2092, %v2161, 0.0
      %v2168 = vsel %vm2093, %v2157, 0.0
      %v2169 = vsel %vm2094, %v2161, 0.0
      %v2170 = vsel %vm2095, %v2157, 0.0
      %v2171 = vsel %vm2096, %v2161, 0.0
      %v2172 = vsel %vm2097, %v2157, 0.0
      %v2173 = vsel %vm2098, %v2161, 0.0
      %v2174 = vsel %vm2099, %v2157, 0.0
      %v2175 = vsel %vm2100, %v2161, 0.0
      %v2176 = vsel %vm2101, %v2157, 0.0
      %v2177 = vsel %vm2102, %v2161, 0.0
      %v2178 = vsel %vm2103, %v2157, 0.0
      %v2179 = vsel %vm2104, %v2161, 0.0
      %v2180 = vsel %vm2105, %v2157, 0.0
      %v2181 = vsel %vm2106, %v2161, 0.0
      %v2182 = vsel %vm2107, %v2157, 0.0
      %v2183 = vsel %vm2108, %v2161, 0.0
      %v2184 = vsel %vm2109, %v2157, 0.0
      %v2185 = vsel %vm2110, %v2161, 0.0
      %v2186 = vsel %vm2111, %v2157, 0.0
      %v2187 = vsel %vm2112, %v2161, 0.0
      %v2188 = vsel %vm2113, %v2157, 0.0
      %v2189 = vsel %vm2114, %v2161, 0.0
      %v2190 = vsel %vm2115, %v2157, 0.0
      %v2191 = vsel %vm2116, %v2161, 0.0
      %v2192 = vsel %vm2117, %v2157, 0.0
      %v2193 = vsel %vm2118, %v2161, 0.0
      %v2194 = vsel %vm2119, %v2157, 0.0
      %v2195 = vsel %vm2120, %v2161, 0.0
      %v2196 = vsel %vm2121, %v2157, 0.0
      %v2197 = vsel %vm2122, %v2161, 0.0
      %v2198 = vsel %vm2123, %v2157, 0.0
      %v2199 = vsel %vm2124, %v2161, 0.0
      %v2200 = vsel %vm2125, %v2157, 0.0
      %v2201 = vsel %vm2126, %v2161, 0.0
      %v2202 = vsel %vm2127, %v2157, 0.0
      %v2203 = vsel %vm2128, %v2161, 0.0
      %v2204 = vsel %vm2129, %v2157, 0.0
      %v2205 = vsel %vm2130, %v2161, 0.0
      %v2206 = vsel %vm2131, %v2157, 0.0
      %v2207 = vsel %vm2132, %v2161, 0.0
      %v2208 = vsel %vm2133, %v2157, 0.0
      %v2209 = vsel %vm2134, %v2161, 0.0
      %v2210 = vsel %vm2135, %v2157, 0.0
      %v2211 = vsel %vm2136, %v2161, 0.0
      %v2212 = vsel %vm2137, %v2157, 0.0
      %v2213 = vsel %vm2138, %v2161, 0.0
      %v2214 = vsel %vm2139, %v2157, 0.0
      %v2215 = vsel %vm2140, %v2161, 0.0
      %v2216 = vsel %vm2141, %v2157, 0.0
      %v2217 = vsel %vm2142, %v2161, 0.0
      %v2218 = vsel %vm2143, %v2157, 0.0
      %v2219 = vsel %vm2144, %v2161, 0.0
      %v2220 = vsel %vm2145, %v2157, 0.0
      %v2221 = vsel %vm2146, %v2161, 0.0
      %v2222 = vsel %vm2147, %v2157, 0.0
      %v2223 = vsel %vm2148, %v2161, 0.0
      %v2224 = vsel %vm2149, %v2157, 0.0
      %v2225 = vsel %vm2150, %v2161, 0.0
      %v2226 = vsel %vm2151, %v2157, 0.0
      %v2227 = vsel %vm2152, %v2161, 0.0
      %v2229 = vlaneseq
      %v2230 = vshrl.u32 %v2229, 7
      %v2231 = vsub.s32 0, %v2230
      %v2232 = vrot.slane %v2079, %v2231
      %v2233 = vlaneseq
      %v2234 = vshrl.u32 %v2233, 7
      %v2235 = vsub.s32 1, %v2234
      %v2236 = vrot.slane %v2079, %v2235
      %v2239 = vsel %vm2015, %v2232, %v2164
      %v2240 = vsel %vm2016, %v2236, %v2165
      %v2241 = vsel %vm2017, %v2232, %v2166
      %v2242 = vsel %vm2018, %v2236, %v2167
      %v2243 = vsel %vm2019, %v2232, %v2168
      %v2244 = vsel %vm2020, %v2236, %v2169
      %v2245 = vsel %vm2021, %v2232, %v2170
      %v2246 = vsel %vm2022, %v2236, %v2171
      %v2247 = vsel %vm2023, %v2232, %v2172
      %v2248 = vsel %vm2024, %v2236, %v2173
      %v2249 = vsel %vm2025, %v2232, %v2174
      %v2250 = vsel %vm2026, %v2236, %v2175
      %v2251 = vsel %vm2027, %v2232, %v2176
      %v2252 = vsel %vm2028, %v2236, %v2177
      %v2253 = vsel %vm2029, %v2232, %v2178
      %v2254 = vsel %vm2030, %v2236, %v2179
      %v2255 = vsel %vm2031, %v2232, %v2180
      %v2256 = vsel %vm2032, %v2236, %v2181
      %v2257 = vsel %vm2033, %v2232, %v2182
      %v2258 = vsel %vm2034, %v2236, %v2183
      %v2259 = vsel %vm2035, %v2232, %v2184
      %v2260 = vsel %vm2036, %v2236, %v2185
      %v2261 = vsel %vm2037, %v2232, %v2186
      %v2262 = vsel %vm2038, %v2236, %v2187
      %v2263 = vsel %vm2039, %v2232, %v2188
      %v2264 = vsel %vm2040, %v2236, %v2189
      %v2265 = vsel %vm2041, %v2232, %v2190
      %v2266 = vsel %vm2042, %v2236, %v2191
      %v2267 = vsel %vm2043, %v2232, %v2192
      %v2268 = vsel %vm2044, %v2236, %v2193
      %v2269 = vsel %vm2045, %v2232, %v2194
      %v2270 = vsel %vm2046, %v2236, %v2195
      %v2271 = vsel %vm2047, %v2232, %v2196
      %v2272 = vsel %vm2048, %v2236, %v2197
      %v2273 = vsel %vm2049, %v2232, %v2198
      %v2274 = vsel %vm2050, %v2236, %v2199
      %v2275 = vsel %vm2051, %v2232, %v2200
      %v2276 = vsel %vm2052, %v2236, %v2201
      %v2277 = vsel %vm2053, %v2232, %v2202
      %v2278 = vsel %vm2054, %v2236, %v2203
      %v2279 = vsel %vm2055, %v2232, %v2204
      %v2280 = vsel %vm2056, %v2236, %v2205
      %v2281 = vsel %vm2057, %v2232, %v2206
      %v2282 = vsel %vm2058, %v2236, %v2207
      %v2283 = vsel %vm2059, %v2232, %v2208
      %v2284 = vsel %vm2060, %v2236, %v2209
      %v2285 = vsel %vm2061, %v2232, %v2210
      %v2286 = vsel %vm2062, %v2236, %v2211
      %v2287 = vsel %vm2063, %v2232, %v2212
      %v2288 = vsel %vm2064, %v2236, %v2213
      %v2289 = vsel %vm2065, %v2232, %v2214
      %v2290 = vsel %vm2066, %v2236, %v2215
      %v2291 = vsel %vm2067, %v2232, %v2216
      %v2292 = vsel %vm2068, %v2236, %v2217
      %v2293 = vsel %vm2069, %v2232, %v2218
      %v2294 = vsel %vm2070, %v2236, %v2219
      %v2295 = vsel %vm2071, %v2232, %v2220
      %v2296 = vsel %vm2072, %v2236, %v2221
      %v2297 = vsel %vm2073, %v2232, %v2222
      %v2298 = vsel %vm2074, %v2236, %v2223
      %v2299 = vsel %vm2075, %v2232, %v2224
      %v2300 = vsel %vm2076, %v2236, %v2225
      %v2301 = vsel %vm2077, %v2232, %v2226
      %v2302 = vsel %vm2078, %v2236, %v2227
      %v2303 = vmul.f32 %v1943, %v2239
      %v2304 = vmul.f32 %v1944, %v2240
      %v2305 = vmul.f32 %v1945, %v2241
      %v2306 = vmul.f32 %v1946, %v2242
      %v2307 = vmul.f32 %v1947, %v2243
      %v2308 = vmul.f32 %v1948, %v2244
      %v2309 = vmul.f32 %v1949, %v2245
      %v2310 = vmul.f32 %v1950, %v2246
      %v2311 = vmul.f32 %v1951, %v2247
      %v2312 = vmul.f32 %v1952, %v2248
      %v2313 = vmul.f32 %v1953, %v2249
      %v2314 = vmul.f32 %v1954, %v2250
      %v2315 = vmul.f32 %v1955, %v2251
      %v2316 = vmul.f32 %v1956, %v2252
      %v2317 = vmul.f32 %v1957, %v2253
      %v2318 = vmul.f32 %v1958, %v2254
      %v2319 = vmul.f32 %v1959, %v2255
      %v2320 = vmul.f32 %v1960, %v2256
      %v2321 = vmul.f32 %v1961, %v2257
      %v2322 = vmul.f32 %v1962, %v2258
      %v2323 = vmul.f32 %v1963, %v2259
      %v2324 = vmul.f32 %v1964, %v2260
      %v2325 = vmul.f32 %v1965, %v2261
      %v2326 = vmul.f32 %v1966, %v2262
      %v2327 = vmul.f32 %v1967, %v2263
      %v2328 = vmul.f32 %v1968, %v2264
      %v2329 = vmul.f32 %v1969, %v2265
      %v2330 = vmul.f32 %v1970, %v2266
      %v2331 = vmul.f32 %v1971, %v2267
      %v2332 = vmul.f32 %v1972, %v2268
      %v2333 = vmul.f32 %v1973, %v2269
      %v2334 = vmul.f32 %v1974, %v2270
      %v2335 = vmul.f32 %v1975, %v2271
      %v2336 = vmul.f32 %v1976, %v2272
      %v2337 = vmul.f32 %v1977, %v2273
      %v2338 = vmul.f32 %v1978, %v2274
      %v2339 = vmul.f32 %v1979, %v2275
      %v2340 = vmul.f32 %v1980, %v2276
      %v2341 = vmul.f32 %v1981, %v2277
      %v2342 = vmul.f32 %v1982, %v2278
      %v2343 = vmul.f32 %v1983, %v2279
      %v2344 = vmul.f32 %v1984, %v2280
      %v2345 = vmul.f32 %v1985, %v2281
      %v2346 = vmul.f32 %v1986, %v2282
      %v2347 = vmul.f32 %v1987, %v2283
      %v2348 = vmul.f32 %v1988, %v2284
      %v2349 = vmul.f32 %v1989, %v2285
      %v2350 = vmul.f32 %v1990, %v2286
      %v2351 = vmul.f32 %v1991, %v2287
      %v2352 = vmul.f32 %v1992, %v2288
      %v2353 = vmul.f32 %v1993, %v2289
      %v2354 = vmul.f32 %v1994, %v2290
      %v2355 = vmul.f32 %v1995, %v2291
      %v2356 = vmul.f32 %v1996, %v2292
      %v2357 = vmul.f32 %v1997, %v2293
      %v2358 = vmul.f32 %v1998, %v2294
      %v2359 = vmul.f32 %v1999, %v2295
      %v2360 = vmul.f32 %v2000, %v2296
      %v2361 = vmul.f32 %v2001, %v2297
      %v2362 = vmul.f32 %v2002, %v2298
      %v2363 = vmul.f32 %v2003, %v2299
      %v2364 = vmul.f32 %v2004, %v2300
      %v2365 = vmul.f32 %v2005, %v2301
      %v2366 = vmul.f32 %v2006, %v2302
      %v2367 = vpack.c.bf16 %v2305, %v2303
      %v2368 = vpack.c.bf16 %v2306, %v2304
      %v2369 = vpack.c.bf16 %v2309, %v2307
      %v2370 = vpack.c.bf16 %v2310, %v2308
      %v2371 = vpack.c.bf16 %v2313, %v2311
      %v2372 = vpack.c.bf16 %v2314, %v2312
      %v2373 = vpack.c.bf16 %v2317, %v2315
      %v2374 = vpack.c.bf16 %v2318, %v2316
      %v2375 = vpack.c.bf16 %v2321, %v2319
      %v2376 = vpack.c.bf16 %v2322, %v2320
      %v2377 = vpack.c.bf16 %v2325, %v2323
      %v2378 = vpack.c.bf16 %v2326, %v2324
      %v2379 = vpack.c.bf16 %v2329, %v2327
      %v2380 = vpack.c.bf16 %v2330, %v2328
      %v2381 = vpack.c.bf16 %v2333, %v2331
      %v2382 = vpack.c.bf16 %v2334, %v2332
      %v2383 = vpack.c.bf16 %v2337, %v2335
      %v2384 = vpack.c.bf16 %v2338, %v2336
      %v2385 = vpack.c.bf16 %v2341, %v2339
      %v2386 = vpack.c.bf16 %v2342, %v2340
      %v2387 = vpack.c.bf16 %v2345, %v2343
      %v2388 = vpack.c.bf16 %v2346, %v2344
      %v2389 = vpack.c.bf16 %v2349, %v2347
      %v2390 = vpack.c.bf16 %v2350, %v2348
      %v2391 = vpack.c.bf16 %v2353, %v2351
      %v2392 = vpack.c.bf16 %v2354, %v2352
      %v2393 = vpack.c.bf16 %v2357, %v2355
      %v2394 = vpack.c.bf16 %v2358, %v2356
      %v2395 = vpack.c.bf16 %v2361, %v2359
      %v2396 = vpack.c.bf16 %v2362, %v2360
      %v2397 = vpack.c.bf16 %v2365, %v2363
      %v2398 = vpack.c.bf16 %v2366, %v2364
      %v2399 = vcombine.high %v771, %v771
      %v2401 = vadd.f32 %v720, %v2399
      %v2402 = vmax.f32 %v2401, 0.0
      %v2403 = vmin.f32 %v2402, 15.0
      %v2404 = vcombine.high %v790, %v790
      %v2406 = vadd.f32 %v722, %v2404
      %v2407 = vmax.f32 %v2406, 0.0
      %v2408 = vmin.f32 %v2407, 15.0
      %v2409 = vfloor.f32 %v2403
      %v2410 = vfloor.f32 %v2408
      %v2411 = vsub.f32 %v2403, %v2409
      %v2412 = vsub.f32 %v2408, %v2410
      %v2413 = vcvt.f32.s32.to.zero.pseudo %v2409
      %v2414 = vcvt.f32.s32.to.zero.pseudo %v2410
      %v2415 = vlaneseq
      %v2416 = vshrl.u32 %v2415, 7
      %v2417 = vsub.s32 0, %v2416
      %v2418 = vrot.slane %v2414, %v2417
      %v2419 = vlaneseq
      %v2420 = vshrl.u32 %v2419, 7
      %v2421 = vsub.s32 1, %v2420
      %v2422 = vrot.slane %v2414, %v2421
      %vm2423 = vcmp.eq.s32.totalorder %v803, %v2418
      %vm2424 = vcmp.eq.s32.totalorder %v803, %v2422
      %vm2425 = vcmp.eq.s32.totalorder %v806, %v2418
      %vm2426 = vcmp.eq.s32.totalorder %v806, %v2422
      %vm2427 = vcmp.eq.s32.totalorder %v809, %v2418
      %vm2428 = vcmp.eq.s32.totalorder %v809, %v2422
      %vm2429 = vcmp.eq.s32.totalorder %v812, %v2418
      %vm2430 = vcmp.eq.s32.totalorder %v812, %v2422
      %vm2431 = vcmp.eq.s32.totalorder %v815, %v2418
      %vm2432 = vcmp.eq.s32.totalorder %v815, %v2422
      %vm2433 = vcmp.eq.s32.totalorder %v818, %v2418
      %vm2434 = vcmp.eq.s32.totalorder %v818, %v2422
      %vm2435 = vcmp.eq.s32.totalorder %v821, %v2418
      %vm2436 = vcmp.eq.s32.totalorder %v821, %v2422
      %vm2437 = vcmp.eq.s32.totalorder %v824, %v2418
      %vm2438 = vcmp.eq.s32.totalorder %v824, %v2422
      %vm2439 = vcmp.eq.s32.totalorder %v827, %v2418
      %vm2440 = vcmp.eq.s32.totalorder %v827, %v2422
      %vm2441 = vcmp.eq.s32.totalorder %v830, %v2418
      %vm2442 = vcmp.eq.s32.totalorder %v830, %v2422
      %vm2443 = vcmp.eq.s32.totalorder %v833, %v2418
      %vm2444 = vcmp.eq.s32.totalorder %v833, %v2422
      %vm2445 = vcmp.eq.s32.totalorder %v836, %v2418
      %vm2446 = vcmp.eq.s32.totalorder %v836, %v2422
      %vm2447 = vcmp.eq.s32.totalorder %v839, %v2418
      %vm2448 = vcmp.eq.s32.totalorder %v839, %v2422
      %vm2449 = vcmp.eq.s32.totalorder %v842, %v2418
      %vm2450 = vcmp.eq.s32.totalorder %v842, %v2422
      %vm2451 = vcmp.eq.s32.totalorder %v845, %v2418
      %vm2452 = vcmp.eq.s32.totalorder %v845, %v2422
      %vm2453 = vcmp.eq.s32.totalorder %v848, %v2418
      %vm2454 = vcmp.eq.s32.totalorder %v848, %v2422
      %vm2455 = vcmp.eq.s32.totalorder %v851, %v2418
      %vm2456 = vcmp.eq.s32.totalorder %v851, %v2422
      %vm2457 = vcmp.eq.s32.totalorder %v854, %v2418
      %vm2458 = vcmp.eq.s32.totalorder %v854, %v2422
      %vm2459 = vcmp.eq.s32.totalorder %v857, %v2418
      %vm2460 = vcmp.eq.s32.totalorder %v857, %v2422
      %vm2461 = vcmp.eq.s32.totalorder %v860, %v2418
      %vm2462 = vcmp.eq.s32.totalorder %v860, %v2422
      %vm2463 = vcmp.eq.s32.totalorder %v863, %v2418
      %vm2464 = vcmp.eq.s32.totalorder %v863, %v2422
      %vm2465 = vcmp.eq.s32.totalorder %v866, %v2418
      %vm2466 = vcmp.eq.s32.totalorder %v866, %v2422
      %vm2467 = vcmp.eq.s32.totalorder %v869, %v2418
      %vm2468 = vcmp.eq.s32.totalorder %v869, %v2422
      %vm2469 = vcmp.eq.s32.totalorder %v872, %v2418
      %vm2470 = vcmp.eq.s32.totalorder %v872, %v2422
      %vm2471 = vcmp.eq.s32.totalorder %v875, %v2418
      %vm2472 = vcmp.eq.s32.totalorder %v875, %v2422
      %vm2473 = vcmp.eq.s32.totalorder %v878, %v2418
      %vm2474 = vcmp.eq.s32.totalorder %v878, %v2422
      %vm2475 = vcmp.eq.s32.totalorder %v881, %v2418
      %vm2476 = vcmp.eq.s32.totalorder %v881, %v2422
      %vm2477 = vcmp.eq.s32.totalorder %v884, %v2418
      %vm2478 = vcmp.eq.s32.totalorder %v884, %v2422
      %vm2479 = vcmp.eq.s32.totalorder %v887, %v2418
      %vm2480 = vcmp.eq.s32.totalorder %v887, %v2422
      %vm2481 = vcmp.eq.s32.totalorder %v890, %v2418
      %vm2482 = vcmp.eq.s32.totalorder %v890, %v2422
      %vm2483 = vcmp.eq.s32.totalorder %v893, %v2418
      %vm2484 = vcmp.eq.s32.totalorder %v893, %v2422
      %vm2485 = vcmp.eq.s32.totalorder %v896, %v2418
      %vm2486 = vcmp.eq.s32.totalorder %v896, %v2422
      %v2487 = vsub.f32 1.0, %v2412
      %v2488 = vadd.s32 %v2414, 1
      %v2489 = vlaneseq
      %v2490 = vshrl.u32 %v2489, 7
      %v2491 = vsub.s32 0, %v2490
      %v2492 = vrot.slane %v2488, %v2491
      %v2493 = vlaneseq
      %v2494 = vshrl.u32 %v2493, 7
      %v2495 = vsub.s32 1, %v2494
      %v2496 = vrot.slane %v2488, %v2495
      %vm2497 = vcmp.eq.s32.totalorder %v803, %v2492
      %vm2498 = vcmp.eq.s32.totalorder %v803, %v2496
      %vm2499 = vcmp.eq.s32.totalorder %v806, %v2492
      %vm2500 = vcmp.eq.s32.totalorder %v806, %v2496
      %vm2501 = vcmp.eq.s32.totalorder %v809, %v2492
      %vm2502 = vcmp.eq.s32.totalorder %v809, %v2496
      %vm2503 = vcmp.eq.s32.totalorder %v812, %v2492
      %vm2504 = vcmp.eq.s32.totalorder %v812, %v2496
      %vm2505 = vcmp.eq.s32.totalorder %v815, %v2492
      %vm2506 = vcmp.eq.s32.totalorder %v815, %v2496
      %vm2507 = vcmp.eq.s32.totalorder %v818, %v2492
      %vm2508 = vcmp.eq.s32.totalorder %v818, %v2496
      %vm2509 = vcmp.eq.s32.totalorder %v821, %v2492
      %vm2510 = vcmp.eq.s32.totalorder %v821, %v2496
      %vm2511 = vcmp.eq.s32.totalorder %v824, %v2492
      %vm2512 = vcmp.eq.s32.totalorder %v824, %v2496
      %vm2513 = vcmp.eq.s32.totalorder %v827, %v2492
      %vm2514 = vcmp.eq.s32.totalorder %v827, %v2496
      %vm2515 = vcmp.eq.s32.totalorder %v830, %v2492
      %vm2516 = vcmp.eq.s32.totalorder %v830, %v2496
      %vm2517 = vcmp.eq.s32.totalorder %v833, %v2492
      %vm2518 = vcmp.eq.s32.totalorder %v833, %v2496
      %vm2519 = vcmp.eq.s32.totalorder %v836, %v2492
      %vm2520 = vcmp.eq.s32.totalorder %v836, %v2496
      %vm2521 = vcmp.eq.s32.totalorder %v839, %v2492
      %vm2522 = vcmp.eq.s32.totalorder %v839, %v2496
      %vm2523 = vcmp.eq.s32.totalorder %v842, %v2492
      %vm2524 = vcmp.eq.s32.totalorder %v842, %v2496
      %vm2525 = vcmp.eq.s32.totalorder %v845, %v2492
      %vm2526 = vcmp.eq.s32.totalorder %v845, %v2496
      %vm2527 = vcmp.eq.s32.totalorder %v848, %v2492
      %vm2528 = vcmp.eq.s32.totalorder %v848, %v2496
      %vm2529 = vcmp.eq.s32.totalorder %v851, %v2492
      %vm2530 = vcmp.eq.s32.totalorder %v851, %v2496
      %vm2531 = vcmp.eq.s32.totalorder %v854, %v2492
      %vm2532 = vcmp.eq.s32.totalorder %v854, %v2496
      %vm2533 = vcmp.eq.s32.totalorder %v857, %v2492
      %vm2534 = vcmp.eq.s32.totalorder %v857, %v2496
      %vm2535 = vcmp.eq.s32.totalorder %v860, %v2492
      %vm2536 = vcmp.eq.s32.totalorder %v860, %v2496
      %vm2537 = vcmp.eq.s32.totalorder %v863, %v2492
      %vm2538 = vcmp.eq.s32.totalorder %v863, %v2496
      %vm2539 = vcmp.eq.s32.totalorder %v866, %v2492
      %vm2540 = vcmp.eq.s32.totalorder %v866, %v2496
      %vm2541 = vcmp.eq.s32.totalorder %v869, %v2492
      %vm2542 = vcmp.eq.s32.totalorder %v869, %v2496
      %vm2543 = vcmp.eq.s32.totalorder %v872, %v2492
      %vm2544 = vcmp.eq.s32.totalorder %v872, %v2496
      %vm2545 = vcmp.eq.s32.totalorder %v875, %v2492
      %vm2546 = vcmp.eq.s32.totalorder %v875, %v2496
      %vm2547 = vcmp.eq.s32.totalorder %v878, %v2492
      %vm2548 = vcmp.eq.s32.totalorder %v878, %v2496
      %vm2549 = vcmp.eq.s32.totalorder %v881, %v2492
      %vm2550 = vcmp.eq.s32.totalorder %v881, %v2496
      %vm2551 = vcmp.eq.s32.totalorder %v884, %v2492
      %vm2552 = vcmp.eq.s32.totalorder %v884, %v2496
      %vm2553 = vcmp.eq.s32.totalorder %v887, %v2492
      %vm2554 = vcmp.eq.s32.totalorder %v887, %v2496
      %vm2555 = vcmp.eq.s32.totalorder %v890, %v2492
      %vm2556 = vcmp.eq.s32.totalorder %v890, %v2496
      %vm2557 = vcmp.eq.s32.totalorder %v893, %v2492
      %vm2558 = vcmp.eq.s32.totalorder %v893, %v2496
      %vm2559 = vcmp.eq.s32.totalorder %v896, %v2492
      %vm2560 = vcmp.eq.s32.totalorder %v896, %v2496
      %v2562 = vlaneseq
      %v2563 = vshrl.u32 %v2562, 7
      %v2564 = vsub.s32 0, %v2563
      %v2565 = vrot.slane %v2412, %v2564
      %v2566 = vlaneseq
      %v2567 = vshrl.u32 %v2566, 7
      %v2568 = vsub.s32 1, %v2567
      %v2569 = vrot.slane %v2412, %v2568
      %v2572 = vsel %vm2497, %v2565, 0.0
      %v2573 = vsel %vm2498, %v2569, 0.0
      %v2574 = vsel %vm2499, %v2565, 0.0
      %v2575 = vsel %vm2500, %v2569, 0.0
      %v2576 = vsel %vm2501, %v2565, 0.0
      %v2577 = vsel %vm2502, %v2569, 0.0
      %v2578 = vsel %vm2503, %v2565, 0.0
      %v2579 = vsel %vm2504, %v2569, 0.0
      %v2580 = vsel %vm2505, %v2565, 0.0
      %v2581 = vsel %vm2506, %v2569, 0.0
      %v2582 = vsel %vm2507, %v2565, 0.0
      %v2583 = vsel %vm2508, %v2569, 0.0
      %v2584 = vsel %vm2509, %v2565, 0.0
      %v2585 = vsel %vm2510, %v2569, 0.0
      %v2586 = vsel %vm2511, %v2565, 0.0
      %v2587 = vsel %vm2512, %v2569, 0.0
      %v2588 = vsel %vm2513, %v2565, 0.0
      %v2589 = vsel %vm2514, %v2569, 0.0
      %v2590 = vsel %vm2515, %v2565, 0.0
      %v2591 = vsel %vm2516, %v2569, 0.0
      %v2592 = vsel %vm2517, %v2565, 0.0
      %v2593 = vsel %vm2518, %v2569, 0.0
      %v2594 = vsel %vm2519, %v2565, 0.0
      %v2595 = vsel %vm2520, %v2569, 0.0
      %v2596 = vsel %vm2521, %v2565, 0.0
      %v2597 = vsel %vm2522, %v2569, 0.0
      %v2598 = vsel %vm2523, %v2565, 0.0
      %v2599 = vsel %vm2524, %v2569, 0.0
      %v2600 = vsel %vm2525, %v2565, 0.0
      %v2601 = vsel %vm2526, %v2569, 0.0
      %v2602 = vsel %vm2527, %v2565, 0.0
      %v2603 = vsel %vm2528, %v2569, 0.0
      %v2604 = vsel %vm2529, %v2565, 0.0
      %v2605 = vsel %vm2530, %v2569, 0.0
      %v2606 = vsel %vm2531, %v2565, 0.0
      %v2607 = vsel %vm2532, %v2569, 0.0
      %v2608 = vsel %vm2533, %v2565, 0.0
      %v2609 = vsel %vm2534, %v2569, 0.0
      %v2610 = vsel %vm2535, %v2565, 0.0
      %v2611 = vsel %vm2536, %v2569, 0.0
      %v2612 = vsel %vm2537, %v2565, 0.0
      %v2613 = vsel %vm2538, %v2569, 0.0
      %v2614 = vsel %vm2539, %v2565, 0.0
      %v2615 = vsel %vm2540, %v2569, 0.0
      %v2616 = vsel %vm2541, %v2565, 0.0
      %v2617 = vsel %vm2542, %v2569, 0.0
      %v2618 = vsel %vm2543, %v2565, 0.0
      %v2619 = vsel %vm2544, %v2569, 0.0
      %v2620 = vsel %vm2545, %v2565, 0.0
      %v2621 = vsel %vm2546, %v2569, 0.0
      %v2622 = vsel %vm2547, %v2565, 0.0
      %v2623 = vsel %vm2548, %v2569, 0.0
      %v2624 = vsel %vm2549, %v2565, 0.0
      %v2625 = vsel %vm2550, %v2569, 0.0
      %v2626 = vsel %vm2551, %v2565, 0.0
      %v2627 = vsel %vm2552, %v2569, 0.0
      %v2628 = vsel %vm2553, %v2565, 0.0
      %v2629 = vsel %vm2554, %v2569, 0.0
      %v2630 = vsel %vm2555, %v2565, 0.0
      %v2631 = vsel %vm2556, %v2569, 0.0
      %v2632 = vsel %vm2557, %v2565, 0.0
      %v2633 = vsel %vm2558, %v2569, 0.0
      %v2634 = vsel %vm2559, %v2565, 0.0
      %v2635 = vsel %vm2560, %v2569, 0.0
      %v2637 = vlaneseq
      %v2638 = vshrl.u32 %v2637, 7
      %v2639 = vsub.s32 0, %v2638
      %v2640 = vrot.slane %v2487, %v2639
      %v2641 = vlaneseq
      %v2642 = vshrl.u32 %v2641, 7
      %v2643 = vsub.s32 1, %v2642
      %v2644 = vrot.slane %v2487, %v2643
      %v2647 = vsel %vm2423, %v2640, %v2572
      %v2648 = vsel %vm2424, %v2644, %v2573
      %v2649 = vsel %vm2425, %v2640, %v2574
      %v2650 = vsel %vm2426, %v2644, %v2575
      %v2651 = vsel %vm2427, %v2640, %v2576
      %v2652 = vsel %vm2428, %v2644, %v2577
      %v2653 = vsel %vm2429, %v2640, %v2578
      %v2654 = vsel %vm2430, %v2644, %v2579
      %v2655 = vsel %vm2431, %v2640, %v2580
      %v2656 = vsel %vm2432, %v2644, %v2581
      %v2657 = vsel %vm2433, %v2640, %v2582
      %v2658 = vsel %vm2434, %v2644, %v2583
      %v2659 = vsel %vm2435, %v2640, %v2584
      %v2660 = vsel %vm2436, %v2644, %v2585
      %v2661 = vsel %vm2437, %v2640, %v2586
      %v2662 = vsel %vm2438, %v2644, %v2587
      %v2663 = vsel %vm2439, %v2640, %v2588
      %v2664 = vsel %vm2440, %v2644, %v2589
      %v2665 = vsel %vm2441, %v2640, %v2590
      %v2666 = vsel %vm2442, %v2644, %v2591
      %v2667 = vsel %vm2443, %v2640, %v2592
      %v2668 = vsel %vm2444, %v2644, %v2593
      %v2669 = vsel %vm2445, %v2640, %v2594
      %v2670 = vsel %vm2446, %v2644, %v2595
      %v2671 = vsel %vm2447, %v2640, %v2596
      %v2672 = vsel %vm2448, %v2644, %v2597
      %v2673 = vsel %vm2449, %v2640, %v2598
      %v2674 = vsel %vm2450, %v2644, %v2599
      %v2675 = vsel %vm2451, %v2640, %v2600
      %v2676 = vsel %vm2452, %v2644, %v2601
      %v2677 = vsel %vm2453, %v2640, %v2602
      %v2678 = vsel %vm2454, %v2644, %v2603
      %v2679 = vsel %vm2455, %v2640, %v2604
      %v2680 = vsel %vm2456, %v2644, %v2605
      %v2681 = vsel %vm2457, %v2640, %v2606
      %v2682 = vsel %vm2458, %v2644, %v2607
      %v2683 = vsel %vm2459, %v2640, %v2608
      %v2684 = vsel %vm2460, %v2644, %v2609
      %v2685 = vsel %vm2461, %v2640, %v2610
      %v2686 = vsel %vm2462, %v2644, %v2611
      %v2687 = vsel %vm2463, %v2640, %v2612
      %v2688 = vsel %vm2464, %v2644, %v2613
      %v2689 = vsel %vm2465, %v2640, %v2614
      %v2690 = vsel %vm2466, %v2644, %v2615
      %v2691 = vsel %vm2467, %v2640, %v2616
      %v2692 = vsel %vm2468, %v2644, %v2617
      %v2693 = vsel %vm2469, %v2640, %v2618
      %v2694 = vsel %vm2470, %v2644, %v2619
      %v2695 = vsel %vm2471, %v2640, %v2620
      %v2696 = vsel %vm2472, %v2644, %v2621
      %v2697 = vsel %vm2473, %v2640, %v2622
      %v2698 = vsel %vm2474, %v2644, %v2623
      %v2699 = vsel %vm2475, %v2640, %v2624
      %v2700 = vsel %vm2476, %v2644, %v2625
      %v2701 = vsel %vm2477, %v2640, %v2626
      %v2702 = vsel %vm2478, %v2644, %v2627
      %v2703 = vsel %vm2479, %v2640, %v2628
      %v2704 = vsel %vm2480, %v2644, %v2629
      %v2705 = vsel %vm2481, %v2640, %v2630
      %v2706 = vsel %vm2482, %v2644, %v2631
      %v2707 = vsel %vm2483, %v2640, %v2632
      %v2708 = vsel %vm2484, %v2644, %v2633
      %v2709 = vsel %vm2485, %v2640, %v2634
      %v2710 = vsel %vm2486, %v2644, %v2635
      %v2711 = vlaneseq
      %v2712 = vshrl.u32 %v2711, 7
      %v2713 = vsub.s32 0, %v2712
      %v2714 = vrot.slane %v2413, %v2713
      %v2715 = vlaneseq
      %v2716 = vshrl.u32 %v2715, 7
      %v2717 = vsub.s32 1, %v2716
      %v2718 = vrot.slane %v2413, %v2717
      %vm2719 = vcmp.eq.s32.totalorder %v1195, %v2714
      %vm2720 = vcmp.eq.s32.totalorder %v1195, %v2718
      %vm2721 = vcmp.eq.s32.totalorder %v1198, %v2714
      %vm2722 = vcmp.eq.s32.totalorder %v1198, %v2718
      %vm2723 = vcmp.eq.s32.totalorder %v1201, %v2714
      %vm2724 = vcmp.eq.s32.totalorder %v1201, %v2718
      %vm2725 = vcmp.eq.s32.totalorder %v1204, %v2714
      %vm2726 = vcmp.eq.s32.totalorder %v1204, %v2718
      %vm2727 = vcmp.eq.s32.totalorder %v1207, %v2714
      %vm2728 = vcmp.eq.s32.totalorder %v1207, %v2718
      %vm2729 = vcmp.eq.s32.totalorder %v1210, %v2714
      %vm2730 = vcmp.eq.s32.totalorder %v1210, %v2718
      %vm2731 = vcmp.eq.s32.totalorder %v1213, %v2714
      %vm2732 = vcmp.eq.s32.totalorder %v1213, %v2718
      %vm2733 = vcmp.eq.s32.totalorder %v1216, %v2714
      %vm2734 = vcmp.eq.s32.totalorder %v1216, %v2718
      %vm2735 = vcmp.eq.s32.totalorder %v1219, %v2714
      %vm2736 = vcmp.eq.s32.totalorder %v1219, %v2718
      %vm2737 = vcmp.eq.s32.totalorder %v1222, %v2714
      %vm2738 = vcmp.eq.s32.totalorder %v1222, %v2718
      %vm2739 = vcmp.eq.s32.totalorder %v1225, %v2714
      %vm2740 = vcmp.eq.s32.totalorder %v1225, %v2718
      %vm2741 = vcmp.eq.s32.totalorder %v1228, %v2714
      %vm2742 = vcmp.eq.s32.totalorder %v1228, %v2718
      %vm2743 = vcmp.eq.s32.totalorder %v1231, %v2714
      %vm2744 = vcmp.eq.s32.totalorder %v1231, %v2718
      %vm2745 = vcmp.eq.s32.totalorder %v1234, %v2714
      %vm2746 = vcmp.eq.s32.totalorder %v1234, %v2718
      %vm2747 = vcmp.eq.s32.totalorder %v1237, %v2714
      %vm2748 = vcmp.eq.s32.totalorder %v1237, %v2718
      %vm2749 = vcmp.eq.s32.totalorder %v1240, %v2714
      %vm2750 = vcmp.eq.s32.totalorder %v1240, %v2718
      %vm2751 = vcmp.eq.s32.totalorder %v1243, %v2714
      %vm2752 = vcmp.eq.s32.totalorder %v1243, %v2718
      %vm2753 = vcmp.eq.s32.totalorder %v1246, %v2714
      %vm2754 = vcmp.eq.s32.totalorder %v1246, %v2718
      %vm2755 = vcmp.eq.s32.totalorder %v1249, %v2714
      %vm2756 = vcmp.eq.s32.totalorder %v1249, %v2718
      %vm2757 = vcmp.eq.s32.totalorder %v1252, %v2714
      %vm2758 = vcmp.eq.s32.totalorder %v1252, %v2718
      %vm2759 = vcmp.eq.s32.totalorder %v1255, %v2714
      %vm2760 = vcmp.eq.s32.totalorder %v1255, %v2718
      %vm2761 = vcmp.eq.s32.totalorder %v1258, %v2714
      %vm2762 = vcmp.eq.s32.totalorder %v1258, %v2718
      %vm2763 = vcmp.eq.s32.totalorder %v1261, %v2714
      %vm2764 = vcmp.eq.s32.totalorder %v1261, %v2718
      %vm2765 = vcmp.eq.s32.totalorder %v1264, %v2714
      %vm2766 = vcmp.eq.s32.totalorder %v1264, %v2718
      %vm2767 = vcmp.eq.s32.totalorder %v1267, %v2714
      %vm2768 = vcmp.eq.s32.totalorder %v1267, %v2718
      %vm2769 = vcmp.eq.s32.totalorder %v1270, %v2714
      %vm2770 = vcmp.eq.s32.totalorder %v1270, %v2718
      %vm2771 = vcmp.eq.s32.totalorder %v1273, %v2714
      %vm2772 = vcmp.eq.s32.totalorder %v1273, %v2718
      %vm2773 = vcmp.eq.s32.totalorder %v1276, %v2714
      %vm2774 = vcmp.eq.s32.totalorder %v1276, %v2718
      %vm2775 = vcmp.eq.s32.totalorder %v1279, %v2714
      %vm2776 = vcmp.eq.s32.totalorder %v1279, %v2718
      %vm2777 = vcmp.eq.s32.totalorder %v1282, %v2714
      %vm2778 = vcmp.eq.s32.totalorder %v1282, %v2718
      %vm2779 = vcmp.eq.s32.totalorder %v1285, %v2714
      %vm2780 = vcmp.eq.s32.totalorder %v1285, %v2718
      %vm2781 = vcmp.eq.s32.totalorder %v1288, %v2714
      %vm2782 = vcmp.eq.s32.totalorder %v1288, %v2718
      %v2783 = vsub.f32 1.0, %v2411
      %v2784 = vadd.s32 %v2413, 1
      %v2785 = vlaneseq
      %v2786 = vshrl.u32 %v2785, 7
      %v2787 = vsub.s32 0, %v2786
      %v2788 = vrot.slane %v2784, %v2787
      %v2789 = vlaneseq
      %v2790 = vshrl.u32 %v2789, 7
      %v2791 = vsub.s32 1, %v2790
      %v2792 = vrot.slane %v2784, %v2791
      %vm2793 = vcmp.eq.s32.totalorder %v1195, %v2788
      %vm2794 = vcmp.eq.s32.totalorder %v1195, %v2792
      %vm2795 = vcmp.eq.s32.totalorder %v1198, %v2788
      %vm2796 = vcmp.eq.s32.totalorder %v1198, %v2792
      %vm2797 = vcmp.eq.s32.totalorder %v1201, %v2788
      %vm2798 = vcmp.eq.s32.totalorder %v1201, %v2792
      %vm2799 = vcmp.eq.s32.totalorder %v1204, %v2788
      %vm2800 = vcmp.eq.s32.totalorder %v1204, %v2792
      %vm2801 = vcmp.eq.s32.totalorder %v1207, %v2788
      %vm2802 = vcmp.eq.s32.totalorder %v1207, %v2792
      %vm2803 = vcmp.eq.s32.totalorder %v1210, %v2788
      %vm2804 = vcmp.eq.s32.totalorder %v1210, %v2792
      %vm2805 = vcmp.eq.s32.totalorder %v1213, %v2788
      %vm2806 = vcmp.eq.s32.totalorder %v1213, %v2792
      %vm2807 = vcmp.eq.s32.totalorder %v1216, %v2788
      %vm2808 = vcmp.eq.s32.totalorder %v1216, %v2792
      %vm2809 = vcmp.eq.s32.totalorder %v1219, %v2788
      %vm2810 = vcmp.eq.s32.totalorder %v1219, %v2792
      %vm2811 = vcmp.eq.s32.totalorder %v1222, %v2788
      %vm2812 = vcmp.eq.s32.totalorder %v1222, %v2792
      %vm2813 = vcmp.eq.s32.totalorder %v1225, %v2788
      %vm2814 = vcmp.eq.s32.totalorder %v1225, %v2792
      %vm2815 = vcmp.eq.s32.totalorder %v1228, %v2788
      %vm2816 = vcmp.eq.s32.totalorder %v1228, %v2792
      %vm2817 = vcmp.eq.s32.totalorder %v1231, %v2788
      %vm2818 = vcmp.eq.s32.totalorder %v1231, %v2792
      %vm2819 = vcmp.eq.s32.totalorder %v1234, %v2788
      %vm2820 = vcmp.eq.s32.totalorder %v1234, %v2792
      %vm2821 = vcmp.eq.s32.totalorder %v1237, %v2788
      %vm2822 = vcmp.eq.s32.totalorder %v1237, %v2792
      %vm2823 = vcmp.eq.s32.totalorder %v1240, %v2788
      %vm2824 = vcmp.eq.s32.totalorder %v1240, %v2792
      %vm2825 = vcmp.eq.s32.totalorder %v1243, %v2788
      %vm2826 = vcmp.eq.s32.totalorder %v1243, %v2792
      %vm2827 = vcmp.eq.s32.totalorder %v1246, %v2788
      %vm2828 = vcmp.eq.s32.totalorder %v1246, %v2792
      %vm2829 = vcmp.eq.s32.totalorder %v1249, %v2788
      %vm2830 = vcmp.eq.s32.totalorder %v1249, %v2792
      %vm2831 = vcmp.eq.s32.totalorder %v1252, %v2788
      %vm2832 = vcmp.eq.s32.totalorder %v1252, %v2792
      %vm2833 = vcmp.eq.s32.totalorder %v1255, %v2788
      %vm2834 = vcmp.eq.s32.totalorder %v1255, %v2792
      %vm2835 = vcmp.eq.s32.totalorder %v1258, %v2788
      %vm2836 = vcmp.eq.s32.totalorder %v1258, %v2792
      %vm2837 = vcmp.eq.s32.totalorder %v1261, %v2788
      %vm2838 = vcmp.eq.s32.totalorder %v1261, %v2792
      %vm2839 = vcmp.eq.s32.totalorder %v1264, %v2788
      %vm2840 = vcmp.eq.s32.totalorder %v1264, %v2792
      %vm2841 = vcmp.eq.s32.totalorder %v1267, %v2788
      %vm2842 = vcmp.eq.s32.totalorder %v1267, %v2792
      %vm2843 = vcmp.eq.s32.totalorder %v1270, %v2788
      %vm2844 = vcmp.eq.s32.totalorder %v1270, %v2792
      %vm2845 = vcmp.eq.s32.totalorder %v1273, %v2788
      %vm2846 = vcmp.eq.s32.totalorder %v1273, %v2792
      %vm2847 = vcmp.eq.s32.totalorder %v1276, %v2788
      %vm2848 = vcmp.eq.s32.totalorder %v1276, %v2792
      %vm2849 = vcmp.eq.s32.totalorder %v1279, %v2788
      %vm2850 = vcmp.eq.s32.totalorder %v1279, %v2792
      %vm2851 = vcmp.eq.s32.totalorder %v1282, %v2788
      %vm2852 = vcmp.eq.s32.totalorder %v1282, %v2792
      %vm2853 = vcmp.eq.s32.totalorder %v1285, %v2788
      %vm2854 = vcmp.eq.s32.totalorder %v1285, %v2792
      %vm2855 = vcmp.eq.s32.totalorder %v1288, %v2788
      %vm2856 = vcmp.eq.s32.totalorder %v1288, %v2792
      %v2858 = vlaneseq
      %v2859 = vshrl.u32 %v2858, 7
      %v2860 = vsub.s32 0, %v2859
      %v2861 = vrot.slane %v2411, %v2860
      %v2862 = vlaneseq
      %v2863 = vshrl.u32 %v2862, 7
      %v2864 = vsub.s32 1, %v2863
      %v2865 = vrot.slane %v2411, %v2864
      %v2868 = vsel %vm2793, %v2861, 0.0
      %v2869 = vsel %vm2794, %v2865, 0.0
      %v2870 = vsel %vm2795, %v2861, 0.0
      %v2871 = vsel %vm2796, %v2865, 0.0
      %v2872 = vsel %vm2797, %v2861, 0.0
      %v2873 = vsel %vm2798, %v2865, 0.0
      %v2874 = vsel %vm2799, %v2861, 0.0
      %v2875 = vsel %vm2800, %v2865, 0.0
      %v2876 = vsel %vm2801, %v2861, 0.0
      %v2877 = vsel %vm2802, %v2865, 0.0
      %v2878 = vsel %vm2803, %v2861, 0.0
      %v2879 = vsel %vm2804, %v2865, 0.0
      %v2880 = vsel %vm2805, %v2861, 0.0
      %v2881 = vsel %vm2806, %v2865, 0.0
      %v2882 = vsel %vm2807, %v2861, 0.0
      %v2883 = vsel %vm2808, %v2865, 0.0
      %v2884 = vsel %vm2809, %v2861, 0.0
      %v2885 = vsel %vm2810, %v2865, 0.0
      %v2886 = vsel %vm2811, %v2861, 0.0
      %v2887 = vsel %vm2812, %v2865, 0.0
      %v2888 = vsel %vm2813, %v2861, 0.0
      %v2889 = vsel %vm2814, %v2865, 0.0
      %v2890 = vsel %vm2815, %v2861, 0.0
      %v2891 = vsel %vm2816, %v2865, 0.0
      %v2892 = vsel %vm2817, %v2861, 0.0
      %v2893 = vsel %vm2818, %v2865, 0.0
      %v2894 = vsel %vm2819, %v2861, 0.0
      %v2895 = vsel %vm2820, %v2865, 0.0
      %v2896 = vsel %vm2821, %v2861, 0.0
      %v2897 = vsel %vm2822, %v2865, 0.0
      %v2898 = vsel %vm2823, %v2861, 0.0
      %v2899 = vsel %vm2824, %v2865, 0.0
      %v2900 = vsel %vm2825, %v2861, 0.0
      %v2901 = vsel %vm2826, %v2865, 0.0
      %v2902 = vsel %vm2827, %v2861, 0.0
      %v2903 = vsel %vm2828, %v2865, 0.0
      %v2904 = vsel %vm2829, %v2861, 0.0
      %v2905 = vsel %vm2830, %v2865, 0.0
      %v2906 = vsel %vm2831, %v2861, 0.0
      %v2907 = vsel %vm2832, %v2865, 0.0
      %v2908 = vsel %vm2833, %v2861, 0.0
      %v2909 = vsel %vm2834, %v2865, 0.0
      %v2910 = vsel %vm2835, %v2861, 0.0
      %v2911 = vsel %vm2836, %v2865, 0.0
      %v2912 = vsel %vm2837, %v2861, 0.0
      %v2913 = vsel %vm2838, %v2865, 0.0
      %v2914 = vsel %vm2839, %v2861, 0.0
      %v2915 = vsel %vm2840, %v2865, 0.0
      %v2916 = vsel %vm2841, %v2861, 0.0
      %v2917 = vsel %vm2842, %v2865, 0.0
      %v2918 = vsel %vm2843, %v2861, 0.0
      %v2919 = vsel %vm2844, %v2865, 0.0
      %v2920 = vsel %vm2845, %v2861, 0.0
      %v2921 = vsel %vm2846, %v2865, 0.0
      %v2922 = vsel %vm2847, %v2861, 0.0
      %v2923 = vsel %vm2848, %v2865, 0.0
      %v2924 = vsel %vm2849, %v2861, 0.0
      %v2925 = vsel %vm2850, %v2865, 0.0
      %v2926 = vsel %vm2851, %v2861, 0.0
      %v2927 = vsel %vm2852, %v2865, 0.0
      %v2928 = vsel %vm2853, %v2861, 0.0
      %v2929 = vsel %vm2854, %v2865, 0.0
      %v2930 = vsel %vm2855, %v2861, 0.0
      %v2931 = vsel %vm2856, %v2865, 0.0
      %v2933 = vlaneseq
      %v2934 = vshrl.u32 %v2933, 7
      %v2935 = vsub.s32 0, %v2934
      %v2936 = vrot.slane %v2783, %v2935
      %v2937 = vlaneseq
      %v2938 = vshrl.u32 %v2937, 7
      %v2939 = vsub.s32 1, %v2938
      %v2940 = vrot.slane %v2783, %v2939
      %v2943 = vsel %vm2719, %v2936, %v2868
      %v2944 = vsel %vm2720, %v2940, %v2869
      %v2945 = vsel %vm2721, %v2936, %v2870
      %v2946 = vsel %vm2722, %v2940, %v2871
      %v2947 = vsel %vm2723, %v2936, %v2872
      %v2948 = vsel %vm2724, %v2940, %v2873
      %v2949 = vsel %vm2725, %v2936, %v2874
      %v2950 = vsel %vm2726, %v2940, %v2875
      %v2951 = vsel %vm2727, %v2936, %v2876
      %v2952 = vsel %vm2728, %v2940, %v2877
      %v2953 = vsel %vm2729, %v2936, %v2878
      %v2954 = vsel %vm2730, %v2940, %v2879
      %v2955 = vsel %vm2731, %v2936, %v2880
      %v2956 = vsel %vm2732, %v2940, %v2881
      %v2957 = vsel %vm2733, %v2936, %v2882
      %v2958 = vsel %vm2734, %v2940, %v2883
      %v2959 = vsel %vm2735, %v2936, %v2884
      %v2960 = vsel %vm2736, %v2940, %v2885
      %v2961 = vsel %vm2737, %v2936, %v2886
      %v2962 = vsel %vm2738, %v2940, %v2887
      %v2963 = vsel %vm2739, %v2936, %v2888
      %v2964 = vsel %vm2740, %v2940, %v2889
      %v2965 = vsel %vm2741, %v2936, %v2890
      %v2966 = vsel %vm2742, %v2940, %v2891
      %v2967 = vsel %vm2743, %v2936, %v2892
      %v2968 = vsel %vm2744, %v2940, %v2893
      %v2969 = vsel %vm2745, %v2936, %v2894
      %v2970 = vsel %vm2746, %v2940, %v2895
      %v2971 = vsel %vm2747, %v2936, %v2896
      %v2972 = vsel %vm2748, %v2940, %v2897
      %v2973 = vsel %vm2749, %v2936, %v2898
      %v2974 = vsel %vm2750, %v2940, %v2899
      %v2975 = vsel %vm2751, %v2936, %v2900
      %v2976 = vsel %vm2752, %v2940, %v2901
      %v2977 = vsel %vm2753, %v2936, %v2902
      %v2978 = vsel %vm2754, %v2940, %v2903
      %v2979 = vsel %vm2755, %v2936, %v2904
      %v2980 = vsel %vm2756, %v2940, %v2905
      %v2981 = vsel %vm2757, %v2936, %v2906
      %v2982 = vsel %vm2758, %v2940, %v2907
      %v2983 = vsel %vm2759, %v2936, %v2908
      %v2984 = vsel %vm2760, %v2940, %v2909
      %v2985 = vsel %vm2761, %v2936, %v2910
      %v2986 = vsel %vm2762, %v2940, %v2911
      %v2987 = vsel %vm2763, %v2936, %v2912
      %v2988 = vsel %vm2764, %v2940, %v2913
      %v2989 = vsel %vm2765, %v2936, %v2914
      %v2990 = vsel %vm2766, %v2940, %v2915
      %v2991 = vsel %vm2767, %v2936, %v2916
      %v2992 = vsel %vm2768, %v2940, %v2917
      %v2993 = vsel %vm2769, %v2936, %v2918
      %v2994 = vsel %vm2770, %v2940, %v2919
      %v2995 = vsel %vm2771, %v2936, %v2920
      %v2996 = vsel %vm2772, %v2940, %v2921
      %v2997 = vsel %vm2773, %v2936, %v2922
      %v2998 = vsel %vm2774, %v2940, %v2923
      %v2999 = vsel %vm2775, %v2936, %v2924
      %v3000 = vsel %vm2776, %v2940, %v2925
      %v3001 = vsel %vm2777, %v2936, %v2926
      %v3002 = vsel %vm2778, %v2940, %v2927
      %v3003 = vsel %vm2779, %v2936, %v2928
      %v3004 = vsel %vm2780, %v2940, %v2929
      %v3005 = vsel %vm2781, %v2936, %v2930
      %v3006 = vsel %vm2782, %v2940, %v2931
      %v3007 = vmul.f32 %v2647, %v2943
      %v3008 = vmul.f32 %v2648, %v2944
      %v3009 = vmul.f32 %v2649, %v2945
      %v3010 = vmul.f32 %v2650, %v2946
      %v3011 = vmul.f32 %v2651, %v2947
      %v3012 = vmul.f32 %v2652, %v2948
      %v3013 = vmul.f32 %v2653, %v2949
      %v3014 = vmul.f32 %v2654, %v2950
      %v3015 = vmul.f32 %v2655, %v2951
      %v3016 = vmul.f32 %v2656, %v2952
      %v3017 = vmul.f32 %v2657, %v2953
      %v3018 = vmul.f32 %v2658, %v2954
      %v3019 = vmul.f32 %v2659, %v2955
      %v3020 = vmul.f32 %v2660, %v2956
      %v3021 = vmul.f32 %v2661, %v2957
      %v3022 = vmul.f32 %v2662, %v2958
      %v3023 = vmul.f32 %v2663, %v2959
      %v3024 = vmul.f32 %v2664, %v2960
      %v3025 = vmul.f32 %v2665, %v2961
      %v3026 = vmul.f32 %v2666, %v2962
      %v3027 = vmul.f32 %v2667, %v2963
      %v3028 = vmul.f32 %v2668, %v2964
      %v3029 = vmul.f32 %v2669, %v2965
      %v3030 = vmul.f32 %v2670, %v2966
      %v3031 = vmul.f32 %v2671, %v2967
      %v3032 = vmul.f32 %v2672, %v2968
      %v3033 = vmul.f32 %v2673, %v2969
      %v3034 = vmul.f32 %v2674, %v2970
      %v3035 = vmul.f32 %v2675, %v2971
      %v3036 = vmul.f32 %v2676, %v2972
      %v3037 = vmul.f32 %v2677, %v2973
      %v3038 = vmul.f32 %v2678, %v2974
      %v3039 = vmul.f32 %v2679, %v2975
      %v3040 = vmul.f32 %v2680, %v2976
      %v3041 = vmul.f32 %v2681, %v2977
      %v3042 = vmul.f32 %v2682, %v2978
      %v3043 = vmul.f32 %v2683, %v2979
      %v3044 = vmul.f32 %v2684, %v2980
      %v3045 = vmul.f32 %v2685, %v2981
      %v3046 = vmul.f32 %v2686, %v2982
      %v3047 = vmul.f32 %v2687, %v2983
      %v3048 = vmul.f32 %v2688, %v2984
      %v3049 = vmul.f32 %v2689, %v2985
      %v3050 = vmul.f32 %v2690, %v2986
      %v3051 = vmul.f32 %v2691, %v2987
      %v3052 = vmul.f32 %v2692, %v2988
      %v3053 = vmul.f32 %v2693, %v2989
      %v3054 = vmul.f32 %v2694, %v2990
      %v3055 = vmul.f32 %v2695, %v2991
      %v3056 = vmul.f32 %v2696, %v2992
      %v3057 = vmul.f32 %v2697, %v2993
      %v3058 = vmul.f32 %v2698, %v2994
      %v3059 = vmul.f32 %v2699, %v2995
      %v3060 = vmul.f32 %v2700, %v2996
      %v3061 = vmul.f32 %v2701, %v2997
      %v3062 = vmul.f32 %v2702, %v2998
      %v3063 = vmul.f32 %v2703, %v2999
      %v3064 = vmul.f32 %v2704, %v3000
      %v3065 = vmul.f32 %v2705, %v3001
      %v3066 = vmul.f32 %v2706, %v3002
      %v3067 = vmul.f32 %v2707, %v3003
      %v3068 = vmul.f32 %v2708, %v3004
      %v3069 = vmul.f32 %v2709, %v3005
      %v3070 = vmul.f32 %v2710, %v3006
      %v3071 = vpack.c.bf16 %v3009, %v3007
      %v3072 = vpack.c.bf16 %v3010, %v3008
      %v3073 = vpack.c.bf16 %v3013, %v3011
      %v3074 = vpack.c.bf16 %v3014, %v3012
      %v3075 = vpack.c.bf16 %v3017, %v3015
      %v3076 = vpack.c.bf16 %v3018, %v3016
      %v3077 = vpack.c.bf16 %v3021, %v3019
      %v3078 = vpack.c.bf16 %v3022, %v3020
      %v3079 = vpack.c.bf16 %v3025, %v3023
      %v3080 = vpack.c.bf16 %v3026, %v3024
      %v3081 = vpack.c.bf16 %v3029, %v3027
      %v3082 = vpack.c.bf16 %v3030, %v3028
      %v3083 = vpack.c.bf16 %v3033, %v3031
      %v3084 = vpack.c.bf16 %v3034, %v3032
      %v3085 = vpack.c.bf16 %v3037, %v3035
      %v3086 = vpack.c.bf16 %v3038, %v3036
      %v3087 = vpack.c.bf16 %v3041, %v3039
      %v3088 = vpack.c.bf16 %v3042, %v3040
      %v3089 = vpack.c.bf16 %v3045, %v3043
      %v3090 = vpack.c.bf16 %v3046, %v3044
      %v3091 = vpack.c.bf16 %v3049, %v3047
      %v3092 = vpack.c.bf16 %v3050, %v3048
      %v3093 = vpack.c.bf16 %v3053, %v3051
      %v3094 = vpack.c.bf16 %v3054, %v3052
      %v3095 = vpack.c.bf16 %v3057, %v3055
      %v3096 = vpack.c.bf16 %v3058, %v3056
      %v3097 = vpack.c.bf16 %v3061, %v3059
      %v3098 = vpack.c.bf16 %v3062, %v3060
      %v3099 = vpack.c.bf16 %v3065, %v3063
      %v3100 = vpack.c.bf16 %v3066, %v3064
      %v3101 = vpack.c.bf16 %v3069, %v3067
      %v3102 = vpack.c.bf16 %v3070, %v3068
      %v3103 = vcombine.high %v1688, %v1688
      %v3105 = vadd.f32 %v720, %v3103
      %v3106 = vmax.f32 %v3105, 0.0
      %v3107 = vmin.f32 %v3106, 15.0
      %v3108 = vcombine.high %v1700, %v1700
      %v3110 = vadd.f32 %v722, %v3108
      %v3111 = vmax.f32 %v3110, 0.0
      %v3112 = vmin.f32 %v3111, 15.0
      %v3113 = vfloor.f32 %v3107
      %v3114 = vfloor.f32 %v3112
      %v3115 = vsub.f32 %v3107, %v3113
      %v3116 = vsub.f32 %v3112, %v3114
      %v3117 = vcvt.f32.s32.to.zero.pseudo %v3113
      %v3118 = vcvt.f32.s32.to.zero.pseudo %v3114
      %v3119 = vlaneseq
      %v3120 = vshrl.u32 %v3119, 7
      %v3121 = vsub.s32 0, %v3120
      %v3122 = vrot.slane %v3118, %v3121
      %v3123 = vlaneseq
      %v3124 = vshrl.u32 %v3123, 7
      %v3125 = vsub.s32 1, %v3124
      %v3126 = vrot.slane %v3118, %v3125
      %vm3127 = vcmp.eq.s32.totalorder %v803, %v3122
      %vm3128 = vcmp.eq.s32.totalorder %v803, %v3126
      %vm3129 = vcmp.eq.s32.totalorder %v806, %v3122
      %vm3130 = vcmp.eq.s32.totalorder %v806, %v3126
      %vm3131 = vcmp.eq.s32.totalorder %v809, %v3122
      %vm3132 = vcmp.eq.s32.totalorder %v809, %v3126
      %vm3133 = vcmp.eq.s32.totalorder %v812, %v3122
      %vm3134 = vcmp.eq.s32.totalorder %v812, %v3126
      %vm3135 = vcmp.eq.s32.totalorder %v815, %v3122
      %vm3136 = vcmp.eq.s32.totalorder %v815, %v3126
      %vm3137 = vcmp.eq.s32.totalorder %v818, %v3122
      %vm3138 = vcmp.eq.s32.totalorder %v818, %v3126
      %vm3139 = vcmp.eq.s32.totalorder %v821, %v3122
      %vm3140 = vcmp.eq.s32.totalorder %v821, %v3126
      %vm3141 = vcmp.eq.s32.totalorder %v824, %v3122
      %vm3142 = vcmp.eq.s32.totalorder %v824, %v3126
      %vm3143 = vcmp.eq.s32.totalorder %v827, %v3122
      %vm3144 = vcmp.eq.s32.totalorder %v827, %v3126
      %vm3145 = vcmp.eq.s32.totalorder %v830, %v3122
      %vm3146 = vcmp.eq.s32.totalorder %v830, %v3126
      %vm3147 = vcmp.eq.s32.totalorder %v833, %v3122
      %vm3148 = vcmp.eq.s32.totalorder %v833, %v3126
      %vm3149 = vcmp.eq.s32.totalorder %v836, %v3122
      %vm3150 = vcmp.eq.s32.totalorder %v836, %v3126
      %vm3151 = vcmp.eq.s32.totalorder %v839, %v3122
      %vm3152 = vcmp.eq.s32.totalorder %v839, %v3126
      %vm3153 = vcmp.eq.s32.totalorder %v842, %v3122
      %vm3154 = vcmp.eq.s32.totalorder %v842, %v3126
      %vm3155 = vcmp.eq.s32.totalorder %v845, %v3122
      %vm3156 = vcmp.eq.s32.totalorder %v845, %v3126
      %vm3157 = vcmp.eq.s32.totalorder %v848, %v3122
      %vm3158 = vcmp.eq.s32.totalorder %v848, %v3126
      %vm3159 = vcmp.eq.s32.totalorder %v851, %v3122
      %vm3160 = vcmp.eq.s32.totalorder %v851, %v3126
      %vm3161 = vcmp.eq.s32.totalorder %v854, %v3122
      %vm3162 = vcmp.eq.s32.totalorder %v854, %v3126
      %vm3163 = vcmp.eq.s32.totalorder %v857, %v3122
      %vm3164 = vcmp.eq.s32.totalorder %v857, %v3126
      %vm3165 = vcmp.eq.s32.totalorder %v860, %v3122
      %vm3166 = vcmp.eq.s32.totalorder %v860, %v3126
      %vm3167 = vcmp.eq.s32.totalorder %v863, %v3122
      %vm3168 = vcmp.eq.s32.totalorder %v863, %v3126
      %vm3169 = vcmp.eq.s32.totalorder %v866, %v3122
      %vm3170 = vcmp.eq.s32.totalorder %v866, %v3126
      %vm3171 = vcmp.eq.s32.totalorder %v869, %v3122
      %vm3172 = vcmp.eq.s32.totalorder %v869, %v3126
      %vm3173 = vcmp.eq.s32.totalorder %v872, %v3122
      %vm3174 = vcmp.eq.s32.totalorder %v872, %v3126
      %vm3175 = vcmp.eq.s32.totalorder %v875, %v3122
      %vm3176 = vcmp.eq.s32.totalorder %v875, %v3126
      %vm3177 = vcmp.eq.s32.totalorder %v878, %v3122
      %vm3178 = vcmp.eq.s32.totalorder %v878, %v3126
      %vm3179 = vcmp.eq.s32.totalorder %v881, %v3122
      %vm3180 = vcmp.eq.s32.totalorder %v881, %v3126
      %vm3181 = vcmp.eq.s32.totalorder %v884, %v3122
      %vm3182 = vcmp.eq.s32.totalorder %v884, %v3126
      %vm3183 = vcmp.eq.s32.totalorder %v887, %v3122
      %vm3184 = vcmp.eq.s32.totalorder %v887, %v3126
      %vm3185 = vcmp.eq.s32.totalorder %v890, %v3122
      %vm3186 = vcmp.eq.s32.totalorder %v890, %v3126
      %vm3187 = vcmp.eq.s32.totalorder %v893, %v3122
      %vm3188 = vcmp.eq.s32.totalorder %v893, %v3126
      %vm3189 = vcmp.eq.s32.totalorder %v896, %v3122
      %vm3190 = vcmp.eq.s32.totalorder %v896, %v3126
      %v3191 = vsub.f32 1.0, %v3116
      %v3192 = vadd.s32 %v3118, 1
      %v3193 = vlaneseq
      %v3194 = vshrl.u32 %v3193, 7
      %v3195 = vsub.s32 0, %v3194
      %v3196 = vrot.slane %v3192, %v3195
      %v3197 = vlaneseq
      %v3198 = vshrl.u32 %v3197, 7
      %v3199 = vsub.s32 1, %v3198
      %v3200 = vrot.slane %v3192, %v3199
      %vm3201 = vcmp.eq.s32.totalorder %v803, %v3196
      %vm3202 = vcmp.eq.s32.totalorder %v803, %v3200
      %vm3203 = vcmp.eq.s32.totalorder %v806, %v3196
      %vm3204 = vcmp.eq.s32.totalorder %v806, %v3200
      %vm3205 = vcmp.eq.s32.totalorder %v809, %v3196
      %vm3206 = vcmp.eq.s32.totalorder %v809, %v3200
      %vm3207 = vcmp.eq.s32.totalorder %v812, %v3196
      %vm3208 = vcmp.eq.s32.totalorder %v812, %v3200
      %vm3209 = vcmp.eq.s32.totalorder %v815, %v3196
      %vm3210 = vcmp.eq.s32.totalorder %v815, %v3200
      %vm3211 = vcmp.eq.s32.totalorder %v818, %v3196
      %vm3212 = vcmp.eq.s32.totalorder %v818, %v3200
      %vm3213 = vcmp.eq.s32.totalorder %v821, %v3196
      %vm3214 = vcmp.eq.s32.totalorder %v821, %v3200
      %vm3215 = vcmp.eq.s32.totalorder %v824, %v3196
      %vm3216 = vcmp.eq.s32.totalorder %v824, %v3200
      %vm3217 = vcmp.eq.s32.totalorder %v827, %v3196
      %vm3218 = vcmp.eq.s32.totalorder %v827, %v3200
      %vm3219 = vcmp.eq.s32.totalorder %v830, %v3196
      %vm3220 = vcmp.eq.s32.totalorder %v830, %v3200
      %vm3221 = vcmp.eq.s32.totalorder %v833, %v3196
      %vm3222 = vcmp.eq.s32.totalorder %v833, %v3200
      %vm3223 = vcmp.eq.s32.totalorder %v836, %v3196
      %vm3224 = vcmp.eq.s32.totalorder %v836, %v3200
      %vm3225 = vcmp.eq.s32.totalorder %v839, %v3196
      %vm3226 = vcmp.eq.s32.totalorder %v839, %v3200
      %vm3227 = vcmp.eq.s32.totalorder %v842, %v3196
      %vm3228 = vcmp.eq.s32.totalorder %v842, %v3200
      %vm3229 = vcmp.eq.s32.totalorder %v845, %v3196
      %vm3230 = vcmp.eq.s32.totalorder %v845, %v3200
      %vm3231 = vcmp.eq.s32.totalorder %v848, %v3196
      %vm3232 = vcmp.eq.s32.totalorder %v848, %v3200
      %vm3233 = vcmp.eq.s32.totalorder %v851, %v3196
      %vm3234 = vcmp.eq.s32.totalorder %v851, %v3200
      %vm3235 = vcmp.eq.s32.totalorder %v854, %v3196
      %vm3236 = vcmp.eq.s32.totalorder %v854, %v3200
      %vm3237 = vcmp.eq.s32.totalorder %v857, %v3196
      %vm3238 = vcmp.eq.s32.totalorder %v857, %v3200
      %vm3239 = vcmp.eq.s32.totalorder %v860, %v3196
      %vm3240 = vcmp.eq.s32.totalorder %v860, %v3200
      %vm3241 = vcmp.eq.s32.totalorder %v863, %v3196
      %vm3242 = vcmp.eq.s32.totalorder %v863, %v3200
      %vm3243 = vcmp.eq.s32.totalorder %v866, %v3196
      %vm3244 = vcmp.eq.s32.totalorder %v866, %v3200
      %vm3245 = vcmp.eq.s32.totalorder %v869, %v3196
      %vm3246 = vcmp.eq.s32.totalorder %v869, %v3200
      %vm3247 = vcmp.eq.s32.totalorder %v872, %v3196
      %vm3248 = vcmp.eq.s32.totalorder %v872, %v3200
      %vm3249 = vcmp.eq.s32.totalorder %v875, %v3196
      %vm3250 = vcmp.eq.s32.totalorder %v875, %v3200
      %vm3251 = vcmp.eq.s32.totalorder %v878, %v3196
      %vm3252 = vcmp.eq.s32.totalorder %v878, %v3200
      %vm3253 = vcmp.eq.s32.totalorder %v881, %v3196
      %vm3254 = vcmp.eq.s32.totalorder %v881, %v3200
      %vm3255 = vcmp.eq.s32.totalorder %v884, %v3196
      %vm3256 = vcmp.eq.s32.totalorder %v884, %v3200
      %vm3257 = vcmp.eq.s32.totalorder %v887, %v3196
      %vm3258 = vcmp.eq.s32.totalorder %v887, %v3200
      %vm3259 = vcmp.eq.s32.totalorder %v890, %v3196
      %vm3260 = vcmp.eq.s32.totalorder %v890, %v3200
      %vm3261 = vcmp.eq.s32.totalorder %v893, %v3196
      %vm3262 = vcmp.eq.s32.totalorder %v893, %v3200
      %vm3263 = vcmp.eq.s32.totalorder %v896, %v3196
      %vm3264 = vcmp.eq.s32.totalorder %v896, %v3200
      %v3266 = vlaneseq
      %v3267 = vshrl.u32 %v3266, 7
      %v3268 = vsub.s32 0, %v3267
      %v3269 = vrot.slane %v3116, %v3268
      %v3270 = vlaneseq
      %v3271 = vshrl.u32 %v3270, 7
      %v3272 = vsub.s32 1, %v3271
      %v3273 = vrot.slane %v3116, %v3272
      %v3276 = vsel %vm3201, %v3269, 0.0
      %v3277 = vsel %vm3202, %v3273, 0.0
      %v3278 = vsel %vm3203, %v3269, 0.0
      %v3279 = vsel %vm3204, %v3273, 0.0
      %v3280 = vsel %vm3205, %v3269, 0.0
      %v3281 = vsel %vm3206, %v3273, 0.0
      %v3282 = vsel %vm3207, %v3269, 0.0
      %v3283 = vsel %vm3208, %v3273, 0.0
      %v3284 = vsel %vm3209, %v3269, 0.0
      %v3285 = vsel %vm3210, %v3273, 0.0
      %v3286 = vsel %vm3211, %v3269, 0.0
      %v3287 = vsel %vm3212, %v3273, 0.0
      %v3288 = vsel %vm3213, %v3269, 0.0
      %v3289 = vsel %vm3214, %v3273, 0.0
      %v3290 = vsel %vm3215, %v3269, 0.0
      %v3291 = vsel %vm3216, %v3273, 0.0
      %v3292 = vsel %vm3217, %v3269, 0.0
      %v3293 = vsel %vm3218, %v3273, 0.0
      %v3294 = vsel %vm3219, %v3269, 0.0
      %v3295 = vsel %vm3220, %v3273, 0.0
      %v3296 = vsel %vm3221, %v3269, 0.0
      %v3297 = vsel %vm3222, %v3273, 0.0
      %v3298 = vsel %vm3223, %v3269, 0.0
      %v3299 = vsel %vm3224, %v3273, 0.0
      %v3300 = vsel %vm3225, %v3269, 0.0
      %v3301 = vsel %vm3226, %v3273, 0.0
      %v3302 = vsel %vm3227, %v3269, 0.0
      %v3303 = vsel %vm3228, %v3273, 0.0
      %v3304 = vsel %vm3229, %v3269, 0.0
      %v3305 = vsel %vm3230, %v3273, 0.0
      %v3306 = vsel %vm3231, %v3269, 0.0
      %v3307 = vsel %vm3232, %v3273, 0.0
      %v3308 = vsel %vm3233, %v3269, 0.0
      %v3309 = vsel %vm3234, %v3273, 0.0
      %v3310 = vsel %vm3235, %v3269, 0.0
      %v3311 = vsel %vm3236, %v3273, 0.0
      %v3312 = vsel %vm3237, %v3269, 0.0
      %v3313 = vsel %vm3238, %v3273, 0.0
      %v3314 = vsel %vm3239, %v3269, 0.0
      %v3315 = vsel %vm3240, %v3273, 0.0
      %v3316 = vsel %vm3241, %v3269, 0.0
      %v3317 = vsel %vm3242, %v3273, 0.0
      %v3318 = vsel %vm3243, %v3269, 0.0
      %v3319 = vsel %vm3244, %v3273, 0.0
      %v3320 = vsel %vm3245, %v3269, 0.0
      %v3321 = vsel %vm3246, %v3273, 0.0
      %v3322 = vsel %vm3247, %v3269, 0.0
      %v3323 = vsel %vm3248, %v3273, 0.0
      %v3324 = vsel %vm3249, %v3269, 0.0
      %v3325 = vsel %vm3250, %v3273, 0.0
      %v3326 = vsel %vm3251, %v3269, 0.0
      %v3327 = vsel %vm3252, %v3273, 0.0
      %v3328 = vsel %vm3253, %v3269, 0.0
      %v3329 = vsel %vm3254, %v3273, 0.0
      %v3330 = vsel %vm3255, %v3269, 0.0
      %v3331 = vsel %vm3256, %v3273, 0.0
      %v3332 = vsel %vm3257, %v3269, 0.0
      %v3333 = vsel %vm3258, %v3273, 0.0
      %v3334 = vsel %vm3259, %v3269, 0.0
      %v3335 = vsel %vm3260, %v3273, 0.0
      %v3336 = vsel %vm3261, %v3269, 0.0
      %v3337 = vsel %vm3262, %v3273, 0.0
      %v3338 = vsel %vm3263, %v3269, 0.0
      %v3339 = vsel %vm3264, %v3273, 0.0
      %v3341 = vlaneseq
      %v3342 = vshrl.u32 %v3341, 7
      %v3343 = vsub.s32 0, %v3342
      %v3344 = vrot.slane %v3191, %v3343
      %v3345 = vlaneseq
      %v3346 = vshrl.u32 %v3345, 7
      %v3347 = vsub.s32 1, %v3346
      %v3348 = vrot.slane %v3191, %v3347
      %v3351 = vsel %vm3127, %v3344, %v3276
      %v3352 = vsel %vm3128, %v3348, %v3277
      %v3353 = vsel %vm3129, %v3344, %v3278
      %v3354 = vsel %vm3130, %v3348, %v3279
      %v3355 = vsel %vm3131, %v3344, %v3280
      %v3356 = vsel %vm3132, %v3348, %v3281
      %v3357 = vsel %vm3133, %v3344, %v3282
      %v3358 = vsel %vm3134, %v3348, %v3283
      %v3359 = vsel %vm3135, %v3344, %v3284
      %v3360 = vsel %vm3136, %v3348, %v3285
      %v3361 = vsel %vm3137, %v3344, %v3286
      %v3362 = vsel %vm3138, %v3348, %v3287
      %v3363 = vsel %vm3139, %v3344, %v3288
      %v3364 = vsel %vm3140, %v3348, %v3289
      %v3365 = vsel %vm3141, %v3344, %v3290
      %v3366 = vsel %vm3142, %v3348, %v3291
      %v3367 = vsel %vm3143, %v3344, %v3292
      %v3368 = vsel %vm3144, %v3348, %v3293
      %v3369 = vsel %vm3145, %v3344, %v3294
      %v3370 = vsel %vm3146, %v3348, %v3295
      %v3371 = vsel %vm3147, %v3344, %v3296
      %v3372 = vsel %vm3148, %v3348, %v3297
      %v3373 = vsel %vm3149, %v3344, %v3298
      %v3374 = vsel %vm3150, %v3348, %v3299
      %v3375 = vsel %vm3151, %v3344, %v3300
      %v3376 = vsel %vm3152, %v3348, %v3301
      %v3377 = vsel %vm3153, %v3344, %v3302
      %v3378 = vsel %vm3154, %v3348, %v3303
      %v3379 = vsel %vm3155, %v3344, %v3304
      %v3380 = vsel %vm3156, %v3348, %v3305
      %v3381 = vsel %vm3157, %v3344, %v3306
      %v3382 = vsel %vm3158, %v3348, %v3307
      %v3383 = vsel %vm3159, %v3344, %v3308
      %v3384 = vsel %vm3160, %v3348, %v3309
      %v3385 = vsel %vm3161, %v3344, %v3310
      %v3386 = vsel %vm3162, %v3348, %v3311
      %v3387 = vsel %vm3163, %v3344, %v3312
      %v3388 = vsel %vm3164, %v3348, %v3313
      %v3389 = vsel %vm3165, %v3344, %v3314
      %v3390 = vsel %vm3166, %v3348, %v3315
      %v3391 = vsel %vm3167, %v3344, %v3316
      %v3392 = vsel %vm3168, %v3348, %v3317
      %v3393 = vsel %vm3169, %v3344, %v3318
      %v3394 = vsel %vm3170, %v3348, %v3319
      %v3395 = vsel %vm3171, %v3344, %v3320
      %v3396 = vsel %vm3172, %v3348, %v3321
      %v3397 = vsel %vm3173, %v3344, %v3322
      %v3398 = vsel %vm3174, %v3348, %v3323
      %v3399 = vsel %vm3175, %v3344, %v3324
      %v3400 = vsel %vm3176, %v3348, %v3325
      %v3401 = vsel %vm3177, %v3344, %v3326
      %v3402 = vsel %vm3178, %v3348, %v3327
      %v3403 = vsel %vm3179, %v3344, %v3328
      %v3404 = vsel %vm3180, %v3348, %v3329
      %v3405 = vsel %vm3181, %v3344, %v3330
      %v3406 = vsel %vm3182, %v3348, %v3331
      %v3407 = vsel %vm3183, %v3344, %v3332
      %v3408 = vsel %vm3184, %v3348, %v3333
      %v3409 = vsel %vm3185, %v3344, %v3334
      %v3410 = vsel %vm3186, %v3348, %v3335
      %v3411 = vsel %vm3187, %v3344, %v3336
      %v3412 = vsel %vm3188, %v3348, %v3337
      %v3413 = vsel %vm3189, %v3344, %v3338
      %v3414 = vsel %vm3190, %v3348, %v3339
      %v3415 = vlaneseq
      %v3416 = vshrl.u32 %v3415, 7
      %v3417 = vsub.s32 0, %v3416
      %v3418 = vrot.slane %v3117, %v3417
      %v3419 = vlaneseq
      %v3420 = vshrl.u32 %v3419, 7
      %v3421 = vsub.s32 1, %v3420
      %v3422 = vrot.slane %v3117, %v3421
      %vm3423 = vcmp.eq.s32.totalorder %v1195, %v3418
      %vm3424 = vcmp.eq.s32.totalorder %v1195, %v3422
      %vm3425 = vcmp.eq.s32.totalorder %v1198, %v3418
      %vm3426 = vcmp.eq.s32.totalorder %v1198, %v3422
      %vm3427 = vcmp.eq.s32.totalorder %v1201, %v3418
      %vm3428 = vcmp.eq.s32.totalorder %v1201, %v3422
      %vm3429 = vcmp.eq.s32.totalorder %v1204, %v3418
      %vm3430 = vcmp.eq.s32.totalorder %v1204, %v3422
      %vm3431 = vcmp.eq.s32.totalorder %v1207, %v3418
      %vm3432 = vcmp.eq.s32.totalorder %v1207, %v3422
      %vm3433 = vcmp.eq.s32.totalorder %v1210, %v3418
      %vm3434 = vcmp.eq.s32.totalorder %v1210, %v3422
      %vm3435 = vcmp.eq.s32.totalorder %v1213, %v3418
      %vm3436 = vcmp.eq.s32.totalorder %v1213, %v3422
      %vm3437 = vcmp.eq.s32.totalorder %v1216, %v3418
      %vm3438 = vcmp.eq.s32.totalorder %v1216, %v3422
      %vm3439 = vcmp.eq.s32.totalorder %v1219, %v3418
      %vm3440 = vcmp.eq.s32.totalorder %v1219, %v3422
      %vm3441 = vcmp.eq.s32.totalorder %v1222, %v3418
      %vm3442 = vcmp.eq.s32.totalorder %v1222, %v3422
      %vm3443 = vcmp.eq.s32.totalorder %v1225, %v3418
      %vm3444 = vcmp.eq.s32.totalorder %v1225, %v3422
      %vm3445 = vcmp.eq.s32.totalorder %v1228, %v3418
      %vm3446 = vcmp.eq.s32.totalorder %v1228, %v3422
      %vm3447 = vcmp.eq.s32.totalorder %v1231, %v3418
      %vm3448 = vcmp.eq.s32.totalorder %v1231, %v3422
      %vm3449 = vcmp.eq.s32.totalorder %v1234, %v3418
      %vm3450 = vcmp.eq.s32.totalorder %v1234, %v3422
      %vm3451 = vcmp.eq.s32.totalorder %v1237, %v3418
      %vm3452 = vcmp.eq.s32.totalorder %v1237, %v3422
      %vm3453 = vcmp.eq.s32.totalorder %v1240, %v3418
      %vm3454 = vcmp.eq.s32.totalorder %v1240, %v3422
      %vm3455 = vcmp.eq.s32.totalorder %v1243, %v3418
      %vm3456 = vcmp.eq.s32.totalorder %v1243, %v3422
      %vm3457 = vcmp.eq.s32.totalorder %v1246, %v3418
      %vm3458 = vcmp.eq.s32.totalorder %v1246, %v3422
      %vm3459 = vcmp.eq.s32.totalorder %v1249, %v3418
      %vm3460 = vcmp.eq.s32.totalorder %v1249, %v3422
      %vm3461 = vcmp.eq.s32.totalorder %v1252, %v3418
      %vm3462 = vcmp.eq.s32.totalorder %v1252, %v3422
      %vm3463 = vcmp.eq.s32.totalorder %v1255, %v3418
      %vm3464 = vcmp.eq.s32.totalorder %v1255, %v3422
      %vm3465 = vcmp.eq.s32.totalorder %v1258, %v3418
      %vm3466 = vcmp.eq.s32.totalorder %v1258, %v3422
      %vm3467 = vcmp.eq.s32.totalorder %v1261, %v3418
      %vm3468 = vcmp.eq.s32.totalorder %v1261, %v3422
      %vm3469 = vcmp.eq.s32.totalorder %v1264, %v3418
      %vm3470 = vcmp.eq.s32.totalorder %v1264, %v3422
      %vm3471 = vcmp.eq.s32.totalorder %v1267, %v3418
      %vm3472 = vcmp.eq.s32.totalorder %v1267, %v3422
      %vm3473 = vcmp.eq.s32.totalorder %v1270, %v3418
      %vm3474 = vcmp.eq.s32.totalorder %v1270, %v3422
      %vm3475 = vcmp.eq.s32.totalorder %v1273, %v3418
      %vm3476 = vcmp.eq.s32.totalorder %v1273, %v3422
      %vm3477 = vcmp.eq.s32.totalorder %v1276, %v3418
      %vm3478 = vcmp.eq.s32.totalorder %v1276, %v3422
      %vm3479 = vcmp.eq.s32.totalorder %v1279, %v3418
      %vm3480 = vcmp.eq.s32.totalorder %v1279, %v3422
      %vm3481 = vcmp.eq.s32.totalorder %v1282, %v3418
      %vm3482 = vcmp.eq.s32.totalorder %v1282, %v3422
      %vm3483 = vcmp.eq.s32.totalorder %v1285, %v3418
      %vm3484 = vcmp.eq.s32.totalorder %v1285, %v3422
      %vm3485 = vcmp.eq.s32.totalorder %v1288, %v3418
      %vm3486 = vcmp.eq.s32.totalorder %v1288, %v3422
      %v3487 = vsub.f32 1.0, %v3115
      %v3488 = vadd.s32 %v3117, 1
      %v3489 = vlaneseq
      %v3490 = vshrl.u32 %v3489, 7
      %v3491 = vsub.s32 0, %v3490
      %v3492 = vrot.slane %v3488, %v3491
      %v3493 = vlaneseq
      %v3494 = vshrl.u32 %v3493, 7
      %v3495 = vsub.s32 1, %v3494
      %v3496 = vrot.slane %v3488, %v3495
      %vm3497 = vcmp.eq.s32.totalorder %v1195, %v3492
      %vm3498 = vcmp.eq.s32.totalorder %v1195, %v3496
      %vm3499 = vcmp.eq.s32.totalorder %v1198, %v3492
      %vm3500 = vcmp.eq.s32.totalorder %v1198, %v3496
      %vm3501 = vcmp.eq.s32.totalorder %v1201, %v3492
      %vm3502 = vcmp.eq.s32.totalorder %v1201, %v3496
      %vm3503 = vcmp.eq.s32.totalorder %v1204, %v3492
      %vm3504 = vcmp.eq.s32.totalorder %v1204, %v3496
      %vm3505 = vcmp.eq.s32.totalorder %v1207, %v3492
      %vm3506 = vcmp.eq.s32.totalorder %v1207, %v3496
      %vm3507 = vcmp.eq.s32.totalorder %v1210, %v3492
      %vm3508 = vcmp.eq.s32.totalorder %v1210, %v3496
      %vm3509 = vcmp.eq.s32.totalorder %v1213, %v3492
      %vm3510 = vcmp.eq.s32.totalorder %v1213, %v3496
      %vm3511 = vcmp.eq.s32.totalorder %v1216, %v3492
      %vm3512 = vcmp.eq.s32.totalorder %v1216, %v3496
      %vm3513 = vcmp.eq.s32.totalorder %v1219, %v3492
      %vm3514 = vcmp.eq.s32.totalorder %v1219, %v3496
      %vm3515 = vcmp.eq.s32.totalorder %v1222, %v3492
      %vm3516 = vcmp.eq.s32.totalorder %v1222, %v3496
      %vm3517 = vcmp.eq.s32.totalorder %v1225, %v3492
      %vm3518 = vcmp.eq.s32.totalorder %v1225, %v3496
      %vm3519 = vcmp.eq.s32.totalorder %v1228, %v3492
      %vm3520 = vcmp.eq.s32.totalorder %v1228, %v3496
      %vm3521 = vcmp.eq.s32.totalorder %v1231, %v3492
      %vm3522 = vcmp.eq.s32.totalorder %v1231, %v3496
      %vm3523 = vcmp.eq.s32.totalorder %v1234, %v3492
      %vm3524 = vcmp.eq.s32.totalorder %v1234, %v3496
      %vm3525 = vcmp.eq.s32.totalorder %v1237, %v3492
      %vm3526 = vcmp.eq.s32.totalorder %v1237, %v3496
      %vm3527 = vcmp.eq.s32.totalorder %v1240, %v3492
      %vm3528 = vcmp.eq.s32.totalorder %v1240, %v3496
      %vm3529 = vcmp.eq.s32.totalorder %v1243, %v3492
      %vm3530 = vcmp.eq.s32.totalorder %v1243, %v3496
      %vm3531 = vcmp.eq.s32.totalorder %v1246, %v3492
      %vm3532 = vcmp.eq.s32.totalorder %v1246, %v3496
      %vm3533 = vcmp.eq.s32.totalorder %v1249, %v3492
      %vm3534 = vcmp.eq.s32.totalorder %v1249, %v3496
      %vm3535 = vcmp.eq.s32.totalorder %v1252, %v3492
      %vm3536 = vcmp.eq.s32.totalorder %v1252, %v3496
      %vm3537 = vcmp.eq.s32.totalorder %v1255, %v3492
      %vm3538 = vcmp.eq.s32.totalorder %v1255, %v3496
      %vm3539 = vcmp.eq.s32.totalorder %v1258, %v3492
      %vm3540 = vcmp.eq.s32.totalorder %v1258, %v3496
      %vm3541 = vcmp.eq.s32.totalorder %v1261, %v3492
      %vm3542 = vcmp.eq.s32.totalorder %v1261, %v3496
      %vm3543 = vcmp.eq.s32.totalorder %v1264, %v3492
      %vm3544 = vcmp.eq.s32.totalorder %v1264, %v3496
      %vm3545 = vcmp.eq.s32.totalorder %v1267, %v3492
      %vm3546 = vcmp.eq.s32.totalorder %v1267, %v3496
      %vm3547 = vcmp.eq.s32.totalorder %v1270, %v3492
      %vm3548 = vcmp.eq.s32.totalorder %v1270, %v3496
      %vm3549 = vcmp.eq.s32.totalorder %v1273, %v3492
      %vm3550 = vcmp.eq.s32.totalorder %v1273, %v3496
      %vm3551 = vcmp.eq.s32.totalorder %v1276, %v3492
      %vm3552 = vcmp.eq.s32.totalorder %v1276, %v3496
      %vm3553 = vcmp.eq.s32.totalorder %v1279, %v3492
      %vm3554 = vcmp.eq.s32.totalorder %v1279, %v3496
      %vm3555 = vcmp.eq.s32.totalorder %v1282, %v3492
      %vm3556 = vcmp.eq.s32.totalorder %v1282, %v3496
      %vm3557 = vcmp.eq.s32.totalorder %v1285, %v3492
      %vm3558 = vcmp.eq.s32.totalorder %v1285, %v3496
      %vm3559 = vcmp.eq.s32.totalorder %v1288, %v3492
      %vm3560 = vcmp.eq.s32.totalorder %v1288, %v3496
      %v3562 = vlaneseq
      %v3563 = vshrl.u32 %v3562, 7
      %v3564 = vsub.s32 0, %v3563
      %v3565 = vrot.slane %v3115, %v3564
      %v3566 = vlaneseq
      %v3567 = vshrl.u32 %v3566, 7
      %v3568 = vsub.s32 1, %v3567
      %v3569 = vrot.slane %v3115, %v3568
      %v3572 = vsel %vm3497, %v3565, 0.0
      %v3573 = vsel %vm3498, %v3569, 0.0
      %v3574 = vsel %vm3499, %v3565, 0.0
      %v3575 = vsel %vm3500, %v3569, 0.0
      %v3576 = vsel %vm3501, %v3565, 0.0
      %v3577 = vsel %vm3502, %v3569, 0.0
      %v3578 = vsel %vm3503, %v3565, 0.0
      %v3579 = vsel %vm3504, %v3569, 0.0
      %v3580 = vsel %vm3505, %v3565, 0.0
      %v3581 = vsel %vm3506, %v3569, 0.0
      %v3582 = vsel %vm3507, %v3565, 0.0
      %v3583 = vsel %vm3508, %v3569, 0.0
      %v3584 = vsel %vm3509, %v3565, 0.0
      %v3585 = vsel %vm3510, %v3569, 0.0
      %v3586 = vsel %vm3511, %v3565, 0.0
      %v3587 = vsel %vm3512, %v3569, 0.0
      %v3588 = vsel %vm3513, %v3565, 0.0
      %v3589 = vsel %vm3514, %v3569, 0.0
      %v3590 = vsel %vm3515, %v3565, 0.0
      %v3591 = vsel %vm3516, %v3569, 0.0
      %v3592 = vsel %vm3517, %v3565, 0.0
      %v3593 = vsel %vm3518, %v3569, 0.0
      %v3594 = vsel %vm3519, %v3565, 0.0
      %v3595 = vsel %vm3520, %v3569, 0.0
      %v3596 = vsel %vm3521, %v3565, 0.0
      %v3597 = vsel %vm3522, %v3569, 0.0
      %v3598 = vsel %vm3523, %v3565, 0.0
      %v3599 = vsel %vm3524, %v3569, 0.0
      %v3600 = vsel %vm3525, %v3565, 0.0
      %v3601 = vsel %vm3526, %v3569, 0.0
      %v3602 = vsel %vm3527, %v3565, 0.0
      %v3603 = vsel %vm3528, %v3569, 0.0
      %v3604 = vsel %vm3529, %v3565, 0.0
      %v3605 = vsel %vm3530, %v3569, 0.0
      %v3606 = vsel %vm3531, %v3565, 0.0
      %v3607 = vsel %vm3532, %v3569, 0.0
      %v3608 = vsel %vm3533, %v3565, 0.0
      %v3609 = vsel %vm3534, %v3569, 0.0
      %v3610 = vsel %vm3535, %v3565, 0.0
      %v3611 = vsel %vm3536, %v3569, 0.0
      %v3612 = vsel %vm3537, %v3565, 0.0
      %v3613 = vsel %vm3538, %v3569, 0.0
      %v3614 = vsel %vm3539, %v3565, 0.0
      %v3615 = vsel %vm3540, %v3569, 0.0
      %v3616 = vsel %vm3541, %v3565, 0.0
      %v3617 = vsel %vm3542, %v3569, 0.0
      %v3618 = vsel %vm3543, %v3565, 0.0
      %v3619 = vsel %vm3544, %v3569, 0.0
      %v3620 = vsel %vm3545, %v3565, 0.0
      %v3621 = vsel %vm3546, %v3569, 0.0
      %v3622 = vsel %vm3547, %v3565, 0.0
      %v3623 = vsel %vm3548, %v3569, 0.0
      %v3624 = vsel %vm3549, %v3565, 0.0
      %v3625 = vsel %vm3550, %v3569, 0.0
      %v3626 = vsel %vm3551, %v3565, 0.0
      %v3627 = vsel %vm3552, %v3569, 0.0
      %v3628 = vsel %vm3553, %v3565, 0.0
      %v3629 = vsel %vm3554, %v3569, 0.0
      %v3630 = vsel %vm3555, %v3565, 0.0
      %v3631 = vsel %vm3556, %v3569, 0.0
      %v3632 = vsel %vm3557, %v3565, 0.0
      %v3633 = vsel %vm3558, %v3569, 0.0
      %v3634 = vsel %vm3559, %v3565, 0.0
      %v3635 = vsel %vm3560, %v3569, 0.0
      %v3637 = vlaneseq
      %v3638 = vshrl.u32 %v3637, 7
      %v3639 = vsub.s32 0, %v3638
      %v3640 = vrot.slane %v3487, %v3639
      %v3641 = vlaneseq
      %v3642 = vshrl.u32 %v3641, 7
      %v3643 = vsub.s32 1, %v3642
      %v3644 = vrot.slane %v3487, %v3643
      %v3647 = vsel %vm3423, %v3640, %v3572
      %v3648 = vsel %vm3424, %v3644, %v3573
      %v3649 = vsel %vm3425, %v3640, %v3574
      %v3650 = vsel %vm3426, %v3644, %v3575
      %v3651 = vsel %vm3427, %v3640, %v3576
      %v3652 = vsel %vm3428, %v3644, %v3577
      %v3653 = vsel %vm3429, %v3640, %v3578
      %v3654 = vsel %vm3430, %v3644, %v3579
      %v3655 = vsel %vm3431, %v3640, %v3580
      %v3656 = vsel %vm3432, %v3644, %v3581
      %v3657 = vsel %vm3433, %v3640, %v3582
      %v3658 = vsel %vm3434, %v3644, %v3583
      %v3659 = vsel %vm3435, %v3640, %v3584
      %v3660 = vsel %vm3436, %v3644, %v3585
      %v3661 = vsel %vm3437, %v3640, %v3586
      %v3662 = vsel %vm3438, %v3644, %v3587
      %v3663 = vsel %vm3439, %v3640, %v3588
      %v3664 = vsel %vm3440, %v3644, %v3589
      %v3665 = vsel %vm3441, %v3640, %v3590
      %v3666 = vsel %vm3442, %v3644, %v3591
      %v3667 = vsel %vm3443, %v3640, %v3592
      %v3668 = vsel %vm3444, %v3644, %v3593
      %v3669 = vsel %vm3445, %v3640, %v3594
      %v3670 = vsel %vm3446, %v3644, %v3595
      %v3671 = vsel %vm3447, %v3640, %v3596
      %v3672 = vsel %vm3448, %v3644, %v3597
      %v3673 = vsel %vm3449, %v3640, %v3598
      %v3674 = vsel %vm3450, %v3644, %v3599
      %v3675 = vsel %vm3451, %v3640, %v3600
      %v3676 = vsel %vm3452, %v3644, %v3601
      %v3677 = vsel %vm3453, %v3640, %v3602
      %v3678 = vsel %vm3454, %v3644, %v3603
      %v3679 = vsel %vm3455, %v3640, %v3604
      %v3680 = vsel %vm3456, %v3644, %v3605
      %v3681 = vsel %vm3457, %v3640, %v3606
      %v3682 = vsel %vm3458, %v3644, %v3607
      %v3683 = vsel %vm3459, %v3640, %v3608
      %v3684 = vsel %vm3460, %v3644, %v3609
      %v3685 = vsel %vm3461, %v3640, %v3610
      %v3686 = vsel %vm3462, %v3644, %v3611
      %v3687 = vsel %vm3463, %v3640, %v3612
      %v3688 = vsel %vm3464, %v3644, %v3613
      %v3689 = vsel %vm3465, %v3640, %v3614
      %v3690 = vsel %vm3466, %v3644, %v3615
      %v3691 = vsel %vm3467, %v3640, %v3616
      %v3692 = vsel %vm3468, %v3644, %v3617
      %v3693 = vsel %vm3469, %v3640, %v3618
      %v3694 = vsel %vm3470, %v3644, %v3619
      %v3695 = vsel %vm3471, %v3640, %v3620
      %v3696 = vsel %vm3472, %v3644, %v3621
      %v3697 = vsel %vm3473, %v3640, %v3622
      %v3698 = vsel %vm3474, %v3644, %v3623
      %v3699 = vsel %vm3475, %v3640, %v3624
      %v3700 = vsel %vm3476, %v3644, %v3625
      %v3701 = vsel %vm3477, %v3640, %v3626
      %v3702 = vsel %vm3478, %v3644, %v3627
      %v3703 = vsel %vm3479, %v3640, %v3628
      %v3704 = vsel %vm3480, %v3644, %v3629
      %v3705 = vsel %vm3481, %v3640, %v3630
      %v3706 = vsel %vm3482, %v3644, %v3631
      %v3707 = vsel %vm3483, %v3640, %v3632
      %v3708 = vsel %vm3484, %v3644, %v3633
      %v3709 = vsel %vm3485, %v3640, %v3634
      %v3710 = vsel %vm3486, %v3644, %v3635
      %v3711 = vmul.f32 %v3351, %v3647
      %v3712 = vmul.f32 %v3352, %v3648
      %v3713 = vmul.f32 %v3353, %v3649
      %v3714 = vmul.f32 %v3354, %v3650
      %v3715 = vmul.f32 %v3355, %v3651
      %v3716 = vmul.f32 %v3356, %v3652
      %v3717 = vmul.f32 %v3357, %v3653
      %v3718 = vmul.f32 %v3358, %v3654
      %v3719 = vmul.f32 %v3359, %v3655
      %v3720 = vmul.f32 %v3360, %v3656
      %v3721 = vmul.f32 %v3361, %v3657
      %v3722 = vmul.f32 %v3362, %v3658
      %v3723 = vmul.f32 %v3363, %v3659
      %v3724 = vmul.f32 %v3364, %v3660
      %v3725 = vmul.f32 %v3365, %v3661
      %v3726 = vmul.f32 %v3366, %v3662
      %v3727 = vmul.f32 %v3367, %v3663
      %v3728 = vmul.f32 %v3368, %v3664
      %v3729 = vmul.f32 %v3369, %v3665
      %v3730 = vmul.f32 %v3370, %v3666
      %v3731 = vmul.f32 %v3371, %v3667
      %v3732 = vmul.f32 %v3372, %v3668
      %v3733 = vmul.f32 %v3373, %v3669
      %v3734 = vmul.f32 %v3374, %v3670
      %v3735 = vmul.f32 %v3375, %v3671
      %v3736 = vmul.f32 %v3376, %v3672
      %v3737 = vmul.f32 %v3377, %v3673
      %v3738 = vmul.f32 %v3378, %v3674
      %v3739 = vmul.f32 %v3379, %v3675
      %v3740 = vmul.f32 %v3380, %v3676
      %v3741 = vmul.f32 %v3381, %v3677
      %v3742 = vmul.f32 %v3382, %v3678
      %v3743 = vmul.f32 %v3383, %v3679
      %v3744 = vmul.f32 %v3384, %v3680
      %v3745 = vmul.f32 %v3385, %v3681
      %v3746 = vmul.f32 %v3386, %v3682
      %v3747 = vmul.f32 %v3387, %v3683
      %v3748 = vmul.f32 %v3388, %v3684
      %v3749 = vmul.f32 %v3389, %v3685
      %v3750 = vmul.f32 %v3390, %v3686
      %v3751 = vmul.f32 %v3391, %v3687
      %v3752 = vmul.f32 %v3392, %v3688
      %v3753 = vmul.f32 %v3393, %v3689
      %v3754 = vmul.f32 %v3394, %v3690
      %v3755 = vmul.f32 %v3395, %v3691
      %v3756 = vmul.f32 %v3396, %v3692
      %v3757 = vmul.f32 %v3397, %v3693
      %v3758 = vmul.f32 %v3398, %v3694
      %v3759 = vmul.f32 %v3399, %v3695
      %v3760 = vmul.f32 %v3400, %v3696
      %v3761 = vmul.f32 %v3401, %v3697
      %v3762 = vmul.f32 %v3402, %v3698
      %v3763 = vmul.f32 %v3403, %v3699
      %v3764 = vmul.f32 %v3404, %v3700
      %v3765 = vmul.f32 %v3405, %v3701
      %v3766 = vmul.f32 %v3406, %v3702
      %v3767 = vmul.f32 %v3407, %v3703
      %v3768 = vmul.f32 %v3408, %v3704
      %v3769 = vmul.f32 %v3409, %v3705
      %v3770 = vmul.f32 %v3410, %v3706
      %v3771 = vmul.f32 %v3411, %v3707
      %v3772 = vmul.f32 %v3412, %v3708
      %v3773 = vmul.f32 %v3413, %v3709
      %v3774 = vmul.f32 %v3414, %v3710
      %v3775 = vpack.c.bf16 %v3713, %v3711
      %v3776 = vpack.c.bf16 %v3714, %v3712
      %v3777 = vpack.c.bf16 %v3717, %v3715
      %v3778 = vpack.c.bf16 %v3718, %v3716
      %v3779 = vpack.c.bf16 %v3721, %v3719
      %v3780 = vpack.c.bf16 %v3722, %v3720
      %v3781 = vpack.c.bf16 %v3725, %v3723
      %v3782 = vpack.c.bf16 %v3726, %v3724
      %v3783 = vpack.c.bf16 %v3729, %v3727
      %v3784 = vpack.c.bf16 %v3730, %v3728
      %v3785 = vpack.c.bf16 %v3733, %v3731
      %v3786 = vpack.c.bf16 %v3734, %v3732
      %v3787 = vpack.c.bf16 %v3737, %v3735
      %v3788 = vpack.c.bf16 %v3738, %v3736
      %v3789 = vpack.c.bf16 %v3741, %v3739
      %v3790 = vpack.c.bf16 %v3742, %v3740
      %v3791 = vpack.c.bf16 %v3745, %v3743
      %v3792 = vpack.c.bf16 %v3746, %v3744
      %v3793 = vpack.c.bf16 %v3749, %v3747
      %v3794 = vpack.c.bf16 %v3750, %v3748
      %v3795 = vpack.c.bf16 %v3753, %v3751
      %v3796 = vpack.c.bf16 %v3754, %v3752
      %v3797 = vpack.c.bf16 %v3757, %v3755
      %v3798 = vpack.c.bf16 %v3758, %v3756
      %v3799 = vpack.c.bf16 %v3761, %v3759
      %v3800 = vpack.c.bf16 %v3762, %v3760
      %v3801 = vpack.c.bf16 %v3765, %v3763
      %v3802 = vpack.c.bf16 %v3766, %v3764
      %v3803 = vpack.c.bf16 %v3769, %v3767
      %v3804 = vpack.c.bf16 %v3770, %v3768
      %v3805 = vpack.c.bf16 %v3773, %v3771
      %v3806 = vpack.c.bf16 %v3774, %v3772
      %3807 = vmatprep.subr.bf16.mxu0 %v1650
      %3808 = vmatpush1.bf16.msra.mxu0 %v1649
      %3809 = vmatprep.subr.bf16.mxu0 %v1652
      %3810 = vmatpush1.bf16.msra.mxu0 %v1651
      %3811 = vmatprep.subr.bf16.mxu0 %v1654
      %3812 = vmatpush1.bf16.msra.mxu0 %v1653
      %3813 = vmatprep.subr.bf16.mxu0 %v1656
      %3814 = vmatpush1.bf16.msra.mxu0 %v1655
      %3815 = vmatprep.subr.bf16.mxu0 %v1658
      %3816 = vmatpush1.bf16.msra.mxu0 %v1657
      %3817 = vmatprep.subr.bf16.mxu0 %v1660
      %3818 = vmatpush1.bf16.msra.mxu0 %v1659
      %3819 = vmatprep.subr.bf16.mxu0 %v1662
      %3820 = vmatpush1.bf16.msra.mxu0 %v1661
      %3821 = vmatprep.subr.bf16.mxu0 %v1664
      %3822 = vmatpush1.bf16.msra.mxu0 %v1663
      %3823 = vmatprep.subr.bf16.mxu0 %v1666
      %3824 = vmatpush1.bf16.msra.mxu0 %v1665
      %3825 = vmatprep.subr.bf16.mxu0 %v1668
      %3826 = vmatpush1.bf16.msra.mxu0 %v1667
      %3827 = vmatprep.subr.bf16.mxu0 %v1670
      %3828 = vmatpush1.bf16.msra.mxu0 %v1669
      %3829 = vmatprep.subr.bf16.mxu0 %v1672
      %3830 = vmatpush1.bf16.msra.mxu0 %v1671
      %3831 = vmatprep.subr.bf16.mxu0 %v1674
      %3832 = vmatpush1.bf16.msra.mxu0 %v1673
      %3833 = vmatprep.subr.bf16.mxu0 %v1676
      %3834 = vmatpush1.bf16.msra.mxu0 %v1675
      %3835 = vmatprep.subr.bf16.mxu0 %v1678
      %3836 = vmatpush1.bf16.msra.mxu0 %v1677
      %3837 = vmatprep.subr.bf16.mxu0 %v1680
      %3838 = vmatpush1.bf16.msra.mxu0 %v1679
      %3839 = vmatprep.mubr.bf16.mxu0 %v719
      %3840 = vmatmul.mubr.bf16.gmra.mrb[0].mxu0 %v718
      %v3841 = vpop.f32.mrb[0].mxu0
      %v3842 = vadd.f32 0.0, %v3841
      %v3843 = vpop.f32.mrb[0].mxu0
      %v3844 = vadd.f32 0.0, %v3843
      %v3845 = vpop.f32.mrb[0].mxu0
      %v3846 = vpop.f32.mrb[0].mxu0
      %3847 = vdwg.mxu0
      %3848 = vmatprep.subr.bf16.mxu0 %v2368
      %3849 = vmatpush1.bf16.msra.mxu0 %v2367
      %3850 = vmatprep.subr.bf16.mxu0 %v2370
      %3851 = vmatpush1.bf16.msra.mxu0 %v2369
      %3852 = vmatprep.subr.bf16.mxu0 %v2372
      %3853 = vmatpush1.bf16.msra.mxu0 %v2371
      %3854 = vmatprep.subr.bf16.mxu0 %v2374
      %3855 = vmatpush1.bf16.msra.mxu0 %v2373
      %3856 = vmatprep.subr.bf16.mxu0 %v2376
      %3857 = vmatpush1.bf16.msra.mxu0 %v2375
      %3858 = vmatprep.subr.bf16.mxu0 %v2378
      %3859 = vmatpush1.bf16.msra.mxu0 %v2377
      %3860 = vmatprep.subr.bf16.mxu0 %v2380
      %3861 = vmatpush1.bf16.msra.mxu0 %v2379
      %3862 = vmatprep.subr.bf16.mxu0 %v2382
      %3863 = vmatpush1.bf16.msra.mxu0 %v2381
      %3864 = vmatprep.subr.bf16.mxu0 %v2384
      %3865 = vmatpush1.bf16.msra.mxu0 %v2383
      %3866 = vmatprep.subr.bf16.mxu0 %v2386
      %3867 = vmatpush1.bf16.msra.mxu0 %v2385
      %3868 = vmatprep.subr.bf16.mxu0 %v2388
      %3869 = vmatpush1.bf16.msra.mxu0 %v2387
      %3870 = vmatprep.subr.bf16.mxu0 %v2390
      %3871 = vmatpush1.bf16.msra.mxu0 %v2389
      %3872 = vmatprep.subr.bf16.mxu0 %v2392
      %3873 = vmatpush1.bf16.msra.mxu0 %v2391
      %3874 = vmatprep.subr.bf16.mxu0 %v2394
      %3875 = vmatpush1.bf16.msra.mxu0 %v2393
      %3876 = vmatprep.subr.bf16.mxu0 %v2396
      %3877 = vmatpush1.bf16.msra.mxu0 %v2395
      %3878 = vmatprep.subr.bf16.mxu0 %v2398
      %3879 = vmatpush1.bf16.msra.mxu0 %v2397
      %3880 = vmatprep.mubr.bf16.mxu0 %v719
      %3881 = vmatmul.mubr.bf16.gmra.mrb[0].mxu0 %v718
      %v3882 = vpop.f32.mrb[0].mxu0
      %v3883 = vadd.f32 0.0, %v3882
      %v3884 = vpop.f32.mrb[0].mxu0
      %v3885 = vadd.f32 0.0, %v3884
      %v3886 = vpop.f32.mrb[0].mxu0
      %v3887 = vpop.f32.mrb[0].mxu0
      %3888 = vdwg.mxu0
      %3889 = vmatprep.subr.bf16.mxu0 %v3072
      %3890 = vmatpush1.bf16.msra.mxu0 %v3071
      %3891 = vmatprep.subr.bf16.mxu0 %v3074
      %3892 = vmatpush1.bf16.msra.mxu0 %v3073
      %3893 = vmatprep.subr.bf16.mxu0 %v3076
      %3894 = vmatpush1.bf16.msra.mxu0 %v3075
      %3895 = vmatprep.subr.bf16.mxu0 %v3078
      %3896 = vmatpush1.bf16.msra.mxu0 %v3077
      %3897 = vmatprep.subr.bf16.mxu0 %v3080
      %3898 = vmatpush1.bf16.msra.mxu0 %v3079
      %3899 = vmatprep.subr.bf16.mxu0 %v3082
      %3900 = vmatpush1.bf16.msra.mxu0 %v3081
      %3901 = vmatprep.subr.bf16.mxu0 %v3084
      %3902 = vmatpush1.bf16.msra.mxu0 %v3083
      %3903 = vmatprep.subr.bf16.mxu0 %v3086
      %3904 = vmatpush1.bf16.msra.mxu0 %v3085
      %3905 = vmatprep.subr.bf16.mxu0 %v3088
      %3906 = vmatpush1.bf16.msra.mxu0 %v3087
      %3907 = vmatprep.subr.bf16.mxu0 %v3090
      %3908 = vmatpush1.bf16.msra.mxu0 %v3089
      %3909 = vmatprep.subr.bf16.mxu0 %v3092
      %3910 = vmatpush1.bf16.msra.mxu0 %v3091
      %3911 = vmatprep.subr.bf16.mxu0 %v3094
      %3912 = vmatpush1.bf16.msra.mxu0 %v3093
      %3913 = vmatprep.subr.bf16.mxu0 %v3096
      %3914 = vmatpush1.bf16.msra.mxu0 %v3095
      %3915 = vmatprep.subr.bf16.mxu0 %v3098
      %3916 = vmatpush1.bf16.msra.mxu0 %v3097
      %3917 = vmatprep.subr.bf16.mxu0 %v3100
      %3918 = vmatpush1.bf16.msra.mxu0 %v3099
      %3919 = vmatprep.subr.bf16.mxu0 %v3102
      %3920 = vmatpush1.bf16.msra.mxu0 %v3101
      %3921 = vmatprep.mubr.bf16.mxu0 %v719
      %3922 = vmatmul.mubr.bf16.gmra.mrb[0].mxu0 %v718
      %v3923 = vpop.f32.mrb[0].mxu0
      %v3924 = vadd.f32 0.0, %v3923
      %v3925 = vpop.f32.mrb[0].mxu0
      %v3926 = vadd.f32 0.0, %v3925
      %v3927 = vpop.f32.mrb[0].mxu0
      %v3928 = vpop.f32.mrb[0].mxu0
      %3929 = vdwg.mxu0
      %3930 = vmatprep.subr.bf16.mxu0 %v3776
      %3931 = vmatpush1.bf16.msra.mxu0 %v3775
      %3932 = vmatprep.subr.bf16.mxu0 %v3778
      %3933 = vmatpush1.bf16.msra.mxu0 %v3777
      %3934 = vmatprep.subr.bf16.mxu0 %v3780
      %3935 = vmatpush1.bf16.msra.mxu0 %v3779
      %3936 = vmatprep.subr.bf16.mxu0 %v3782
      %3937 = vmatpush1.bf16.msra.mxu0 %v3781
      %3938 = vmatprep.subr.bf16.mxu0 %v3784
      %3939 = vmatpush1.bf16.msra.mxu0 %v3783
      %3940 = vmatprep.subr.bf16.mxu0 %v3786
      %3941 = vmatpush1.bf16.msra.mxu0 %v3785
      %3942 = vmatprep.subr.bf16.mxu0 %v3788
      %3943 = vmatpush1.bf16.msra.mxu0 %v3787
      %3944 = vmatprep.subr.bf16.mxu0 %v3790
      %3945 = vmatpush1.bf16.msra.mxu0 %v3789
      %3946 = vmatprep.subr.bf16.mxu0 %v3792
      %3947 = vmatpush1.bf16.msra.mxu0 %v3791
      %3948 = vmatprep.subr.bf16.mxu0 %v3794
      %3949 = vmatpush1.bf16.msra.mxu0 %v3793
      %3950 = vmatprep.subr.bf16.mxu0 %v3796
      %3951 = vmatpush1.bf16.msra.mxu0 %v3795
      %3952 = vmatprep.subr.bf16.mxu0 %v3798
      %3953 = vmatpush1.bf16.msra.mxu0 %v3797
      %3954 = vmatprep.subr.bf16.mxu0 %v3800
      %3955 = vmatpush1.bf16.msra.mxu0 %v3799
      %3956 = vmatprep.subr.bf16.mxu0 %v3802
      %3957 = vmatpush1.bf16.msra.mxu0 %v3801
      %3958 = vmatprep.subr.bf16.mxu0 %v3804
      %3959 = vmatpush1.bf16.msra.mxu0 %v3803
      %3960 = vmatprep.subr.bf16.mxu0 %v3806
      %3961 = vmatpush1.bf16.msra.mxu0 %v3805
      %3962 = vmatprep.mubr.bf16.mxu0 %v719
      %3963 = vmatmul.mubr.bf16.gmra.mrb[0].mxu0 %v718
      %v3964 = vpop.f32.mrb[0].mxu0
      %v3965 = vadd.f32 0.0, %v3964
      %v3966 = vpop.f32.mrb[0].mxu0
      %v3967 = vadd.f32 0.0, %v3966
      %v3968 = vpop.f32.mrb[0].mxu0
      %v3969 = vpop.f32.mrb[0].mxu0
      %3970 = vdwg.mxu0
      %v3971 = vld [vmem:[#allocation2] sm:$0x77]
      %v3974 = vcombine.low %v3842, %v3844
      %v3976 = vadd.f32 %v3971, %v3974
      %3977 = vst [vmem:[#allocation2] sm:$0x77] %v3976
      %s3978 = scalar_lea.vmem [#allocation2], 8
      %v3979 = vld [vmem:[%s3978] sm:$0x77]
      %v3982 = vcombine.low %v3883, %v3885
      %v3984 = vadd.f32 %v3979, %v3982
      %3985 = vst [vmem:[%s3978] sm:$0x77] %v3984
      %s3986 = scalar_lea.vmem [#allocation2], 16
      %v3987 = vld [vmem:[%s3986] sm:$0x77]
      %v3990 = vcombine.low %v3924, %v3926
      %v3992 = vadd.f32 %v3987, %v3990
      %3993 = vst [vmem:[%s3986] sm:$0x77] %v3992
      %s3994 = scalar_lea.vmem [#allocation2], 24
      %v3995 = vld [vmem:[%s3994] sm:$0x77]
      %v3998 = vcombine.low %v3965, %v3967
      %v4000 = vadd.f32 %v3995, %v3998
      %4001 = vst [vmem:[%s3994] sm:$0x77] %v4000
      %p4002 = scmp.eq.s32.totalorder %s27, 3
      // Predicated region
      $region61: #{dysample_forward.1} parent=55 // pred_check
        %p4003 = pneg %p4002
      $region62: #{dysample_forward.1} parent=55 // pred_check_branch
        %4005 = sbr.rel (%p4003) target = $region64
      $region63: #{dysample_forward.1} parent=55 // pred_region
        %v4006 = vld [vmem:[#allocation2] sm:$0x77]
        %v4007 = vld [vmem:[#allocation2 + $0x8] sm:$0x77]
        %v4008 = vld [vmem:[#allocation2 + $0x10] sm:$0x77]
        %v4009 = vld [vmem:[#allocation2 + $0x18] sm:$0x77]
        %v4010 = vld [vmem:[%s8] sm:$0x7]
        %4012 = vset.pattern.permute.xlu0 0
        %4013 = vperm.xlu0 %4012, %v4010
        %v4014 = vpop.permute.xlu0 %4013
        %v4016 = vunpack.c.l.s4 839922192
        %v4017 = vunpack.c.0.s8 %v4016
        %v4018 = vlaneseq
        %v4019 = vshrl.u32 %v4018, 7
        %v4020 = vsub.s32 %v4017, %v4019
        %v4021 = vrot.slane %v4014, %v4020
        %v4023 = vadd.f32 %v4006, %v4021
        %v4024 = vadd.f32 %v4007, %v4021
        %v4025 = vadd.f32 %v4008, %v4021
        %v4026 = vadd.f32 %v4009, %v4021
        %4027 = vst [vmem:[%s504] sm:$0x77] %v4023
        %4028 = vst [vmem:[%s504 + $0x8] sm:$0x77] %v4024
        %4029 = vst [vmem:[%s504 + $0x10] sm:$0x77] %v4025
        %4030 = vst [vmem:[%s504 + $0x18] sm:$0x77] %v4026
      $region64: #{dysample_forward.1} parent=55 // pred_fallthru
        _
      %s4031 = smul.u32 2, %s26
      %p4032 = scmp.lt.s32.totalorder %s25, 1
      %s4033 = scalar_select %p4032, %s25, 1
      %p4034 = scmp.lt.s32.totalorder %s4031, 1
      %s4035 = scalar_select %p4034, %s4031, 1
      %s4036 = smul.addr %s4033, 8
      %s4037 = sadd.s32 %s4035, %s4036
      %s4038 = smul.addr %s4037, 4
      %s4039 = scalar_lea.vmem %s9, %s4038
      // Predicated region
      $region65: #{dysample_forward.1} parent=55 // pred_check
        %p4040 = pneg %p287
      $region66: #{dysample_forward.1} parent=55 // pred_check_branch
        %4042 = sbr.rel (%p4040) target = $region68
      $region67: #{dysample_forward.1} parent=55 // pred_region
        %s4043 = smul.u32 2, %s26
      $region68: #{dysample_forward.1} parent=55 // pred_fallthru
        _
    $region56: #{dysample_forward.1} parent=5 // pred_fallthru
      _
    %p4044 = scmp.le.s32.totalorder 2, %s15
    // Predicated region
    $region69: #{dysample_forward.1} parent=5 // pred_check
      %p4045 = pneg %p4044
    $region70: #{dysample_forward.1} parent=5 // pred_check_branch
      %4047 = sbr.rel (%p4045) target = $region72
    $region71: #{dysample_forward.1} parent=5 // pred_region
      %s4048 = ssub.s32 %s15, 2
      // Predicated region
      $region73: #{dysample_forward.1} parent=71 // pred_check
        %p4049 = pneg %p293
      $region74: #{dysample_forward.1} parent=71 // pred_check_branch
        %4051 = sbr.rel (%p4049) target = $region76
      $region75: #{dysample_forward.1} parent=71 // pred_region
        %s4052 = smul.u32 2, %s29
        %p4053 = scmp.lt.s32.totalorder %s28, 1
        %s4054 = scalar_select %p4053, %s28, 1
        %p4055 = scmp.lt.s32.totalorder %s4052, 1
        %s4056 = scalar_select %p4055, %s4052, 1
        %s4057 = smul.addr %s4054, 8
        %s4058 = sadd.s32 %s4056, %s4057
        %s4059 = smul.addr %s4058, 4
        %s4060 = scalar_lea.vmem %s9, %s4059
      $region76: #{dysample_forward.1} parent=71 // pred_fallthru
        _
    $region72: #{dysample_forward.1} parent=5 // pred_fallthru
      _
  $region6: #{dysample_forward.1} parent=0 // loop_footer
    %s19 = sadd.s32 1, %s15
  $region7: #{dysample_forward.1} parent=0 // loop_footer_branch
    %14 = sbr.rel target = $region3
  $region8: #{dysample_forward.1} parent=0 // loop_exit
    _

</llo_original>
